<compile_context>
chip_gen: v7x
topology: tpu7x:2x2x1
jax: 0.10.0
libtpu: 0.0.40
codegen_flags: <defaults>
</compile_context>

<pallas_src>
import functools

import jax
import jax.numpy as jnp
from jax.experimental import pallas as pl
from jax.experimental.pallas import tpu as pltpu


def _round_up(x, m):
    return ((x + m - 1) // m) * m


# -----------------------------------------------------------------------------
# LSTM recurrence kernel (time-chunked).
#   grid = (T // Tt,), "arbitrary" (sequential recurrence).
#   gx_ref : (Tt, Bp, 4H) f32   precomputed x @ W_ih + bias for this chunk
#   whh_ref: (H, 4H)      bf16
#   y_ref  : (Tt, Bp, H)  bf16  hidden states for this chunk
#   h_sc/c_sc: (Bp, H) f32 VMEM scratch, carried across grid steps.
# -----------------------------------------------------------------------------
def _lstm_kernel(gx_ref, h0_ref, c0_ref, whh_ref, y_ref, hN_ref, cN_ref,
                 h_sc, c_sc):
    chunk = pl.program_id(0)
    n_chunks = pl.num_programs(0)
    Tt = gx_ref.shape[0]
    H = whh_ref.shape[0]

    @pl.when(chunk == 0)
    def _():
        h_sc[...] = h0_ref[0]          # (Bp, H)
        c_sc[...] = c0_ref[0]          # (Bp, H)

    def step(s, carry):
        # Only the recurrent matmul is on the serial critical path.
        gates = gx_ref[s] + jnp.dot(
            h_sc[...].astype(jnp.bfloat16), whh_ref[...],
            preferred_element_type=jnp.float32)            # (Bp, 4H) f32
        # H is lane-aligned here, so these are cheap static slices.
        i_g = jax.nn.sigmoid(gates[:, 0 * H:1 * H])
        f_g = jax.nn.sigmoid(gates[:, 1 * H:2 * H])
        g_g = jnp.tanh(gates[:, 2 * H:3 * H])
        o_g = jax.nn.sigmoid(gates[:, 3 * H:4 * H])

        c_new = f_g * c_sc[...] + i_g * g_g
        h_new = o_g * jnp.tanh(c_new)

        c_sc[...] = c_new
        h_sc[...] = h_new
        y_ref[s] = h_new.astype(y_ref.dtype)
        return carry

    jax.lax.fori_loop(0, Tt, step, 0, unroll=Tt <= 16)

    @pl.when(chunk == n_chunks - 1)
    def _():
        hN_ref[0] = h_sc[...]
        cN_ref[0] = c_sc[...]


def lstm_layer(gates_x, h0, c0, w_hh_bf16):
    """gates_x: (T, B, 4H) f32 (input projection already applied);
    h0/c0: (1, B, H) f32; w_hh_bf16: (H, 4H) bf16.
    Returns y (T, B, H) bf16, h_last (1,B,H) f32, c_last (1,B,H) f32."""
    T, B, G = gates_x.shape
    H = h0.shape[-1]
    assert G == 4 * H

    # Sublane-align the batch so the per-step state updates and y stores are
    # unmasked vreg ops (batch is the second-to-minor dim of every block).
    Bp = _round_up(B, 8)
    if Bp != B:
        gates_x = jnp.pad(gates_x, ((0, 0), (0, Bp - B), (0, 0)))
        h0 = jnp.pad(h0, ((0, 0), (0, Bp - B), (0, 0)))
        c0 = jnp.pad(c0, ((0, 0), (0, Bp - B), (0, 0)))

    # Largest time-chunk (<= 64) that divides T: fewer grid steps, lane-dense
    # per-chunk writeback of y.
    Tt = 1
    for cand in range(1, min(T, 64) + 1):
        if T % cand == 0:
            Tt = cand
    n_chunks = T // Tt

    y, hN, cN = pl.pallas_call(
        _lstm_kernel,
        out_shape=(
            jax.ShapeDtypeStruct((T, Bp, H), jnp.bfloat16),
            jax.ShapeDtypeStruct((1, Bp, H), jnp.float32),
            jax.ShapeDtypeStruct((1, Bp, H), jnp.float32),
        ),
        grid_spec=pltpu.PrefetchScalarGridSpec(
            num_scalar_prefetch=0,
            grid=(n_chunks,),
            in_specs=[
                pl.BlockSpec((Tt, Bp, 4 * H), lambda c: (c, 0, 0)),  # gates_x chunk
                pl.BlockSpec((1, Bp, H), lambda c: (0, 0, 0)),       # h0
                pl.BlockSpec((1, Bp, H), lambda c: (0, 0, 0)),       # c0
                pl.BlockSpec((H, 4 * H), lambda c: (0, 0)),          # W_hh (bf16)
            ],
            out_specs=[
                pl.BlockSpec((Tt, Bp, H), lambda c: (c, 0, 0)),      # y chunk
                pl.BlockSpec((1, Bp, H), lambda c: (0, 0, 0)),       # h_last
                pl.BlockSpec((1, Bp, H), lambda c: (0, 0, 0)),       # c_last
            ],
            scratch_shapes=[
                pltpu.VMEM((Bp, H), jnp.float32),   # h carry
                pltpu.VMEM((Bp, H), jnp.float32),   # c carry
            ],
        ),
        compiler_params=pltpu.CompilerParams(
            dimension_semantics=("arbitrary",)),
    )(gates_x, h0, c0, w_hh_bf16)

    if Bp != B:
        y = y[:, :B]
        hN = hN[:, :B]
        cN = cN[:, :B]
    return y, hN, cN


# -----------------------------------------------------------------------------
# Classifier + log_softmax kernel with streamed vocab tiles.
#   z = relu(h @ W1 + b1)        (computed once per row tile, cached in VMEM)
#   logits[:, v_tile] = z @ W2t[:, v_tile]   (tied weight, streamed over V)
#   online logsumexp (running max/sum) in VMEM scratch; the final
#   normalization (logits - lse) is applied on the last V tile, so the output
#   block is written to HBM exactly once per row tile.  Padded vocab columns
#   are masked to -inf before the logsumexp.
# grid = (num_row_tiles, num_v_tiles), ("parallel", "arbitrary").
# -----------------------------------------------------------------------------
def _classifier_kernel(h_ref, w1_ref, b1_ref, w2t_ref, out_ref,
                       z_sc, m_sc, l_sc, *, v_true, needs_mask):
    vi = pl.program_id(1)
    nv = pl.num_programs(1)
    tv = w2t_ref.shape[1]

    @pl.when(vi == 0)
    def _():
        z = jnp.dot(h_ref[...], w1_ref[...],
                    preferred_element_type=jnp.float32)       # (rt, E) f32
        z_sc[...] = jnp.maximum(z + b1_ref[...], 0.0)
        m_sc[...] = jnp.full(m_sc.shape, -jnp.inf, dtype=m_sc.dtype)
        l_sc[...] = jnp.zeros(l_sc.shape, dtype=l_sc.dtype)

    logits = jnp.dot(z_sc[...].astype(jnp.bfloat16), w2t_ref[...],
                     preferred_element_type=jnp.float32)       # (rt, tv) f32

    # Stash raw logits into the resident output block (lane-aligned offset).
    col0 = pl.multiple_of(vi * tv, tv)
    out_ref[:, pl.ds(col0, tv)] = logits

    if needs_mask:
        col = jax.lax.broadcasted_iota(jnp.int32, logits.shape, 1) + col0
        logits = jnp.where(col < v_true, logits, -jnp.inf)

    # Online logsumexp accumulation.
    m_prev = m_sc[...]
    m_new = jnp.maximum(m_prev, jnp.max(logits, axis=-1, keepdims=True))
    l_sc[...] = (l_sc[...] * jnp.exp(m_prev - m_new)
                 + jnp.sum(jnp.exp(logits - m_new), axis=-1, keepdims=True))
    m_sc[...] = m_new

    @pl.when(vi == nv - 1)
    def _():
        lse = m_sc[...] + jnp.log(l_sc[...])                   # (rt, 1)
        out_ref[...] = out_ref[...] - lse


def classifier_log_softmax(h_flat_bf16, w1_bf16, b1, w2t_bf16):
    """h_flat: (R, H) bf16; w1: (H, E) bf16; b1: (1, E) f32; w2t: (E, V) bf16.
    Returns (R, V) f32 log-probabilities."""
    R, H = h_flat_bf16.shape
    E, V = w2t_bf16.shape

    # Vocab tiling: lane-aligned tile; pad V up to a multiple of it.  Padded
    # columns are masked to -inf inside the kernel (handles V like 40479).
    v128 = _round_up(V, 128)
    tv = v128 if v128 <= 1024 else 1024
    Vp = _round_up(V, tv)
    nv = Vp // tv
    if Vp != V:
        w2t_bf16 = jnp.pad(w2t_bf16, ((0, 0), (0, Vp - V)))

    # Row tile: MXU-width 128 when the resident (rt, Vp) f32 output block
    # (assume double-buffered) plus the cached relu activation fits a VMEM
    # budget; otherwise shrink in multiples of 16 (bf16 sublane packing).
    budget = 24 * 1024 * 1024
    rt = 128
    while rt > 16 and (2 * rt * Vp * 4 + rt * E * 4) > budget:
        rt -= 16
    rt = min(rt, max(16, _round_up(R, 16)))
    Rp = _round_up(R, rt)
    h_p = h_flat_bf16
    if Rp != R:
        h_p = jnp.pad(h_flat_bf16, ((0, Rp - R), (0, 0)))

    kernel = functools.partial(_classifier_kernel,
                               v_true=V, needs_mask=(Vp != V))

    out = pl.pallas_call(
        kernel,
        out_shape=jax.ShapeDtypeStruct((Rp, Vp), jnp.float32),
        grid_spec=pltpu.PrefetchScalarGridSpec(
            num_scalar_prefetch=0,
            grid=(Rp // rt, nv),
            in_specs=[
                pl.BlockSpec((rt, H), lambda i, vi: (i, 0)),    # hidden rows
                pl.BlockSpec((H, E), lambda i, vi: (0, 0)),     # W1 (bf16)
                pl.BlockSpec((1, E), lambda i, vi: (0, 0)),     # b1
                pl.BlockSpec((E, tv), lambda i, vi: (0, vi)),   # W2^T vocab tile
            ],
            out_specs=pl.BlockSpec((rt, Vp), lambda i, vi: (i, 0)),
            scratch_shapes=[
                pltpu.VMEM((rt, E), jnp.float32),   # cached relu(h@W1+b1)
                pltpu.VMEM((rt, 1), jnp.float32),   # running max
                pltpu.VMEM((rt, 1), jnp.float32),   # running sum-exp
            ],
        ),
        compiler_params=pltpu.CompilerParams(
            dimension_semantics=("parallel", "arbitrary"),
            vmem_limit_bytes=32 * 1024 * 1024),
    )(h_p, w1_bf16, b1, w2t_bf16)
    return out[:R, :V]


# -----------------------------------------------------------------------------
# Full forward pass (mirrors LSTM.forward in the PyTorch module).
# -----------------------------------------------------------------------------
def lstm_lm_forward(params, inputs, hidden_states):
    """inputs: int32 (B, T); hidden_states = (h0, c0) each (num_layers, B, H)."""
    h0, c0 = hidden_states
    B, T = inputs.shape
    emb_w = params["emb_weight"]                  # (V, E) f32, padding_idx=0 row is 0
    V, E = emb_w.shape
    H = h0.shape[-1]

    # bf16 copies of the matmul weights (MXU-native); math stays f32-accumulated.
    w_ih_bf = params["w_ih"].astype(jnp.bfloat16)        # (E, 4H)
    w_hh_bf = params["w_hh"].astype(jnp.bfloat16)        # (H, 4H)
    w1_bf = params["w1"].astype(jnp.bfloat16)            # (H, E)
    w2t_bf = emb_w.T.astype(jnp.bfloat16)                # (E, V) tied weight

    # Embedding lookup, time-major: transpose only the tiny int32 id matrix,
    # never the (T,B,E) activations.  Gather itself is left to XLA.
    ids_t = inputs.T                                      # (T, B)
    emb_t = jnp.take(emb_w, ids_t, axis=0)                # (T, B, E)

    # Hoisted input projection: one MXU-friendly (T*B, E) x (E, 4H) matmul
    # (no sequential dependency), done in XLA.
    gx = jnp.dot(emb_t.reshape(T * B, E).astype(jnp.bfloat16), w_ih_bf,
                 preferred_element_type=jnp.float32) + params["lstm_bias"]
    gates_x = gx.reshape(T, B, 4 * H)                     # (T, B, 4H) f32

    # Single-layer LSTM recurrence (num_layers == 1).
    y_tbh, h_last, c_last = lstm_layer(gates_x, h0, c0, w_hh_bf)   # y: bf16

    # (T,B,H) -> (B*T,H): small bf16 tensor; the big (B,T,V) output is produced
    # directly in its final layout by the classifier.
    h_flat = jnp.transpose(y_tbh, (1, 0, 2)).reshape(B * T, H)

    log_probs = classifier_log_softmax(h_flat, w1_bf, params["b1"], w2t_bf)
    log_probs = log_probs.reshape(B, T, V)

    return log_probs, (h_last, c_last)


# -----------------------------------------------------------------------------
# Deterministic parameter construction (synthetic; not a checkpoint load).
# -----------------------------------------------------------------------------
def init_params(key, vocab, emb_size, hidden):
    ks = jax.random.split(key, 7)
    k = 1.0 / jnp.sqrt(hidden)

    emb_weight = 0.02 * jax.random.normal(ks[0], (vocab, emb_size), jnp.float32)
    emb_weight = emb_weight.at[0].set(0.0)  # padding_idx=0

    w_ih = jax.random.uniform(ks[1], (emb_size, 4 * hidden), jnp.float32, -k, k)
    w_hh = jax.random.uniform(ks[2], (hidden, 4 * hidden), jnp.float32, -k, k)
    b_ih = jax.random.uniform(ks[3], (4 * hidden,), jnp.float32, -k, k)
    b_hh = jax.random.uniform(ks[4], (4 * hidden,), jnp.float32, -k, k)

    k1 = 1.0 / jnp.sqrt(hidden)
    w1 = jax.random.uniform(ks[5], (hidden, emb_size), jnp.float32, -k1, k1)
    b1 = jax.random.uniform(ks[6], (emb_size,), jnp.float32, -k1, k1)

    return {
        "emb_weight": emb_weight,                      # (V, E), tied to output proj
        "w_ih": w_ih,                                  # (E, 4H)
        "w_hh": w_hh,                                  # (H, 4H)
        "lstm_bias": (b_ih + b_hh).reshape(1, -1),     # (1, 4H)
        "w1": w1,                                      # (H, E)
        "b1": b1.reshape(1, -1),                       # (1, E)
    }


if __name__ == "__main__":
    VOCAB, EMB, HIDDEN = 512, 256, 128
    BATCH, SEQ, NUM_LAYERS = 2, 8, 1

    key = jax.random.PRNGKey(0)
    k_param, k_inp = jax.random.split(key)
    params = init_params(k_param, VOCAB, EMB, HIDDEN)

    inputs = jax.random.randint(k_inp, (BATCH, SEQ), 0, VOCAB, dtype=jnp.int32)
    h0 = jnp.zeros((NUM_LAYERS, BATCH, HIDDEN), jnp.float32)
    c0 = jnp.zeros((NUM_LAYERS, BATCH, HIDDEN), jnp.float32)

    fwd = jax.jit(functools.partial(lstm_lm_forward, params))
    log_probs, (h_last, c_last) = fwd(inputs, (h0, c0))
    jax.block_until_ready((log_probs, h_last, c_last))

    assert log_probs.shape == (BATCH, SEQ, VOCAB)
    assert h_last.shape == (NUM_LAYERS, BATCH, HIDDEN)
    assert c_last.shape == (NUM_LAYERS, BATCH, HIDDEN)
    # log_softmax sanity: probabilities sum to 1 along the vocab axis.
    prob_sum = jnp.sum(jnp.exp(log_probs), axis=-1)
    assert bool(jnp.all(jnp.abs(prob_sum - 1.0) < 1e-2))
    assert bool(jnp.all(jnp.isfinite(log_probs)))
    print("KERNEL_OK")
</pallas_src>

<mosaic_0001>
module attributes {stable_mosaic.version = 11 : i64} {
  func.func @_classifier_kernel(%arg0: i32, %arg1: i32, %arg2: memref<16x128xbf16, #tpu.memory_space<vmem>>, %arg3: memref<128x256xbf16, #tpu.memory_space<vmem>>, %arg4: memref<1x256xf32, #tpu.memory_space<vmem>>, %arg5: memref<256x512xbf16, #tpu.memory_space<vmem>>, %arg6: memref<16x512xf32, #tpu.memory_space<vmem>>, %arg7: memref<16x256xf32, #tpu.memory_space<vmem>>, %arg8: memref<16x1xf32, #tpu.memory_space<vmem>>, %arg9: memref<16x1xf32, #tpu.memory_space<vmem>>) attributes {dimension_semantics = [#tpu.dimension_semantics<parallel>, #tpu.dimension_semantics<arbitrary>], iteration_bounds = array<i64: 1, 1>, scalar_prefetch = 0 : i64, scratch_operands = 3 : i64, tpu.core_type = #tpu.core_type<tc>, window_params = [{transform_indices = @transform_0, window_bounds = array<i64: 16, 128>}, {pipeline_mode = #tpu.pipeline_mode<synchronous>, transform_indices = @transform_1, window_bounds = array<i64: 128, 256>}, {pipeline_mode = #tpu.pipeline_mode<synchronous>, transform_indices = @transform_2, window_bounds = array<i64: 1, 256>}, {transform_indices = @transform_3, window_bounds = array<i64: 256, 512>}, {transform_indices = @transform_4, window_bounds = array<i64: 16, 512>}]} {
    %c0_i32 = arith.constant 0 : i32
    %0 = arith.cmpi eq, %arg1, %c0_i32 : i32
    %1 = arith.extui %0 : i1 to i32
    %c0_i32_0 = arith.constant 0 : i32
    %2 = arith.cmpi ne, %1, %c0_i32_0 : i32
    scf.if %2 {
      %c0_17 = arith.constant 0 : index
      %c0_18 = arith.constant 0 : index
      %30 = vector.load %arg2[%c0_17, %c0_18] : memref<16x128xbf16, #tpu.memory_space<vmem>>, vector<16x128xbf16>
      %c0_19 = arith.constant 0 : index
      %c0_20 = arith.constant 0 : index
      %31 = vector.load %arg3[%c0_19, %c0_20] : memref<128x256xbf16, #tpu.memory_space<vmem>>, vector<128x256xbf16>
      %cst_21 = arith.constant dense<0.000000e+00> : vector<16x256xf32>
      %32 = tpu.matmul %30, %31, %cst_21 {dimension_numbers = #tpu.dot_dimension_numbers<[1], [0], [0], [1], [0, 0, 1, 1], [], []>} : vector<16x128xbf16>, vector<128x256xbf16>, vector<16x256xf32> -> vector<16x256xf32>
      %c0_22 = arith.constant 0 : index
      %c0_23 = arith.constant 0 : index
      %33 = vector.load %arg4[%c0_22, %c0_23] : memref<1x256xf32, #tpu.memory_space<vmem>>, vector<1x256xf32>
      %34 = vector.broadcast %33 : vector<1x256xf32> to vector<16x256xf32>
      %35 = arith.addf %32, %34 : vector<16x256xf32>
      %cst_24 = arith.constant 0.000000e+00 : f32
      %36 = vector.broadcast %cst_24 : f32 to vector<16x256xf32>
      %37 = arith.maximumf %35, %36 : vector<16x256xf32>
      %c0_25 = arith.constant 0 : index
      %c0_26 = arith.constant 0 : index
      %38 = vector.load %arg7[%c0_25, %c0_26] : memref<16x256xf32, #tpu.memory_space<vmem>>, vector<16x256xf32>
      tpu.vector_store %arg7[%c0_25, %c0_26], %37 {strides = array<i32>} : memref<16x256xf32, #tpu.memory_space<vmem>>, vector<16x256xf32>,
      %cst_27 = arith.constant 0xFF800000 : f32
      %39 = vector.broadcast %cst_27 : f32 to vector<16x1xf32>
      %c0_28 = arith.constant 0 : index
      %c0_29 = arith.constant 0 : index
      %40 = vector.load %arg8[%c0_28, %c0_29] : memref<16x1xf32, #tpu.memory_space<vmem>>, vector<16x1xf32>
      tpu.vector_store %arg8[%c0_28, %c0_29], %39 {strides = array<i32>} : memref<16x1xf32, #tpu.memory_space<vmem>>, vector<16x1xf32>,
      %cst_30 = arith.constant 0.000000e+00 : f32
      %41 = vector.broadcast %cst_30 : f32 to vector<16x1xf32>
      %c0_31 = arith.constant 0 : index
      %c0_32 = arith.constant 0 : index
      %42 = vector.load %arg9[%c0_31, %c0_32] : memref<16x1xf32, #tpu.memory_space<vmem>>, vector<16x1xf32>
      tpu.vector_store %arg9[%c0_31, %c0_32], %41 {strides = array<i32>} : memref<16x1xf32, #tpu.memory_space<vmem>>, vector<16x1xf32>,
    } else {
    }
    %c0 = arith.constant 0 : index
    %c0_1 = arith.constant 0 : index
    %3 = vector.load %arg7[%c0, %c0_1] : memref<16x256xf32, #tpu.memory_space<vmem>>, vector<16x256xf32>
    %4 = arith.truncf %3 : vector<16x256xf32> to vector<16x256xbf16>
    %c0_2 = arith.constant 0 : index
    %c0_3 = arith.constant 0 : index
    %5 = vector.load %arg5[%c0_2, %c0_3] : memref<256x512xbf16, #tpu.memory_space<vmem>>, vector<256x512xbf16>
    %cst = arith.constant dense<0.000000e+00> : vector<16x512xf32>
    %6 = tpu.matmul %4, %5, %cst {dimension_numbers = #tpu.dot_dimension_numbers<[1], [0], [0], [1], [0, 0, 1, 1], [], []>} : vector<16x256xbf16>, vector<256x512xbf16>, vector<16x512xf32> -> vector<16x512xf32>
    %c512_i32 = arith.constant 512 : i32
    %7 = arith.muli %arg1, %c512_i32 : i32
    %8 = tpu.assume_multiple %7, 512 : i32
    %c0_4 = arith.constant 0 : index
    %9 = arith.index_cast %8 : i32 to index
    %10 = vector.load %arg6[%c0_4, %9] : memref<16x512xf32, #tpu.memory_space<vmem>>, vector<16x512xf32>
    tpu.vector_store %arg6[%c0_4, %9], %6 {strides = array<i32>} : memref<16x512xf32, #tpu.memory_space<vmem>>, vector<16x512xf32>,
    %c0_5 = arith.constant 0 : index
    %c0_6 = arith.constant 0 : index
    %11 = vector.load %arg8[%c0_5, %c0_6] : memref<16x1xf32, #tpu.memory_space<vmem>>, vector<16x1xf32>
    %cst_7 = arith.constant dense<0xFF800000> : vector<16xf32>
    %12 = vector.multi_reduction <maximumf>, %6, %cst_7 [1] : vector<16x512xf32> to vector<16xf32>
    %13 = vector.shape_cast %12 : vector<16xf32> to vector<16x1xf32>
    %14 = arith.maximumf %11, %13 : vector<16x1xf32>
    %c0_8 = arith.constant 0 : index
    %c0_9 = arith.constant 0 : index
    %15 = vector.load %arg9[%c0_8, %c0_9] : memref<16x1xf32, #tpu.memory_space<vmem>>, vector<16x1xf32>
    %16 = arith.subf %11, %14 : vector<16x1xf32>
    %17 = math.exp %16 : vector<16x1xf32>
    %18 = arith.mulf %15, %17 : vector<16x1xf32>
    %19 = vector.broadcast %14 : vector<16x1xf32> to vector<16x512xf32>
    %20 = arith.subf %6, %19 : vector<16x512xf32>
    %21 = math.exp %20 : vector<16x512xf32>
    %cst_10 = arith.constant dense<0.000000e+00> : vector<16xf32>
    %22 = vector.multi_reduction <add>, %21, %cst_10 [1] : vector<16x512xf32> to vector<16xf32>
    %23 = vector.shape_cast %22 : vector<16xf32> to vector<16x1xf32>
    %24 = arith.addf %18, %23 : vector<16x1xf32>
    %c0_11 = arith.constant 0 : index
    %c0_12 = arith.constant 0 : index
    %25 = vector.load %arg9[%c0_11, %c0_12] : memref<16x1xf32, #tpu.memory_space<vmem>>, vector<16x1xf32>
    tpu.vector_store %arg9[%c0_11, %c0_12], %24 {strides = array<i32>} : memref<16x1xf32, #tpu.memory_space<vmem>>, vector<16x1xf32>,
    %c0_13 = arith.constant 0 : index
    %c0_14 = arith.constant 0 : index
    %26 = vector.load %arg8[%c0_13, %c0_14] : memref<16x1xf32, #tpu.memory_space<vmem>>, vector<16x1xf32>
    tpu.vector_store %arg8[%c0_13, %c0_14], %14 {strides = array<i32>} : memref<16x1xf32, #tpu.memory_space<vmem>>, vector<16x1xf32>,
    %c0_i32_15 = arith.constant 0 : i32
    %27 = arith.cmpi eq, %arg1, %c0_i32_15 : i32
    %28 = arith.extui %27 : i1 to i32
    %c0_i32_16 = arith.constant 0 : i32
    %29 = arith.cmpi ne, %28, %c0_i32_16 : i32
    scf.if %29 {
      %c0_17 = arith.constant 0 : index
      %c0_18 = arith.constant 0 : index
      %30 = vector.load %arg8[%c0_17, %c0_18] : memref<16x1xf32, #tpu.memory_space<vmem>>, vector<16x1xf32>
      %c0_19 = arith.constant 0 : index
      %c0_20 = arith.constant 0 : index
      %31 = vector.load %arg9[%c0_19, %c0_20] : memref<16x1xf32, #tpu.memory_space<vmem>>, vector<16x1xf32>
      %32 = math.log %31 : vector<16x1xf32>
      %33 = arith.addf %30, %32 : vector<16x1xf32>
      %c0_21 = arith.constant 0 : index
      %c0_22 = arith.constant 0 : index
      %34 = vector.load %arg6[%c0_21, %c0_22] : memref<16x512xf32, #tpu.memory_space<vmem>>, vector<16x512xf32>
      %35 = vector.broadcast %33 : vector<16x1xf32> to vector<16x512xf32>
      %36 = arith.subf %34, %35 : vector<16x512xf32>
      %c0_23 = arith.constant 0 : index
      %c0_24 = arith.constant 0 : index
      %37 = vector.load %arg6[%c0_23, %c0_24] : memref<16x512xf32, #tpu.memory_space<vmem>>, vector<16x512xf32>
      tpu.vector_store %arg6[%c0_23, %c0_24], %36 {strides = array<i32>} : memref<16x512xf32, #tpu.memory_space<vmem>>, vector<16x512xf32>,
    } else {
    }
    return
  }
  func.func @transform_0(%arg0: i32, %arg1: i32) -> (i32, i32) {
    %c0_i32 = arith.constant 0 : i32
    %c0_i32_0 = arith.constant 0 : i32
    return %arg0, %c0_i32 : i32, i32
  }
  func.func @transform_1(%arg0: i32, %arg1: i32) -> (i32, i32) {
    %c0_i32 = arith.constant 0 : i32
    %c0_i32_0 = arith.constant 0 : i32
    %c0_i32_1 = arith.constant 0 : i32
    return %c0_i32, %c0_i32_0 : i32, i32
  }
  func.func @transform_2(%arg0: i32, %arg1: i32) -> (i32, i32) {
    %c0_i32 = arith.constant 0 : i32
    %c0_i32_0 = arith.constant 0 : i32
    %c0_i32_1 = arith.constant 0 : i32
    return %c0_i32, %c0_i32_0 : i32, i32
  }
  func.func @transform_3(%arg0: i32, %arg1: i32) -> (i32, i32) {
    %c0_i32 = arith.constant 0 : i32
    %c0_i32_0 = arith.constant 0 : i32
    return %c0_i32, %arg1 : i32, i32
  }
  func.func @transform_4(%arg0: i32, %arg1: i32) -> (i32, i32) {
    %c0_i32 = arith.constant 0 : i32
    %c0_i32_0 = arith.constant 0 : i32
    return %arg0, %c0_i32 : i32, i32
  }
}

module attributes {stable_mosaic.version = 11 : i64} {
  func.func @_lstm_kernel(%arg0: i32, %arg1: memref<8x8x512xf32, #tpu.memory_space<vmem>>, %arg2: memref<1x8x128xf32, #tpu.memory_space<vmem>>, %arg3: memref<1x8x128xf32, #tpu.memory_space<vmem>>, %arg4: memref<128x512xbf16, #tpu.memory_space<vmem>>, %arg5: memref<8x8x128xbf16, #tpu.memory_space<vmem>>, %arg6: memref<1x8x128xf32, #tpu.memory_space<vmem>>, %arg7: memref<1x8x128xf32, #tpu.memory_space<vmem>>, %arg8: memref<8x128xf32, #tpu.memory_space<vmem>>, %arg9: memref<8x128xf32, #tpu.memory_space<vmem>>) attributes {dimension_semantics = [#tpu.dimension_semantics<arbitrary>], iteration_bounds = array<i64: 1>, scalar_prefetch = 0 : i64, scratch_operands = 2 : i64, tpu.core_type = #tpu.core_type<tc>, window_params = [{transform_indices = @transform_0, window_bounds = array<i64: 8, 8, 512>}, {pipeline_mode = #tpu.pipeline_mode<synchronous>, transform_indices = @transform_1, window_bounds = array<i64: 1, 8, 128>}, {pipeline_mode = #tpu.pipeline_mode<synchronous>, transform_indices = @transform_2, window_bounds = array<i64: 1, 8, 128>}, {pipeline_mode = #tpu.pipeline_mode<synchronous>, transform_indices = @transform_3, window_bounds = array<i64: 128, 512>}, {transform_indices = @transform_4, window_bounds = array<i64: 8, 8, 128>}, {pipeline_mode = #tpu.pipeline_mode<synchronous>, transform_indices = @transform_5, window_bounds = array<i64: 1, 8, 128>}, {pipeline_mode = #tpu.pipeline_mode<synchronous>, transform_indices = @transform_6, window_bounds = array<i64: 1, 8, 128>}]} {
    %c0_i32 = arith.constant 0 : i32
    %0 = arith.cmpi eq, %arg0, %c0_i32 : i32
    %1 = arith.extui %0 : i1 to i32
    %c0_i32_0 = arith.constant 0 : i32
    %2 = arith.cmpi ne, %1, %c0_i32_0 : i32
    scf.if %2 {
      %c0_146 = arith.constant 0 : index
      %c0_147 = arith.constant 0 : index
      %c0_148 = arith.constant 0 : index
      %334 = vector.load %arg2[%c0_146, %c0_147, %c0_148] : memref<1x8x128xf32, #tpu.memory_space<vmem>>, vector<1x8x128xf32>
      %335 = vector.shape_cast %334 : vector<1x8x128xf32> to vector<8x128xf32>
      %c0_149 = arith.constant 0 : index
      %c0_150 = arith.constant 0 : index
      %336 = vector.load %arg8[%c0_149, %c0_150] : memref<8x128xf32, #tpu.memory_space<vmem>>, vector<8x128xf32>
      tpu.vector_store %arg8[%c0_149, %c0_150], %335 {strides = array<i32>} : memref<8x128xf32, #tpu.memory_space<vmem>>, vector<8x128xf32>,
      %c0_151 = arith.constant 0 : index
      %c0_152 = arith.constant 0 : index
      %c0_153 = arith.constant 0 : index
      %337 = vector.load %arg3[%c0_151, %c0_152, %c0_153] : memref<1x8x128xf32, #tpu.memory_space<vmem>>, vector<1x8x128xf32>
      %338 = vector.shape_cast %337 : vector<1x8x128xf32> to vector<8x128xf32>
      %c0_154 = arith.constant 0 : index
      %c0_155 = arith.constant 0 : index
      %339 = vector.load %arg9[%c0_154, %c0_155] : memref<8x128xf32, #tpu.memory_space<vmem>>, vector<8x128xf32>
      tpu.vector_store %arg9[%c0_154, %c0_155], %338 {strides = array<i32>} : memref<8x128xf32, #tpu.memory_space<vmem>>, vector<8x128xf32>,
    } else {
    }
    %c0_i32_1 = arith.constant 0 : i32
    %3 = arith.index_cast %c0_i32_1 : i32 to index
    %c0 = arith.constant 0 : index
    %c0_2 = arith.constant 0 : index
    %4 = vector.load %arg1[%3, %c0, %c0_2] : memref<8x8x512xf32, #tpu.memory_space<vmem>>, vector<1x8x512xf32>
    %5 = vector.shape_cast %4 : vector<1x8x512xf32> to vector<8x512xf32>
    %c0_3 = arith.constant 0 : index
    %c0_4 = arith.constant 0 : index
    %6 = vector.load %arg8[%c0_3, %c0_4] : memref<8x128xf32, #tpu.memory_space<vmem>>, vector<8x128xf32>
    %7 = arith.truncf %6 : vector<8x128xf32> to vector<8x128xbf16>
    %c0_5 = arith.constant 0 : index
    %c0_6 = arith.constant 0 : index
    %8 = vector.load %arg4[%c0_5, %c0_6] : memref<128x512xbf16, #tpu.memory_space<vmem>>, vector<128x512xbf16>
    %cst = arith.constant dense<0.000000e+00> : vector<8x512xf32>
    %9 = tpu.matmul %7, %8, %cst {dimension_numbers = #tpu.dot_dimension_numbers<[1], [0], [0], [1], [0, 0, 1, 1], [], []>} : vector<8x128xbf16>, vector<128x512xbf16>, vector<8x512xf32> -> vector<8x512xf32>
    %10 = arith.addf %5, %9 : vector<8x512xf32>
    %11 = vector.extract_strided_slice %10 {offsets = [0, 0], sizes = [8, 128], strides = [1, 1]} : vector<8x512xf32> to vector<8x128xf32>
    %12 = arith.negf %11 : vector<8x128xf32>
    %13 = math.exp %12 : vector<8x128xf32>
    %cst_7 = arith.constant 1.000000e+00 : f32
    %14 = vector.broadcast %cst_7 : f32 to vector<8x128xf32>
    %15 = arith.addf %14, %13 : vector<8x128xf32>
    %16 = arith.divf %14, %15 : vector<8x128xf32>
    %17 = vector.extract_strided_slice %10 {offsets = [0, 128], sizes = [8, 128], strides = [1, 1]} : vector<8x512xf32> to vector<8x128xf32>
    %18 = arith.negf %17 : vector<8x128xf32>
    %19 = math.exp %18 : vector<8x128xf32>
    %cst_8 = arith.constant 1.000000e+00 : f32
    %20 = vector.broadcast %cst_8 : f32 to vector<8x128xf32>
    %21 = arith.addf %20, %19 : vector<8x128xf32>
    %22 = arith.divf %20, %21 : vector<8x128xf32>
    %23 = vector.extract_strided_slice %10 {offsets = [0, 256], sizes = [8, 128], strides = [1, 1]} : vector<8x512xf32> to vector<8x128xf32>
    %24 = math.tanh %23 : vector<8x128xf32>
    %25 = vector.extract_strided_slice %10 {offsets = [0, 384], sizes = [8, 128], strides = [1, 1]} : vector<8x512xf32> to vector<8x128xf32>
    %26 = arith.negf %25 : vector<8x128xf32>
    %27 = math.exp %26 : vector<8x128xf32>
    %cst_9 = arith.constant 1.000000e+00 : f32
    %28 = vector.broadcast %cst_9 : f32 to vector<8x128xf32>
    %29 = arith.addf %28, %27 : vector<8x128xf32>
    %30 = arith.divf %28, %29 : vector<8x128xf32>
    %c0_10 = arith.constant 0 : index
    %c0_11 = arith.constant 0 : index
    %31 = vector.load %arg9[%c0_10, %c0_11] : memref<8x128xf32, #tpu.memory_space<vmem>>, vector<8x128xf32>
    %32 = arith.mulf %22, %31 : vector<8x128xf32>
    %33 = arith.mulf %16, %24 : vector<8x128xf32>
    %34 = arith.addf %32, %33 : vector<8x128xf32>
    %35 = math.tanh %34 : vector<8x128xf32>
    %36 = arith.mulf %30, %35 : vector<8x128xf32>
    %c0_12 = arith.constant 0 : index
    %c0_13 = arith.constant 0 : index
    %37 = vector.load %arg9[%c0_12, %c0_13] : memref<8x128xf32, #tpu.memory_space<vmem>>, vector<8x128xf32>
    tpu.vector_store %arg9[%c0_12, %c0_13], %34 {strides = array<i32>} : memref<8x128xf32, #tpu.memory_space<vmem>>, vector<8x128xf32>,
    %c0_14 = arith.constant 0 : index
    %c0_15 = arith.constant 0 : index
    %38 = vector.load %arg8[%c0_14, %c0_15] : memref<8x128xf32, #tpu.memory_space<vmem>>, vector<8x128xf32>
    tpu.vector_store %arg8[%c0_14, %c0_15], %36 {strides = array<i32>} : memref<8x128xf32, #tpu.memory_space<vmem>>, vector<8x128xf32>,
    %39 = arith.truncf %36 : vector<8x128xf32> to vector<8x128xbf16>
    %40 = arith.index_cast %c0_i32_1 : i32 to index
    %c0_16 = arith.constant 0 : index
    %c0_17 = arith.constant 0 : index
    %41 = vector.load %arg5[%40, %c0_16, %c0_17] : memref<8x8x128xbf16, #tpu.memory_space<vmem>>, vector<1x8x128xbf16>
    %42 = vector.shape_cast %41 : vector<1x8x128xbf16> to vector<8x128xbf16>
    %43 = vector.shape_cast %39 : vector<8x128xbf16> to vector<1x8x128xbf16>
    tpu.vector_store %arg5[%40, %c0_16, %c0_17], %43 {strides = array<i32>} : memref<8x8x128xbf16, #tpu.memory_space<vmem>>, vector<1x8x128xbf16>,
    %c1_i32 = arith.constant 1 : i32
    %44 = arith.index_cast %c1_i32 : i32 to index
    %c0_18 = arith.constant 0 : index
    %c0_19 = arith.constant 0 : index
    %45 = vector.load %arg1[%44, %c0_18, %c0_19] : memref<8x8x512xf32, #tpu.memory_space<vmem>>, vector<1x8x512xf32>
    %46 = vector.shape_cast %45 : vector<1x8x512xf32> to vector<8x512xf32>
    %c0_20 = arith.constant 0 : index
    %c0_21 = arith.constant 0 : index
    %47 = vector.load %arg8[%c0_20, %c0_21] : memref<8x128xf32, #tpu.memory_space<vmem>>, vector<8x128xf32>
    %48 = arith.truncf %47 : vector<8x128xf32> to vector<8x128xbf16>
    %c0_22 = arith.constant 0 : index
    %c0_23 = arith.constant 0 : index
    %49 = vector.load %arg4[%c0_22, %c0_23] : memref<128x512xbf16, #tpu.memory_space<vmem>>, vector<128x512xbf16>
    %cst_24 = arith.constant dense<0.000000e+00> : vector<8x512xf32>
    %50 = tpu.matmul %48, %49, %cst_24 {dimension_numbers = #tpu.dot_dimension_numbers<[1], [0], [0], [1], [0, 0, 1, 1], [], []>} : vector<8x128xbf16>, vector<128x512xbf16>, vector<8x512xf32> -> vector<8x512xf32>
    %51 = arith.addf %46, %50 : vector<8x512xf32>
    %52 = vector.extract_strided_slice %51 {offsets = [0, 0], sizes = [8, 128], strides = [1, 1]} : vector<8x512xf32> to vector<8x128xf32>
    %53 = arith.negf %52 : vector<8x128xf32>
    %54 = math.exp %53 : vector<8x128xf32>
    %cst_25 = arith.constant 1.000000e+00 : f32
    %55 = vector.broadcast %cst_25 : f32 to vector<8x128xf32>
    %56 = arith.addf %55, %54 : vector<8x128xf32>
    %57 = arith.divf %55, %56 : vector<8x128xf32>
    %58 = vector.extract_strided_slice %51 {offsets = [0, 128], sizes = [8, 128], strides = [1, 1]} : vector<8x512xf32> to vector<8x128xf32>
    %59 = arith.negf %58 : vector<8x128xf32>
    %60 = math.exp %59 : vector<8x128xf32>
    %cst_26 = arith.constant 1.000000e+00 : f32
    %61 = vector.broadcast %cst_26 : f32 to vector<8x128xf32>
    %62 = arith.addf %61, %60 : vector<8x128xf32>
    %63 = arith.divf %61, %62 : vector<8x128xf32>
    %64 = vector.extract_strided_slice %51 {offsets = [0, 256], sizes = [8, 128], strides = [1, 1]} : vector<8x512xf32> to vector<8x128xf32>
    %65 = math.tanh %64 : vector<8x128xf32>
    %66 = vector.extract_strided_slice %51 {offsets = [0, 384], sizes = [8, 128], strides = [1, 1]} : vector<8x512xf32> to vector<8x128xf32>
    %67 = arith.negf %66 : vector<8x128xf32>
    %68 = math.exp %67 : vector<8x128xf32>
    %cst_27 = arith.constant 1.000000e+00 : f32
    %69 = vector.broadcast %cst_27 : f32 to vector<8x128xf32>
    %70 = arith.addf %69, %68 : vector<8x128xf32>
    %71 = arith.divf %69, %70 : vector<8x128xf32>
    %c0_28 = arith.constant 0 : index
    %c0_29 = arith.constant 0 : index
    %72 = vector.load %arg9[%c0_28, %c0_29] : memref<8x128xf32, #tpu.memory_space<vmem>>, vector<8x128xf32>
    %73 = arith.mulf %63, %72 : vector<8x128xf32>
    %74 = arith.mulf %57, %65 : vector<8x128xf32>
    %75 = arith.addf %73, %74 : vector<8x128xf32>
    %76 = math.tanh %75 : vector<8x128xf32>
    %77 = arith.mulf %71, %76 : vector<8x128xf32>
    %c0_30 = arith.constant 0 : index
    %c0_31 = arith.constant 0 : index
    %78 = vector.load %arg9[%c0_30, %c0_31] : memref<8x128xf32, #tpu.memory_space<vmem>>, vector<8x128xf32>
    tpu.vector_store %arg9[%c0_30, %c0_31], %75 {strides = array<i32>} : memref<8x128xf32, #tpu.memory_space<vmem>>, vector<8x128xf32>,
    %c0_32 = arith.constant 0 : index
    %c0_33 = arith.constant 0 : index
    %79 = vector.load %arg8[%c0_32, %c0_33] : memref<8x128xf32, #tpu.memory_space<vmem>>, vector<8x128xf32>
    tpu.vector_store %arg8[%c0_32, %c0_33], %77 {strides = array<i32>} : memref<8x128xf32, #tpu.memory_space<vmem>>, vector<8x128xf32>,
    %80 = arith.truncf %77 : vector<8x128xf32> to vector<8x128xbf16>
    %81 = arith.index_cast %c1_i32 : i32 to index
    %c0_34 = arith.constant 0 : index
    %c0_35 = arith.constant 0 : index
    %82 = vector.load %arg5[%81, %c0_34, %c0_35] : memref<8x8x128xbf16, #tpu.memory_space<vmem>>, vector<1x8x128xbf16>
    %83 = vector.shape_cast %82 : vector<1x8x128xbf16> to vector<8x128xbf16>
    %84 = vector.shape_cast %80 : vector<8x128xbf16> to vector<1x8x128xbf16>
    tpu.vector_store %arg5[%81, %c0_34, %c0_35], %84 {strides = array<i32>} : memref<8x8x128xbf16, #tpu.memory_space<vmem>>, vector<1x8x128xbf16>,
    %c2_i32 = arith.constant 2 : i32
    %85 = arith.index_cast %c2_i32 : i32 to index
    %c0_36 = arith.constant 0 : index
    %c0_37 = arith.constant 0 : index
    %86 = vector.load %arg1[%85, %c0_36, %c0_37] : memref<8x8x512xf32, #tpu.memory_space<vmem>>, vector<1x8x512xf32>
    %87 = vector.shape_cast %86 : vector<1x8x512xf32> to vector<8x512xf32>
    %c0_38 = arith.constant 0 : index
    %c0_39 = arith.constant 0 : index
    %88 = vector.load %arg8[%c0_38, %c0_39] : memref<8x128xf32, #tpu.memory_space<vmem>>, vector<8x128xf32>
    %89 = arith.truncf %88 : vector<8x128xf32> to vector<8x128xbf16>
    %c0_40 = arith.constant 0 : index
    %c0_41 = arith.constant 0 : index
    %90 = vector.load %arg4[%c0_40, %c0_41] : memref<128x512xbf16, #tpu.memory_space<vmem>>, vector<128x512xbf16>
    %cst_42 = arith.constant dense<0.000000e+00> : vector<8x512xf32>
    %91 = tpu.matmul %89, %90, %cst_42 {dimension_numbers = #tpu.dot_dimension_numbers<[1], [0], [0], [1], [0, 0, 1, 1], [], []>} : vector<8x128xbf16>, vector<128x512xbf16>, vector<8x512xf32> -> vector<8x512xf32>
    %92 = arith.addf %87, %91 : vector<8x512xf32>
    %93 = vector.extract_strided_slice %92 {offsets = [0, 0], sizes = [8, 128], strides = [1, 1]} : vector<8x512xf32> to vector<8x128xf32>
    %94 = arith.negf %93 : vector<8x128xf32>
    %95 = math.exp %94 : vector<8x128xf32>
    %cst_43 = arith.constant 1.000000e+00 : f32
    %96 = vector.broadcast %cst_43 : f32 to vector<8x128xf32>
    %97 = arith.addf %96, %95 : vector<8x128xf32>
    %98 = arith.divf %96, %97 : vector<8x128xf32>
    %99 = vector.extract_strided_slice %92 {offsets = [0, 128], sizes = [8, 128], strides = [1, 1]} : vector<8x512xf32> to vector<8x128xf32>
    %100 = arith.negf %99 : vector<8x128xf32>
    %101 = math.exp %100 : vector<8x128xf32>
    %cst_44 = arith.constant 1.000000e+00 : f32
    %102 = vector.broadcast %cst_44 : f32 to vector<8x128xf32>
    %103 = arith.addf %102, %101 : vector<8x128xf32>
    %104 = arith.divf %102, %103 : vector<8x128xf32>
    %105 = vector.extract_strided_slice %92 {offsets = [0, 256], sizes = [8, 128], strides = [1, 1]} : vector<8x512xf32> to vector<8x128xf32>
    %106 = math.tanh %105 : vector<8x128xf32>
    %107 = vector.extract_strided_slice %92 {offsets = [0, 384], sizes = [8, 128], strides = [1, 1]} : vector<8x512xf32> to vector<8x128xf32>
    %108 = arith.negf %107 : vector<8x128xf32>
    %109 = math.exp %108 : vector<8x128xf32>
    %cst_45 = arith.constant 1.000000e+00 : f32
    %110 = vector.broadcast %cst_45 : f32 to vector<8x128xf32>
    %111 = arith.addf %110, %109 : vector<8x128xf32>
    %112 = arith.divf %110, %111 : vector<8x128xf32>
    %c0_46 = arith.constant 0 : index
    %c0_47 = arith.constant 0 : index
    %113 = vector.load %arg9[%c0_46, %c0_47] : memref<8x128xf32, #tpu.memory_space<vmem>>, vector<8x128xf32>
    %114 = arith.mulf %104, %113 : vector<8x128xf32>
    %115 = arith.mulf %98, %106 : vector<8x128xf32>
    %116 = arith.addf %114, %115 : vector<8x128xf32>
    %117 = math.tanh %116 : vector<8x128xf32>
    %118 = arith.mulf %112, %117 : vector<8x128xf32>
    %c0_48 = arith.constant 0 : index
    %c0_49 = arith.constant 0 : index
    %119 = vector.load %arg9[%c0_48, %c0_49] : memref<8x128xf32, #tpu.memory_space<vmem>>, vector<8x128xf32>
    tpu.vector_store %arg9[%c0_48, %c0_49], %116 {strides = array<i32>} : memref<8x128xf32, #tpu.memory_space<vmem>>, vector<8x128xf32>,
    %c0_50 = arith.constant 0 : index
    %c0_51 = arith.constant 0 : index
    %120 = vector.load %arg8[%c0_50, %c0_51] : memref<8x128xf32, #tpu.memory_space<vmem>>, vector<8x128xf32>
    tpu.vector_store %arg8[%c0_50, %c0_51], %118 {strides = array<i32>} : memref<8x128xf32, #tpu.memory_space<vmem>>, vector<8x128xf32>,
    %121 = arith.truncf %118 : vector<8x128xf32> to vector<8x128xbf16>
    %122 = arith.index_cast %c2_i32 : i32 to index
    %c0_52 = arith.constant 0 : index
    %c0_53 = arith.constant 0 : index
    %123 = vector.load %arg5[%122, %c0_52, %c0_53] : memref<8x8x128xbf16, #tpu.memory_space<vmem>>, vector<1x8x128xbf16>
    %124 = vector.shape_cast %123 : vector<1x8x128xbf16> to vector<8x128xbf16>
    %125 = vector.shape_cast %121 : vector<8x128xbf16> to vector<1x8x128xbf16>
    tpu.vector_store %arg5[%122, %c0_52, %c0_53], %125 {strides = array<i32>} : memref<8x8x128xbf16, #tpu.memory_space<vmem>>, vector<1x8x128xbf16>,
    %c3_i32 = arith.constant 3 : i32
    %126 = arith.index_cast %c3_i32 : i32 to index
    %c0_54 = arith.constant 0 : index
    %c0_55 = arith.constant 0 : index
    %127 = vector.load %arg1[%126, %c0_54, %c0_55] : memref<8x8x512xf32, #tpu.memory_space<vmem>>, vector<1x8x512xf32>
    %128 = vector.shape_cast %127 : vector<1x8x512xf32> to vector<8x512xf32>
    %c0_56 = arith.constant 0 : index
    %c0_57 = arith.constant 0 : index
    %129 = vector.load %arg8[%c0_56, %c0_57] : memref<8x128xf32, #tpu.memory_space<vmem>>, vector<8x128xf32>
    %130 = arith.truncf %129 : vector<8x128xf32> to vector<8x128xbf16>
    %c0_58 = arith.constant 0 : index
    %c0_59 = arith.constant 0 : index
    %131 = vector.load %arg4[%c0_58, %c0_59] : memref<128x512xbf16, #tpu.memory_space<vmem>>, vector<128x512xbf16>
    %cst_60 = arith.constant dense<0.000000e+00> : vector<8x512xf32>
    %132 = tpu.matmul %130, %131, %cst_60 {dimension_numbers = #tpu.dot_dimension_numbers<[1], [0], [0], [1], [0, 0, 1, 1], [], []>} : vector<8x128xbf16>, vector<128x512xbf16>, vector<8x512xf32> -> vector<8x512xf32>
    %133 = arith.addf %128, %132 : vector<8x512xf32>
    %134 = vector.extract_strided_slice %133 {offsets = [0, 0], sizes = [8, 128], strides = [1, 1]} : vector<8x512xf32> to vector<8x128xf32>
    %135 = arith.negf %134 : vector<8x128xf32>
    %136 = math.exp %135 : vector<8x128xf32>
    %cst_61 = arith.constant 1.000000e+00 : f32
    %137 = vector.broadcast %cst_61 : f32 to vector<8x128xf32>
    %138 = arith.addf %137, %136 : vector<8x128xf32>
    %139 = arith.divf %137, %138 : vector<8x128xf32>
    %140 = vector.extract_strided_slice %133 {offsets = [0, 128], sizes = [8, 128], strides = [1, 1]} : vector<8x512xf32> to vector<8x128xf32>
    %141 = arith.negf %140 : vector<8x128xf32>
    %142 = math.exp %141 : vector<8x128xf32>
    %cst_62 = arith.constant 1.000000e+00 : f32
    %143 = vector.broadcast %cst_62 : f32 to vector<8x128xf32>
    %144 = arith.addf %143, %142 : vector<8x128xf32>
    %145 = arith.divf %143, %144 : vector<8x128xf32>
    %146 = vector.extract_strided_slice %133 {offsets = [0, 256], sizes = [8, 128], strides = [1, 1]} : vector<8x512xf32> to vector<8x128xf32>
    %147 = math.tanh %146 : vector<8x128xf32>
    %148 = vector.extract_strided_slice %133 {offsets = [0, 384], sizes = [8, 128], strides = [1, 1]} : vector<8x512xf32> to vector<8x128xf32>
    %149 = arith.negf %148 : vector<8x128xf32>
    %150 = math.exp %149 : vector<8x128xf32>
    %cst_63 = arith.constant 1.000000e+00 : f32
    %151 = vector.broadcast %cst_63 : f32 to vector<8x128xf32>
    %152 = arith.addf %151, %150 : vector<8x128xf32>
    %153 = arith.divf %151, %152 : vector<8x128xf32>
    %c0_64 = arith.constant 0 : index
    %c0_65 = arith.constant 0 : index
    %154 = vector.load %arg9[%c0_64, %c0_65] : memref<8x128xf32, #tpu.memory_space<vmem>>, vector<8x128xf32>
    %155 = arith.mulf %145, %154 : vector<8x128xf32>
    %156 = arith.mulf %139, %147 : vector<8x128xf32>
    %157 = arith.addf %155, %156 : vector<8x128xf32>
    %158 = math.tanh %157 : vector<8x128xf32>
    %159 = arith.mulf %153, %158 : vector<8x128xf32>
    %c0_66 = arith.constant 0 : index
    %c0_67 = arith.constant 0 : index
    %160 = vector.load %arg9[%c0_66, %c0_67] : memref<8x128xf32, #tpu.memory_space<vmem>>, vector<8x128xf32>
    tpu.vector_store %arg9[%c0_66, %c0_67], %157 {strides = array<i32>} : memref<8x128xf32, #tpu.memory_space<vmem>>, vector<8x128xf32>,
    %c0_68 = arith.constant 0 : index
    %c0_69 = arith.constant 0 : index
    %161 = vector.load %arg8[%c0_68, %c0_69] : memref<8x128xf32, #tpu.memory_space<vmem>>, vector<8x128xf32>
    tpu.vector_store %arg8[%c0_68, %c0_69], %159 {strides = array<i32>} : memref<8x128xf32, #tpu.memory_space<vmem>>, vector<8x128xf32>,
    %162 = arith.truncf %159 : vector<8x128xf32> to vector<8x128xbf16>
    %163 = arith.index_cast %c3_i32 : i32 to index
    %c0_70 = arith.constant 0 : index
    %c0_71 = arith.constant 0 : index
    %164 = vector.load %arg5[%163, %c0_70, %c0_71] : memref<8x8x128xbf16, #tpu.memory_space<vmem>>, vector<1x8x128xbf16>
    %165 = vector.shape_cast %164 : vector<1x8x128xbf16> to vector<8x128xbf16>
    %166 = vector.shape_cast %162 : vector<8x128xbf16> to vector<1x8x128xbf16>
    tpu.vector_store %arg5[%163, %c0_70, %c0_71], %166 {strides = array<i32>} : memref<8x8x128xbf16, #tpu.memory_space<vmem>>, vector<1x8x128xbf16>,
    %c4_i32 = arith.constant 4 : i32
    %167 = arith.index_cast %c4_i32 : i32 to index
    %c0_72 = arith.constant 0 : index
    %c0_73 = arith.constant 0 : index
    %168 = vector.load %arg1[%167, %c0_72, %c0_73] : memref<8x8x512xf32, #tpu.memory_space<vmem>>, vector<1x8x512xf32>
    %169 = vector.shape_cast %168 : vector<1x8x512xf32> to vector<8x512xf32>
    %c0_74 = arith.constant 0 : index
    %c0_75 = arith.constant 0 : index
    %170 = vector.load %arg8[%c0_74, %c0_75] : memref<8x128xf32, #tpu.memory_space<vmem>>, vector<8x128xf32>
    %171 = arith.truncf %170 : vector<8x128xf32> to vector<8x128xbf16>
    %c0_76 = arith.constant 0 : index
    %c0_77 = arith.constant 0 : index
    %172 = vector.load %arg4[%c0_76, %c0_77] : memref<128x512xbf16, #tpu.memory_space<vmem>>, vector<128x512xbf16>
    %cst_78 = arith.constant dense<0.000000e+00> : vector<8x512xf32>
    %173 = tpu.matmul %171, %172, %cst_78 {dimension_numbers = #tpu.dot_dimension_numbers<[1], [0], [0], [1], [0, 0, 1, 1], [], []>} : vector<8x128xbf16>, vector<128x512xbf16>, vector<8x512xf32> -> vector<8x512xf32>
    %174 = arith.addf %169, %173 : vector<8x512xf32>
    %175 = vector.extract_strided_slice %174 {offsets = [0, 0], sizes = [8, 128], strides = [1, 1]} : vector<8x512xf32> to vector<8x128xf32>
    %176 = arith.negf %175 : vector<8x128xf32>
    %177 = math.exp %176 : vector<8x128xf32>
    %cst_79 = arith.constant 1.000000e+00 : f32
    %178 = vector.broadcast %cst_79 : f32 to vector<8x128xf32>
    %179 = arith.addf %178, %177 : vector<8x128xf32>
    %180 = arith.divf %178, %179 : vector<8x128xf32>
    %181 = vector.extract_strided_slice %174 {offsets = [0, 128], sizes = [8, 128], strides = [1, 1]} : vector<8x512xf32> to vector<8x128xf32>
    %182 = arith.negf %181 : vector<8x128xf32>
    %183 = math.exp %182 : vector<8x128xf32>
    %cst_80 = arith.constant 1.000000e+00 : f32
    %184 = vector.broadcast %cst_80 : f32 to vector<8x128xf32>
    %185 = arith.addf %184, %183 : vector<8x128xf32>
    %186 = arith.divf %184, %185 : vector<8x128xf32>
    %187 = vector.extract_strided_slice %174 {offsets = [0, 256], sizes = [8, 128], strides = [1, 1]} : vector<8x512xf32> to vector<8x128xf32>
    %188 = math.tanh %187 : vector<8x128xf32>
    %189 = vector.extract_strided_slice %174 {offsets = [0, 384], sizes = [8, 128], strides = [1, 1]} : vector<8x512xf32> to vector<8x128xf32>
    %190 = arith.negf %189 : vector<8x128xf32>
    %191 = math.exp %190 : vector<8x128xf32>
    %cst_81 = arith.constant 1.000000e+00 : f32
    %192 = vector.broadcast %cst_81 : f32 to vector<8x128xf32>
    %193 = arith.addf %192, %191 : vector<8x128xf32>
    %194 = arith.divf %192, %193 : vector<8x128xf32>
    %c0_82 = arith.constant 0 : index
    %c0_83 = arith.constant 0 : index
    %195 = vector.load %arg9[%c0_82, %c0_83] : memref<8x128xf32, #tpu.memory_space<vmem>>, vector<8x128xf32>
    %196 = arith.mulf %186, %195 : vector<8x128xf32>
    %197 = arith.mulf %180, %188 : vector<8x128xf32>
    %198 = arith.addf %196, %197 : vector<8x128xf32>
    %199 = math.tanh %198 : vector<8x128xf32>
    %200 = arith.mulf %194, %199 : vector<8x128xf32>
    %c0_84 = arith.constant 0 : index
    %c0_85 = arith.constant 0 : index
    %201 = vector.load %arg9[%c0_84, %c0_85] : memref<8x128xf32, #tpu.memory_space<vmem>>, vector<8x128xf32>
    tpu.vector_store %arg9[%c0_84, %c0_85], %198 {strides = array<i32>} : memref<8x128xf32, #tpu.memory_space<vmem>>, vector<8x128xf32>,
    %c0_86 = arith.constant 0 : index
    %c0_87 = arith.constant 0 : index
    %202 = vector.load %arg8[%c0_86, %c0_87] : memref<8x128xf32, #tpu.memory_space<vmem>>, vector<8x128xf32>
    tpu.vector_store %arg8[%c0_86, %c0_87], %200 {strides = array<i32>} : memref<8x128xf32, #tpu.memory_space<vmem>>, vector<8x128xf32>,
    %203 = arith.truncf %200 : vector<8x128xf32> to vector<8x128xbf16>
    %204 = arith.index_cast %c4_i32 : i32 to index
    %c0_88 = arith.constant 0 : index
    %c0_89 = arith.constant 0 : index
    %205 = vector.load %arg5[%204, %c0_88, %c0_89] : memref<8x8x128xbf16, #tpu.memory_space<vmem>>, vector<1x8x128xbf16>
    %206 = vector.shape_cast %205 : vector<1x8x128xbf16> to vector<8x128xbf16>
    %207 = vector.shape_cast %203 : vector<8x128xbf16> to vector<1x8x128xbf16>
    tpu.vector_store %arg5[%204, %c0_88, %c0_89], %207 {strides = array<i32>} : memref<8x8x128xbf16, #tpu.memory_space<vmem>>, vector<1x8x128xbf16>,
    %c5_i32 = arith.constant 5 : i32
    %208 = arith.index_cast %c5_i32 : i32 to index
    %c0_90 = arith.constant 0 : index
    %c0_91 = arith.constant 0 : index
    %209 = vector.load %arg1[%208, %c0_90, %c0_91] : memref<8x8x512xf32, #tpu.memory_space<vmem>>, vector<1x8x512xf32>
    %210 = vector.shape_cast %209 : vector<1x8x512xf32> to vector<8x512xf32>
    %c0_92 = arith.constant 0 : index
    %c0_93 = arith.constant 0 : index
    %211 = vector.load %arg8[%c0_92, %c0_93] : memref<8x128xf32, #tpu.memory_space<vmem>>, vector<8x128xf32>
    %212 = arith.truncf %211 : vector<8x128xf32> to vector<8x128xbf16>
    %c0_94 = arith.constant 0 : index
    %c0_95 = arith.constant 0 : index
    %213 = vector.load %arg4[%c0_94, %c0_95] : memref<128x512xbf16, #tpu.memory_space<vmem>>, vector<128x512xbf16>
    %cst_96 = arith.constant dense<0.000000e+00> : vector<8x512xf32>
    %214 = tpu.matmul %212, %213, %cst_96 {dimension_numbers = #tpu.dot_dimension_numbers<[1], [0], [0], [1], [0, 0, 1, 1], [], []>} : vector<8x128xbf16>, vector<128x512xbf16>, vector<8x512xf32> -> vector<8x512xf32>
    %215 = arith.addf %210, %214 : vector<8x512xf32>
    %216 = vector.extract_strided_slice %215 {offsets = [0, 0], sizes = [8, 128], strides = [1, 1]} : vector<8x512xf32> to vector<8x128xf32>
    %217 = arith.negf %216 : vector<8x128xf32>
    %218 = math.exp %217 : vector<8x128xf32>
    %cst_97 = arith.constant 1.000000e+00 : f32
    %219 = vector.broadcast %cst_97 : f32 to vector<8x128xf32>
    %220 = arith.addf %219, %218 : vector<8x128xf32>
    %221 = arith.divf %219, %220 : vector<8x128xf32>
    %222 = vector.extract_strided_slice %215 {offsets = [0, 128], sizes = [8, 128], strides = [1, 1]} : vector<8x512xf32> to vector<8x128xf32>
    %223 = arith.negf %222 : vector<8x128xf32>
    %224 = math.exp %223 : vector<8x128xf32>
    %cst_98 = arith.constant 1.000000e+00 : f32
    %225 = vector.broadcast %cst_98 : f32 to vector<8x128xf32>
    %226 = arith.addf %225, %224 : vector<8x128xf32>
    %227 = arith.divf %225, %226 : vector<8x128xf32>
    %228 = vector.extract_strided_slice %215 {offsets = [0, 256], sizes = [8, 128], strides = [1, 1]} : vector<8x512xf32> to vector<8x128xf32>
    %229 = math.tanh %228 : vector<8x128xf32>
    %230 = vector.extract_strided_slice %215 {offsets = [0, 384], sizes = [8, 128], strides = [1, 1]} : vector<8x512xf32> to vector<8x128xf32>
    %231 = arith.negf %230 : vector<8x128xf32>
    %232 = math.exp %231 : vector<8x128xf32>
    %cst_99 = arith.constant 1.000000e+00 : f32
    %233 = vector.broadcast %cst_99 : f32 to vector<8x128xf32>
    %234 = arith.addf %233, %232 : vector<8x128xf32>
    %235 = arith.divf %233, %234 : vector<8x128xf32>
    %c0_100 = arith.constant 0 : index
    %c0_101 = arith.constant 0 : index
    %236 = vector.load %arg9[%c0_100, %c0_101] : memref<8x128xf32, #tpu.memory_space<vmem>>, vector<8x128xf32>
    %237 = arith.mulf %227, %236 : vector<8x128xf32>
    %238 = arith.mulf %221, %229 : vector<8x128xf32>
    %239 = arith.addf %237, %238 : vector<8x128xf32>
    %240 = math.tanh %239 : vector<8x128xf32>
    %241 = arith.mulf %235, %240 : vector<8x128xf32>
    %c0_102 = arith.constant 0 : index
    %c0_103 = arith.constant 0 : index
    %242 = vector.load %arg9[%c0_102, %c0_103] : memref<8x128xf32, #tpu.memory_space<vmem>>, vector<8x128xf32>
    tpu.vector_store %arg9[%c0_102, %c0_103], %239 {strides = array<i32>} : memref<8x128xf32, #tpu.memory_space<vmem>>, vector<8x128xf32>,
    %c0_104 = arith.constant 0 : index
    %c0_105 = arith.constant 0 : index
    %243 = vector.load %arg8[%c0_104, %c0_105] : memref<8x128xf32, #tpu.memory_space<vmem>>, vector<8x128xf32>
    tpu.vector_store %arg8[%c0_104, %c0_105], %241 {strides = array<i32>} : memref<8x128xf32, #tpu.memory_space<vmem>>, vector<8x128xf32>,
    %244 = arith.truncf %241 : vector<8x128xf32> to vector<8x128xbf16>
    %245 = arith.index_cast %c5_i32 : i32 to index
    %c0_106 = arith.constant 0 : index
    %c0_107 = arith.constant 0 : index
    %246 = vector.load %arg5[%245, %c0_106, %c0_107] : memref<8x8x128xbf16, #tpu.memory_space<vmem>>, vector<1x8x128xbf16>
    %247 = vector.shape_cast %246 : vector<1x8x128xbf16> to vector<8x128xbf16>
    %248 = vector.shape_cast %244 : vector<8x128xbf16> to vector<1x8x128xbf16>
    tpu.vector_store %arg5[%245, %c0_106, %c0_107], %248 {strides = array<i32>} : memref<8x8x128xbf16, #tpu.memory_space<vmem>>, vector<1x8x128xbf16>,
    %c6_i32 = arith.constant 6 : i32
    %249 = arith.index_cast %c6_i32 : i32 to index
    %c0_108 = arith.constant 0 : index
    %c0_109 = arith.constant 0 : index
    %250 = vector.load %arg1[%249, %c0_108, %c0_109] : memref<8x8x512xf32, #tpu.memory_space<vmem>>, vector<1x8x512xf32>
    %251 = vector.shape_cast %250 : vector<1x8x512xf32> to vector<8x512xf32>
    %c0_110 = arith.constant 0 : index
    %c0_111 = arith.constant 0 : index
    %252 = vector.load %arg8[%c0_110, %c0_111] : memref<8x128xf32, #tpu.memory_space<vmem>>, vector<8x128xf32>
    %253 = arith.truncf %252 : vector<8x128xf32> to vector<8x128xbf16>
    %c0_112 = arith.constant 0 : index
    %c0_113 = arith.constant 0 : index
    %254 = vector.load %arg4[%c0_112, %c0_113] : memref<128x512xbf16, #tpu.memory_space<vmem>>, vector<128x512xbf16>
    %cst_114 = arith.constant dense<0.000000e+00> : vector<8x512xf32>
    %255 = tpu.matmul %253, %254, %cst_114 {dimension_numbers = #tpu.dot_dimension_numbers<[1], [0], [0], [1], [0, 0, 1, 1], [], []>} : vector<8x128xbf16>, vector<128x512xbf16>, vector<8x512xf32> -> vector<8x512xf32>
    %256 = arith.addf %251, %255 : vector<8x512xf32>
    %257 = vector.extract_strided_slice %256 {offsets = [0, 0], sizes = [8, 128], strides = [1, 1]} : vector<8x512xf32> to vector<8x128xf32>
    %258 = arith.negf %257 : vector<8x128xf32>
    %259 = math.exp %258 : vector<8x128xf32>
    %cst_115 = arith.constant 1.000000e+00 : f32
    %260 = vector.broadcast %cst_115 : f32 to vector<8x128xf32>
    %261 = arith.addf %260, %259 : vector<8x128xf32>
    %262 = arith.divf %260, %261 : vector<8x128xf32>
    %263 = vector.extract_strided_slice %256 {offsets = [0, 128], sizes = [8, 128], strides = [1, 1]} : vector<8x512xf32> to vector<8x128xf32>
    %264 = arith.negf %263 : vector<8x128xf32>
    %265 = math.exp %264 : vector<8x128xf32>
    %cst_116 = arith.constant 1.000000e+00 : f32
    %266 = vector.broadcast %cst_116 : f32 to vector<8x128xf32>
    %267 = arith.addf %266, %265 : vector<8x128xf32>
    %268 = arith.divf %266, %267 : vector<8x128xf32>
    %269 = vector.extract_strided_slice %256 {offsets = [0, 256], sizes = [8, 128], strides = [1, 1]} : vector<8x512xf32> to vector<8x128xf32>
    %270 = math.tanh %269 : vector<8x128xf32>
    %271 = vector.extract_strided_slice %256 {offsets = [0, 384], sizes = [8, 128], strides = [1, 1]} : vector<8x512xf32> to vector<8x128xf32>
    %272 = arith.negf %271 : vector<8x128xf32>
    %273 = math.exp %272 : vector<8x128xf32>
    %cst_117 = arith.constant 1.000000e+00 : f32
    %274 = vector.broadcast %cst_117 : f32 to vector<8x128xf32>
    %275 = arith.addf %274, %273 : vector<8x128xf32>
    %276 = arith.divf %274, %275 : vector<8x128xf32>
    %c0_118 = arith.constant 0 : index
    %c0_119 = arith.constant 0 : index
    %277 = vector.load %arg9[%c0_118, %c0_119] : memref<8x128xf32, #tpu.memory_space<vmem>>, vector<8x128xf32>
    %278 = arith.mulf %268, %277 : vector<8x128xf32>
    %279 = arith.mulf %262, %270 : vector<8x128xf32>
    %280 = arith.addf %278, %279 : vector<8x128xf32>
    %281 = math.tanh %280 : vector<8x128xf32>
    %282 = arith.mulf %276, %281 : vector<8x128xf32>
    %c0_120 = arith.constant 0 : index
    %c0_121 = arith.constant 0 : index
    %283 = vector.load %arg9[%c0_120, %c0_121] : memref<8x128xf32, #tpu.memory_space<vmem>>, vector<8x128xf32>
    tpu.vector_store %arg9[%c0_120, %c0_121], %280 {strides = array<i32>} : memref<8x128xf32, #tpu.memory_space<vmem>>, vector<8x128xf32>,
    %c0_122 = arith.constant 0 : index
    %c0_123 = arith.constant 0 : index
    %284 = vector.load %arg8[%c0_122, %c0_123] : memref<8x128xf32, #tpu.memory_space<vmem>>, vector<8x128xf32>
    tpu.vector_store %arg8[%c0_122, %c0_123], %282 {strides = array<i32>} : memref<8x128xf32, #tpu.memory_space<vmem>>, vector<8x128xf32>,
    %285 = arith.truncf %282 : vector<8x128xf32> to vector<8x128xbf16>
    %286 = arith.index_cast %c6_i32 : i32 to index
    %c0_124 = arith.constant 0 : index
    %c0_125 = arith.constant 0 : index
    %287 = vector.load %arg5[%286, %c0_124, %c0_125] : memref<8x8x128xbf16, #tpu.memory_space<vmem>>, vector<1x8x128xbf16>
    %288 = vector.shape_cast %287 : vector<1x8x128xbf16> to vector<8x128xbf16>
    %289 = vector.shape_cast %285 : vector<8x128xbf16> to vector<1x8x128xbf16>
    tpu.vector_store %arg5[%286, %c0_124, %c0_125], %289 {strides = array<i32>} : memref<8x8x128xbf16, #tpu.memory_space<vmem>>, vector<1x8x128xbf16>,
    %c7_i32 = arith.constant 7 : i32
    %290 = arith.index_cast %c7_i32 : i32 to index
    %c0_126 = arith.constant 0 : index
    %c0_127 = arith.constant 0 : index
    %291 = vector.load %arg1[%290, %c0_126, %c0_127] : memref<8x8x512xf32, #tpu.memory_space<vmem>>, vector<1x8x512xf32>
    %292 = vector.shape_cast %291 : vector<1x8x512xf32> to vector<8x512xf32>
    %c0_128 = arith.constant 0 : index
    %c0_129 = arith.constant 0 : index
    %293 = vector.load %arg8[%c0_128, %c0_129] : memref<8x128xf32, #tpu.memory_space<vmem>>, vector<8x128xf32>
    %294 = arith.truncf %293 : vector<8x128xf32> to vector<8x128xbf16>
    %c0_130 = arith.constant 0 : index
    %c0_131 = arith.constant 0 : index
    %295 = vector.load %arg4[%c0_130, %c0_131] : memref<128x512xbf16, #tpu.memory_space<vmem>>, vector<128x512xbf16>
    %cst_132 = arith.constant dense<0.000000e+00> : vector<8x512xf32>
    %296 = tpu.matmul %294, %295, %cst_132 {dimension_numbers = #tpu.dot_dimension_numbers<[1], [0], [0], [1], [0, 0, 1, 1], [], []>} : vector<8x128xbf16>, vector<128x512xbf16>, vector<8x512xf32> -> vector<8x512xf32>
    %297 = arith.addf %292, %296 : vector<8x512xf32>
    %298 = vector.extract_strided_slice %297 {offsets = [0, 0], sizes = [8, 128], strides = [1, 1]} : vector<8x512xf32> to vector<8x128xf32>
    %299 = arith.negf %298 : vector<8x128xf32>
    %300 = math.exp %299 : vector<8x128xf32>
    %cst_133 = arith.constant 1.000000e+00 : f32
    %301 = vector.broadcast %cst_133 : f32 to vector<8x128xf32>
    %302 = arith.addf %301, %300 : vector<8x128xf32>
    %303 = arith.divf %301, %302 : vector<8x128xf32>
    %304 = vector.extract_strided_slice %297 {offsets = [0, 128], sizes = [8, 128], strides = [1, 1]} : vector<8x512xf32> to vector<8x128xf32>
    %305 = arith.negf %304 : vector<8x128xf32>
    %306 = math.exp %305 : vector<8x128xf32>
    %cst_134 = arith.constant 1.000000e+00 : f32
    %307 = vector.broadcast %cst_134 : f32 to vector<8x128xf32>
    %308 = arith.addf %307, %306 : vector<8x128xf32>
    %309 = arith.divf %307, %308 : vector<8x128xf32>
    %310 = vector.extract_strided_slice %297 {offsets = [0, 256], sizes = [8, 128], strides = [1, 1]} : vector<8x512xf32> to vector<8x128xf32>
    %311 = math.tanh %310 : vector<8x128xf32>
    %312 = vector.extract_strided_slice %297 {offsets = [0, 384], sizes = [8, 128], strides = [1, 1]} : vector<8x512xf32> to vector<8x128xf32>
    %313 = arith.negf %312 : vector<8x128xf32>
    %314 = math.exp %313 : vector<8x128xf32>
    %cst_135 = arith.constant 1.000000e+00 : f32
    %315 = vector.broadcast %cst_135 : f32 to vector<8x128xf32>
    %316 = arith.addf %315, %314 : vector<8x128xf32>
    %317 = arith.divf %315, %316 : vector<8x128xf32>
    %c0_136 = arith.constant 0 : index
    %c0_137 = arith.constant 0 : index
    %318 = vector.load %arg9[%c0_136, %c0_137] : memref<8x128xf32, #tpu.memory_space<vmem>>, vector<8x128xf32>
    %319 = arith.mulf %309, %318 : vector<8x128xf32>
    %320 = arith.mulf %303, %311 : vector<8x128xf32>
    %321 = arith.addf %319, %320 : vector<8x128xf32>
    %322 = math.tanh %321 : vector<8x128xf32>
    %323 = arith.mulf %317, %322 : vector<8x128xf32>
    %c0_138 = arith.constant 0 : index
    %c0_139 = arith.constant 0 : index
    %324 = vector.load %arg9[%c0_138, %c0_139] : memref<8x128xf32, #tpu.memory_space<vmem>>, vector<8x128xf32>
    tpu.vector_store %arg9[%c0_138, %c0_139], %321 {strides = array<i32>} : memref<8x128xf32, #tpu.memory_space<vmem>>, vector<8x128xf32>,
    %c0_140 = arith.constant 0 : index
    %c0_141 = arith.constant 0 : index
    %325 = vector.load %arg8[%c0_140, %c0_141] : memref<8x128xf32, #tpu.memory_space<vmem>>, vector<8x128xf32>
    tpu.vector_store %arg8[%c0_140, %c0_141], %323 {strides = array<i32>} : memref<8x128xf32, #tpu.memory_space<vmem>>, vector<8x128xf32>,
    %326 = arith.truncf %323 : vector<8x128xf32> to vector<8x128xbf16>
    %327 = arith.index_cast %c7_i32 : i32 to index
    %c0_142 = arith.constant 0 : index
    %c0_143 = arith.constant 0 : index
    %328 = vector.load %arg5[%327, %c0_142, %c0_143] : memref<8x8x128xbf16, #tpu.memory_space<vmem>>, vector<1x8x128xbf16>
    %329 = vector.shape_cast %328 : vector<1x8x128xbf16> to vector<8x128xbf16>
    %330 = vector.shape_cast %326 : vector<8x128xbf16> to vector<1x8x128xbf16>
    tpu.vector_store %arg5[%327, %c0_142, %c0_143], %330 {strides = array<i32>} : memref<8x8x128xbf16, #tpu.memory_space<vmem>>, vector<1x8x128xbf16>,
    %c8_i32 = arith.constant 8 : i32
    %c0_i32_144 = arith.constant 0 : i32
    %331 = arith.cmpi eq, %arg0, %c0_i32_144 : i32
    %332 = arith.extui %331 : i1 to i32
    %c0_i32_145 = arith.constant 0 : i32
    %333 = arith.cmpi ne, %332, %c0_i32_145 : i32
    scf.if %333 {
      %c0_146 = arith.constant 0 : index
      %c0_147 = arith.constant 0 : index
      %334 = vector.load %arg8[%c0_146, %c0_147] : memref<8x128xf32, #tpu.memory_space<vmem>>, vector<8x128xf32>
      %c0_148 = arith.constant 0 : index
      %c0_149 = arith.constant 0 : index
      %c0_150 = arith.constant 0 : index
      %335 = vector.load %arg6[%c0_148, %c0_149, %c0_150] : memref<1x8x128xf32, #tpu.memory_space<vmem>>, vector<1x8x128xf32>
      %336 = vector.shape_cast %335 : vector<1x8x128xf32> to vector<8x128xf32>
      %337 = vector.shape_cast %334 : vector<8x128xf32> to vector<1x8x128xf32>
      tpu.vector_store %arg6[%c0_148, %c0_149, %c0_150], %337 {strides = array<i32>} : memref<1x8x128xf32, #tpu.memory_space<vmem>>, vector<1x8x128xf32>,
      %c0_151 = arith.constant 0 : index
      %c0_152 = arith.constant 0 : index
      %338 = vector.load %arg9[%c0_151, %c0_152] : memref<8x128xf32, #tpu.memory_space<vmem>>, vector<8x128xf32>
      %c0_153 = arith.constant 0 : index
      %c0_154 = arith.constant 0 : index
      %c0_155 = arith.constant 0 : index
      %339 = vector.load %arg7[%c0_153, %c0_154, %c0_155] : memref<1x8x128xf32, #tpu.memory_space<vmem>>, vector<1x8x128xf32>
      %340 = vector.shape_cast %339 : vector<1x8x128xf32> to vector<8x128xf32>
      %341 = vector.shape_cast %338 : vector<8x128xf32> to vector<1x8x128xf32>
      tpu.vector_store %arg7[%c0_153, %c0_154, %c0_155], %341 {strides = array<i32>} : memref<1x8x128xf32, #tpu.memory_space<vmem>>, vector<1x8x128xf32>,
    } else {
    }
    return
  }
  func.func @transform_0(%arg0: i32) -> (i32, i32, i32) {
    %c0_i32 = arith.constant 0 : i32
    %c0_i32_0 = arith.constant 0 : i32
    %c0_i32_1 = arith.constant 0 : i32
    return %arg0, %c0_i32, %c0_i32_0 : i32, i32, i32
  }
  func.func @transform_1(%arg0: i32) -> (i32, i32, i32) {
    %c0_i32 = arith.constant 0 : i32
    %c0_i32_0 = arith.constant 0 : i32
    %c0_i32_1 = arith.constant 0 : i32
    %c0_i32_2 = arith.constant 0 : i32
    return %c0_i32, %c0_i32_0, %c0_i32_1 : i32, i32, i32
  }
  func.func @transform_2(%arg0: i32) -> (i32, i32, i32) {
    %c0_i32 = arith.constant 0 : i32
    %c0_i32_0 = arith.constant 0 : i32
    %c0_i32_1 = arith.constant 0 : i32
    %c0_i32_2 = arith.constant 0 : i32
    return %c0_i32, %c0_i32_0, %c0_i32_1 : i32, i32, i32
  }
  func.func @transform_3(%arg0: i32) -> (i32, i32) {
    %c0_i32 = arith.constant 0 : i32
    %c0_i32_0 = arith.constant 0 : i32
    %c0_i32_1 = arith.constant 0 : i32
    return %c0_i32, %c0_i32_0 : i32, i32
  }
  func.func @transform_4(%arg0: i32) -> (i32, i32, i32) {
    %c0_i32 = arith.constant 0 : i32
    %c0_i32_0 = arith.constant 0 : i32
    %c0_i32_1 = arith.constant 0 : i32
    return %arg0, %c0_i32, %c0_i32_0 : i32, i32, i32
  }
  func.func @transform_5(%arg0: i32) -> (i32, i32, i32) {
    %c0_i32 = arith.constant 0 : i32
    %c0_i32_0 = arith.constant 0 : i32
    %c0_i32_1 = arith.constant 0 : i32
    %c0_i32_2 = arith.constant 0 : i32
    return %c0_i32, %c0_i32_0, %c0_i32_1 : i32, i32, i32
  }
  func.func @transform_6(%arg0: i32) -> (i32, i32, i32) {
    %c0_i32 = arith.constant 0 : i32
    %c0_i32_0 = arith.constant 0 : i32
    %c0_i32_1 = arith.constant 0 : i32
    %c0_i32_2 = arith.constant 0 : i32
    return %c0_i32, %c0_i32_0, %c0_i32_1 : i32, i32, i32
  }
}

</mosaic_0001>

<llo_original>
// kernel: lstm_lm_forward.3
$region0: #{lstm_lm_forward.3}
  #allocation0 [shape = 'u32[]', space=smem, size = 0x4, offset = 0x4, fixed_abs, tag = 'smem constant byte address 0x4 - core index']
  #allocation1 [shape = 'u32[144,128]{1,0:T(1,128)}', space=vmem, size = 0x12000, scoped, tag = 'internal scratch']
  #allocation2 [shape = 'f32[16,256]{1,0:T(8,128)}', space=vmem, size = 0x4000, scoped, tag = 'scratch operand']
  #allocation3 [shape = 'f32[16,1]{1,0:T(8,128)}', space=vmem, size = 0x2000, scoped, tag = 'scratch operand']
  #allocation4 [shape = 'f32[16,1]{1,0:T(8,128)}', space=vmem, size = 0x2000, scoped, tag = 'scratch operand']
  %s0 = inlined_call_operand.vmem [shape: bf16[16,128], index: 0, kind: input, shape index: {}]
  %s1 = inlined_call_operand.vmem [shape: bf16[128,256], index: 1, kind: input, shape index: {}]
  %s2 = inlined_call_operand.vmem [shape: f32[1,256], index: 2, kind: input, shape index: {}]
  %s3 = inlined_call_operand.vmem [shape: bf16[256,512], index: 3, kind: input, shape index: {}]
  %s4 = inlined_call_operand.hbm [shape: f32[16,512], index: 4, kind: output, shape index: {}]
  %s5 = sld [smem:[#allocation0]]
  $region34: #{lstm_lm_forward.3} parent=0
    _
  %s7 = ssub.s32 1, %s5
  %s8 = scalar_select 0, %s7, %s5
  $region1: #{lstm_lm_forward.3} parent=0
    #allocation5 [shape = 'u8[32768]{0}', space=vmem, size = 0x8000, scoped, tag = 'output window, operand 0, single buffered']
    #allocation6 [shape = 's32[1]{0}', space=sflag, size = 0x4, scoped, tag = 'scoped memory for lstm_lm_forward.3']
    %9 = vsyncpa [#allocation6], 0
    // Predicated region
    $region2: #{lstm_lm_forward.3} parent=1 // pred_check
      _
    $region3: #{lstm_lm_forward.3} parent=1 // pred_check_branch
      %11 = sbr.rel (0) target = $region5
    $region4: #{lstm_lm_forward.3} parent=1 // pred_region
      _
    $region5: #{lstm_lm_forward.3} parent=1 // pred_fallthru
      _
    // Predicated region
    $region6: #{lstm_lm_forward.3} parent=1 // pred_check
      _
    $region7: #{lstm_lm_forward.3} parent=1 // pred_check_branch
      %13 = sbr.rel (0) target = $region9
    $region8: #{lstm_lm_forward.3} parent=1 // pred_region
      _
    $region9: #{lstm_lm_forward.3} parent=1 // pred_fallthru
      _
    // Predicated region
    $region10: #{lstm_lm_forward.3} parent=1 // pred_check
      _
    $region11: #{lstm_lm_forward.3} parent=1 // pred_check_branch
      %15 = sbr.rel (0) target = $region13
    $region12: #{lstm_lm_forward.3} parent=1 // pred_region
      _
    $region13: #{lstm_lm_forward.3} parent=1 // pred_fallthru
      _
    // Predicated region
    $region14: #{lstm_lm_forward.3} parent=1 // pred_check
      _
    $region15: #{lstm_lm_forward.3} parent=1 // pred_check_branch
      %17 = sbr.rel (0) target = $region17
    $region16: #{lstm_lm_forward.3} parent=1 // pred_region
      _
    $region17: #{lstm_lm_forward.3} parent=1 // pred_fallthru
      _
    %p19 = scmp.eq.s32.totalorder 0, 0
    // Predicated region
    $region18: #{lstm_lm_forward.3} parent=1 // pred_check
      %p20 = pneg %p19
    $region19: #{lstm_lm_forward.3} parent=1 // pred_check_branch
      %22 = sbr.rel (%p20) target = $region21
    $region20: #{lstm_lm_forward.3} parent=1 // pred_region
      %v23 = vld [vmem:[%s0] sm:$0xf]
      %v24 = vld [vmem:[%s0 + $0x4] sm:$0xf]
      %v25 = vld [vmem:[%s1] sm:$0xff]
      %v26 = vld [vmem:[%s1 + $0x8] sm:$0xff]
      %v27 = vld [vmem:[%s1 + $0x10] sm:$0xff]
      %v28 = vld [vmem:[%s1 + $0x18] sm:$0xff]
      %v29 = vld [vmem:[%s1 + $0x20] sm:$0xff]
      %v30 = vld [vmem:[%s1 + $0x28] sm:$0xff]
      %v31 = vld [vmem:[%s1 + $0x30] sm:$0xff]
      %v32 = vld [vmem:[%s1 + $0x38] sm:$0xff]
      %v33 = vld [vmem:[%s1 + $0x40] sm:$0xff]
      %v34 = vld [vmem:[%s1 + $0x48] sm:$0xff]
      %v35 = vld [vmem:[%s1 + $0x50] sm:$0xff]
      %v36 = vld [vmem:[%s1 + $0x58] sm:$0xff]
      %v37 = vld [vmem:[%s1 + $0x60] sm:$0xff]
      %v38 = vld [vmem:[%s1 + $0x68] sm:$0xff]
      %v39 = vld [vmem:[%s1 + $0x70] sm:$0xff]
      %v40 = vld [vmem:[%s1 + $0x78] sm:$0xff]
      %v41 = vld [vmem:[%s2] sm:$0x3]
      %v43 = vlaneseq
      %v44 = vshrl.u32 %v43, 7
      %v45 = vsub.s32 0, %v44
      %v46 = vrot.slane %v41, %v45
      %v47 = vlaneseq
      %v48 = vshrl.u32 %v47, 7
      %v49 = vsub.s32 1, %v48
      %v50 = vrot.slane %v41, %v49
      %v55 = vunpack.c.l.b16 %v23
      %v56 = vunpack.c.l.b16 %v24
      %v57 = vpack.c.b16 %v56, %v55
      %v75 = vunpack.c.l.b16 %v25
      %v76 = vunpack.c.h.b16 %v25
      %v77 = vunpack.c.l.b16 %v26
      %v78 = vunpack.c.h.b16 %v26
      %v79 = vunpack.c.l.b16 %v27
      %v80 = vunpack.c.h.b16 %v27
      %v81 = vunpack.c.l.b16 %v28
      %v82 = vunpack.c.h.b16 %v28
      %v83 = vunpack.c.l.b16 %v29
      %v84 = vunpack.c.h.b16 %v29
      %v85 = vunpack.c.l.b16 %v30
      %v86 = vunpack.c.h.b16 %v30
      %v87 = vunpack.c.l.b16 %v31
      %v88 = vunpack.c.h.b16 %v31
      %v89 = vunpack.c.l.b16 %v32
      %v90 = vunpack.c.h.b16 %v32
      %v91 = vunpack.c.l.b16 %v33
      %v92 = vunpack.c.h.b16 %v33
      %v93 = vunpack.c.l.b16 %v34
      %v94 = vunpack.c.h.b16 %v34
      %v95 = vunpack.c.l.b16 %v35
      %v96 = vunpack.c.h.b16 %v35
      %v97 = vunpack.c.l.b16 %v36
      %v98 = vunpack.c.h.b16 %v36
      %v99 = vunpack.c.l.b16 %v37
      %v100 = vunpack.c.h.b16 %v37
      %v101 = vunpack.c.l.b16 %v38
      %v102 = vunpack.c.h.b16 %v38
      %v103 = vunpack.c.l.b16 %v39
      %v104 = vunpack.c.h.b16 %v39
      %v105 = vunpack.c.l.b16 %v40
      %v106 = vunpack.c.h.b16 %v40
      %v107 = vpack.c.b16 %v77, %v75
      %v108 = vpack.c.b16 %v78, %v76
      %v109 = vpack.c.b16 %v81, %v79
      %v110 = vpack.c.b16 %v82, %v80
      %v111 = vpack.c.b16 %v85, %v83
      %v112 = vpack.c.b16 %v86, %v84
      %v113 = vpack.c.b16 %v89, %v87
      %v114 = vpack.c.b16 %v90, %v88
      %v115 = vpack.c.b16 %v93, %v91
      %v116 = vpack.c.b16 %v94, %v92
      %v117 = vpack.c.b16 %v97, %v95
      %v118 = vpack.c.b16 %v98, %v96
      %v119 = vpack.c.b16 %v101, %v99
      %v120 = vpack.c.b16 %v102, %v100
      %v121 = vpack.c.b16 %v105, %v103
      %v122 = vpack.c.b16 %v106, %v104
      %139 = vmatprep.subr.bf16.mxu0 %v108
      %140 = vmatpush1.bf16.msra.mxu0 %v107
      %141 = vmatprep.subr.bf16.mxu0 %v110
      %142 = vmatpush1.bf16.msra.mxu0 %v109
      %143 = vmatprep.subr.bf16.mxu0 %v112
      %144 = vmatpush1.bf16.msra.mxu0 %v111
      %145 = vmatprep.subr.bf16.mxu0 %v114
      %146 = vmatpush1.bf16.msra.mxu0 %v113
      %147 = vmatprep.subr.bf16.mxu0 %v116
      %148 = vmatpush1.bf16.msra.mxu0 %v115
      %149 = vmatprep.subr.bf16.mxu0 %v118
      %150 = vmatpush1.bf16.msra.mxu0 %v117
      %151 = vmatprep.subr.bf16.mxu0 %v120
      %152 = vmatpush1.bf16.msra.mxu0 %v119
      %153 = vmatprep.subr.bf16.mxu0 %v122
      %154 = vmatpush1.bf16.msra.mxu0 %v121
      %155 = vmatprep.subr.bf16.mxu0 0
      %156 = vmatpush1.bf16.msra.mxu0 0
      %157 = vmatprep.subr.bf16.mxu0 0
      %158 = vmatpush1.bf16.msra.mxu0 0
      %159 = vmatprep.subr.bf16.mxu0 0
      %160 = vmatpush1.bf16.msra.mxu0 0
      %161 = vmatprep.subr.bf16.mxu0 0
      %162 = vmatpush1.bf16.msra.mxu0 0
      %163 = vmatprep.subr.bf16.mxu0 0
      %164 = vmatpush1.bf16.msra.mxu0 0
      %165 = vmatprep.subr.bf16.mxu0 0
      %166 = vmatpush1.bf16.msra.mxu0 0
      %167 = vmatprep.subr.bf16.mxu0 0
      %168 = vmatpush1.bf16.msra.mxu0 0
      %169 = vmatprep.subr.bf16.mxu0 0
      %170 = vmatpush1.bf16.msra.mxu0 0
      %171 = vmatprep.mubr.bf16.mxu0 0
      %172 = vmatmul.mubr.bf16.gmra.mrb[0].mxu0 %v57
      %v173 = vpop.f32.mrb[0].mxu0
      %v174 = vadd.f32 %v46, %v173
      %v175 = vpop.f32.mrb[0].mxu0
      %v176 = vadd.f32 %v50, %v175
      %v177 = vpop.f32.mrb[0].mxu0
      %v178 = vadd.f32 %v46, %v177
      %v179 = vpop.f32.mrb[0].mxu0
      %v180 = vadd.f32 %v50, %v179
      %181 = vdwg.mxu0
      %v182 = vmax.f32 %v174, 0.0
      %v183 = vmax.f32 %v176, 0.0
      %v184 = vmax.f32 %v178, 0.0
      %v185 = vmax.f32 %v180, 0.0
      %186 = vst [vmem:[#allocation2] sm:$0xff] %v182
      %187 = vst [vmem:[#allocation2 + $0x8] sm:$0xff] %v183
      %188 = vst [vmem:[#allocation2 + $0x10] sm:$0xff] %v184
      %189 = vst [vmem:[#allocation2 + $0x18] sm:$0xff] %v185
      %vm190 = vcmask 7168
      %191 = vst.msk [vmem:[#allocation3] sm:$0xff] %vm190, -inf
      %192 = vst.msk [vmem:[#allocation3 + $0x8] sm:$0xff] %vm190, -inf
      %193 = vst.msk [vmem:[#allocation4] sm:$0xff] %vm190, 0.0
      %194 = vst.msk [vmem:[#allocation4 + $0x8] sm:$0xff] %vm190, 0.0
    $region21: #{lstm_lm_forward.3} parent=1 // pred_fallthru
      _
    %v195 = vld [vmem:[#allocation2] sm:$0xff]
    %v196 = vld [vmem:[#allocation2 + $0x8] sm:$0xff]
    %v197 = vld [vmem:[#allocation2 + $0x10] sm:$0xff]
    %v198 = vld [vmem:[#allocation2 + $0x18] sm:$0xff]
    %v199 = vpack.c.bf16 %v197, %v195
    %v200 = vpack.c.bf16 %v198, %v196
    %v201 = vld [vmem:[%s3] sm:$0xff]
    %v202 = vld [vmem:[%s3 + $0x8] sm:$0xff]
    %v203 = vld [vmem:[%s3 + $0x10] sm:$0xff]
    %v204 = vld [vmem:[%s3 + $0x18] sm:$0xff]
    %v205 = vld [vmem:[%s3 + $0x20] sm:$0xff]
    %v206 = vld [vmem:[%s3 + $0x28] sm:$0xff]
    %v207 = vld [vmem:[%s3 + $0x30] sm:$0xff]
    %v208 = vld [vmem:[%s3 + $0x38] sm:$0xff]
    %v209 = vld [vmem:[%s3 + $0x40] sm:$0xff]
    %v210 = vld [vmem:[%s3 + $0x48] sm:$0xff]
    %v211 = vld [vmem:[%s3 + $0x50] sm:$0xff]
    %v212 = vld [vmem:[%s3 + $0x58] sm:$0xff]
    %v213 = vld [vmem:[%s3 + $0x60] sm:$0xff]
    %v214 = vld [vmem:[%s3 + $0x68] sm:$0xff]
    %v215 = vld [vmem:[%s3 + $0x70] sm:$0xff]
    %v216 = vld [vmem:[%s3 + $0x78] sm:$0xff]
    %v217 = vld [vmem:[%s3 + $0x80] sm:$0xff]
    %v218 = vld [vmem:[%s3 + $0x88] sm:$0xff]
    %v219 = vld [vmem:[%s3 + $0x90] sm:$0xff]
    %v220 = vld [vmem:[%s3 + $0x98] sm:$0xff]
    %v221 = vld [vmem:[%s3 + $0xa0] sm:$0xff]
    %v222 = vld [vmem:[%s3 + $0xa8] sm:$0xff]
    %v223 = vld [vmem:[%s3 + $0xb0] sm:$0xff]
    %v224 = vld [vmem:[%s3 + $0xb8] sm:$0xff]
    %v225 = vld [vmem:[%s3 + $0xc0] sm:$0xff]
    %v226 = vld [vmem:[%s3 + $0xc8] sm:$0xff]
    %v227 = vld [vmem:[%s3 + $0xd0] sm:$0xff]
    %v228 = vld [vmem:[%s3 + $0xd8] sm:$0xff]
    %v229 = vld [vmem:[%s3 + $0xe0] sm:$0xff]
    %v230 = vld [vmem:[%s3 + $0xe8] sm:$0xff]
    %v231 = vld [vmem:[%s3 + $0xf0] sm:$0xff]
    %v232 = vld [vmem:[%s3 + $0xf8] sm:$0xff]
    %v233 = vld [vmem:[%s3 + $0x100] sm:$0xff]
    %v234 = vld [vmem:[%s3 + $0x108] sm:$0xff]
    %v235 = vld [vmem:[%s3 + $0x110] sm:$0xff]
    %v236 = vld [vmem:[%s3 + $0x118] sm:$0xff]
    %v237 = vld [vmem:[%s3 + $0x120] sm:$0xff]
    %v238 = vld [vmem:[%s3 + $0x128] sm:$0xff]
    %v239 = vld [vmem:[%s3 + $0x130] sm:$0xff]
    %v240 = vld [vmem:[%s3 + $0x138] sm:$0xff]
    %v241 = vld [vmem:[%s3 + $0x140] sm:$0xff]
    %v242 = vld [vmem:[%s3 + $0x148] sm:$0xff]
    %v243 = vld [vmem:[%s3 + $0x150] sm:$0xff]
    %v244 = vld [vmem:[%s3 + $0x158] sm:$0xff]
    %v245 = vld [vmem:[%s3 + $0x160] sm:$0xff]
    %v246 = vld [vmem:[%s3 + $0x168] sm:$0xff]
    %v247 = vld [vmem:[%s3 + $0x170] sm:$0xff]
    %v248 = vld [vmem:[%s3 + $0x178] sm:$0xff]
    %v249 = vld [vmem:[%s3 + $0x180] sm:$0xff]
    %v250 = vld [vmem:[%s3 + $0x188] sm:$0xff]
    %v251 = vld [vmem:[%s3 + $0x190] sm:$0xff]
    %v252 = vld [vmem:[%s3 + $0x198] sm:$0xff]
    %v253 = vld [vmem:[%s3 + $0x1a0] sm:$0xff]
    %v254 = vld [vmem:[%s3 + $0x1a8] sm:$0xff]
    %v255 = vld [vmem:[%s3 + $0x1b0] sm:$0xff]
    %v256 = vld [vmem:[%s3 + $0x1b8] sm:$0xff]
    %v257 = vld [vmem:[%s3 + $0x1c0] sm:$0xff]
    %v258 = vld [vmem:[%s3 + $0x1c8] sm:$0xff]
    %v259 = vld [vmem:[%s3 + $0x1d0] sm:$0xff]
    %v260 = vld [vmem:[%s3 + $0x1d8] sm:$0xff]
    %v261 = vld [vmem:[%s3 + $0x1e0] sm:$0xff]
    %v262 = vld [vmem:[%s3 + $0x1e8] sm:$0xff]
    %v263 = vld [vmem:[%s3 + $0x1f0] sm:$0xff]
    %v264 = vld [vmem:[%s3 + $0x1f8] sm:$0xff]
    %v329 = vunpack.c.l.b16 %v201
    %v330 = vunpack.c.h.b16 %v201
    %v331 = vunpack.c.l.b16 %v202
    %v332 = vunpack.c.h.b16 %v202
    %v333 = vunpack.c.l.b16 %v203
    %v334 = vunpack.c.h.b16 %v203
    %v335 = vunpack.c.l.b16 %v204
    %v336 = vunpack.c.h.b16 %v204
    %v337 = vunpack.c.l.b16 %v205
    %v338 = vunpack.c.h.b16 %v205
    %v339 = vunpack.c.l.b16 %v206
    %v340 = vunpack.c.h.b16 %v206
    %v341 = vunpack.c.l.b16 %v207
    %v342 = vunpack.c.h.b16 %v207
    %v343 = vunpack.c.l.b16 %v208
    %v344 = vunpack.c.h.b16 %v208
    %v345 = vunpack.c.l.b16 %v209
    %v346 = vunpack.c.h.b16 %v209
    %v347 = vunpack.c.l.b16 %v210
    %v348 = vunpack.c.h.b16 %v210
    %v349 = vunpack.c.l.b16 %v211
    %v350 = vunpack.c.h.b16 %v211
    %v351 = vunpack.c.l.b16 %v212
    %v352 = vunpack.c.h.b16 %v212
    %v353 = vunpack.c.l.b16 %v213
    %v354 = vunpack.c.h.b16 %v213
    %v355 = vunpack.c.l.b16 %v214
    %v356 = vunpack.c.h.b16 %v214
    %v357 = vunpack.c.l.b16 %v215
    %v358 = vunpack.c.h.b16 %v215
    %v359 = vunpack.c.l.b16 %v216
    %v360 = vunpack.c.h.b16 %v216
    %v361 = vunpack.c.l.b16 %v217
    %v362 = vunpack.c.h.b16 %v217
    %v363 = vunpack.c.l.b16 %v218
    %v364 = vunpack.c.h.b16 %v218
    %v365 = vunpack.c.l.b16 %v219
    %v366 = vunpack.c.h.b16 %v219
    %v367 = vunpack.c.l.b16 %v220
    %v368 = vunpack.c.h.b16 %v220
    %v369 = vunpack.c.l.b16 %v221
    %v370 = vunpack.c.h.b16 %v221
    %v371 = vunpack.c.l.b16 %v222
    %v372 = vunpack.c.h.b16 %v222
    %v373 = vunpack.c.l.b16 %v223
    %v374 = vunpack.c.h.b16 %v223
    %v375 = vunpack.c.l.b16 %v224
    %v376 = vunpack.c.h.b16 %v224
    %v377 = vunpack.c.l.b16 %v225
    %v378 = vunpack.c.h.b16 %v225
    %v379 = vunpack.c.l.b16 %v226
    %v380 = vunpack.c.h.b16 %v226
    %v381 = vunpack.c.l.b16 %v227
    %v382 = vunpack.c.h.b16 %v227
    %v383 = vunpack.c.l.b16 %v228
    %v384 = vunpack.c.h.b16 %v228
    %v385 = vunpack.c.l.b16 %v229
    %v386 = vunpack.c.h.b16 %v229
    %v387 = vunpack.c.l.b16 %v230
    %v388 = vunpack.c.h.b16 %v230
    %v389 = vunpack.c.l.b16 %v231
    %v390 = vunpack.c.h.b16 %v231
    %v391 = vunpack.c.l.b16 %v232
    %v392 = vunpack.c.h.b16 %v232
    %v393 = vunpack.c.l.b16 %v233
    %v394 = vunpack.c.h.b16 %v233
    %v395 = vunpack.c.l.b16 %v234
    %v396 = vunpack.c.h.b16 %v234
    %v397 = vunpack.c.l.b16 %v235
    %v398 = vunpack.c.h.b16 %v235
    %v399 = vunpack.c.l.b16 %v236
    %v400 = vunpack.c.h.b16 %v236
    %v401 = vunpack.c.l.b16 %v237
    %v402 = vunpack.c.h.b16 %v237
    %v403 = vunpack.c.l.b16 %v238
    %v404 = vunpack.c.h.b16 %v238
    %v405 = vunpack.c.l.b16 %v239
    %v406 = vunpack.c.h.b16 %v239
    %v407 = vunpack.c.l.b16 %v240
    %v408 = vunpack.c.h.b16 %v240
    %v409 = vunpack.c.l.b16 %v241
    %v410 = vunpack.c.h.b16 %v241
    %v411 = vunpack.c.l.b16 %v242
    %v412 = vunpack.c.h.b16 %v242
    %v413 = vunpack.c.l.b16 %v243
    %v414 = vunpack.c.h.b16 %v243
    %v415 = vunpack.c.l.b16 %v244
    %v416 = vunpack.c.h.b16 %v244
    %v417 = vunpack.c.l.b16 %v245
    %v418 = vunpack.c.h.b16 %v245
    %v419 = vunpack.c.l.b16 %v246
    %v420 = vunpack.c.h.b16 %v246
    %v421 = vunpack.c.l.b16 %v247
    %v422 = vunpack.c.h.b16 %v247
    %v423 = vunpack.c.l.b16 %v248
    %v424 = vunpack.c.h.b16 %v248
    %v425 = vunpack.c.l.b16 %v249
    %v426 = vunpack.c.h.b16 %v249
    %v427 = vunpack.c.l.b16 %v250
    %v428 = vunpack.c.h.b16 %v250
    %v429 = vunpack.c.l.b16 %v251
    %v430 = vunpack.c.h.b16 %v251
    %v431 = vunpack.c.l.b16 %v252
    %v432 = vunpack.c.h.b16 %v252
    %v433 = vunpack.c.l.b16 %v253
    %v434 = vunpack.c.h.b16 %v253
    %v435 = vunpack.c.l.b16 %v254
    %v436 = vunpack.c.h.b16 %v254
    %v437 = vunpack.c.l.b16 %v255
    %v438 = vunpack.c.h.b16 %v255
    %v439 = vunpack.c.l.b16 %v256
    %v440 = vunpack.c.h.b16 %v256
    %v441 = vunpack.c.l.b16 %v257
    %v442 = vunpack.c.h.b16 %v257
    %v443 = vunpack.c.l.b16 %v258
    %v444 = vunpack.c.h.b16 %v258
    %v445 = vunpack.c.l.b16 %v259
    %v446 = vunpack.c.h.b16 %v259
    %v447 = vunpack.c.l.b16 %v260
    %v448 = vunpack.c.h.b16 %v260
    %v449 = vunpack.c.l.b16 %v261
    %v450 = vunpack.c.h.b16 %v261
    %v451 = vunpack.c.l.b16 %v262
    %v452 = vunpack.c.h.b16 %v262
    %v453 = vunpack.c.l.b16 %v263
    %v454 = vunpack.c.h.b16 %v263
    %v455 = vunpack.c.l.b16 %v264
    %v456 = vunpack.c.h.b16 %v264
    %v457 = vpack.c.b16 %v333, %v329
    %v458 = vpack.c.b16 %v334, %v330
    %v459 = vpack.c.b16 %v335, %v331
    %v460 = vpack.c.b16 %v336, %v332
    %v461 = vpack.c.b16 %v341, %v337
    %v462 = vpack.c.b16 %v342, %v338
    %v463 = vpack.c.b16 %v343, %v339
    %v464 = vpack.c.b16 %v344, %v340
    %v465 = vpack.c.b16 %v349, %v345
    %v466 = vpack.c.b16 %v350, %v346
    %v467 = vpack.c.b16 %v351, %v347
    %v468 = vpack.c.b16 %v352, %v348
    %v469 = vpack.c.b16 %v357, %v353
    %v470 = vpack.c.b16 %v358, %v354
    %v471 = vpack.c.b16 %v359, %v355
    %v472 = vpack.c.b16 %v360, %v356
    %v473 = vpack.c.b16 %v365, %v361
    %v474 = vpack.c.b16 %v366, %v362
    %v475 = vpack.c.b16 %v367, %v363
    %v476 = vpack.c.b16 %v368, %v364
    %v477 = vpack.c.b16 %v373, %v369
    %v478 = vpack.c.b16 %v374, %v370
    %v479 = vpack.c.b16 %v375, %v371
    %v480 = vpack.c.b16 %v376, %v372
    %v481 = vpack.c.b16 %v381, %v377
    %v482 = vpack.c.b16 %v382, %v378
    %v483 = vpack.c.b16 %v383, %v379
    %v484 = vpack.c.b16 %v384, %v380
    %v485 = vpack.c.b16 %v389, %v385
    %v486 = vpack.c.b16 %v390, %v386
    %v487 = vpack.c.b16 %v391, %v387
    %v488 = vpack.c.b16 %v392, %v388
    %v489 = vpack.c.b16 %v397, %v393
    %v490 = vpack.c.b16 %v398, %v394
    %v491 = vpack.c.b16 %v399, %v395
    %v492 = vpack.c.b16 %v400, %v396
    %v493 = vpack.c.b16 %v405, %v401
    %v494 = vpack.c.b16 %v406, %v402
    %v495 = vpack.c.b16 %v407, %v403
    %v496 = vpack.c.b16 %v408, %v404
    %v497 = vpack.c.b16 %v413, %v409
    %v498 = vpack.c.b16 %v414, %v410
    %v499 = vpack.c.b16 %v415, %v411
    %v500 = vpack.c.b16 %v416, %v412
    %v501 = vpack.c.b16 %v421, %v417
    %v502 = vpack.c.b16 %v422, %v418
    %v503 = vpack.c.b16 %v423, %v419
    %v504 = vpack.c.b16 %v424, %v420
    %v505 = vpack.c.b16 %v429, %v425
    %v506 = vpack.c.b16 %v430, %v426
    %v507 = vpack.c.b16 %v431, %v427
    %v508 = vpack.c.b16 %v432, %v428
    %v509 = vpack.c.b16 %v437, %v433
    %v510 = vpack.c.b16 %v438, %v434
    %v511 = vpack.c.b16 %v439, %v435
    %v512 = vpack.c.b16 %v440, %v436
    %v513 = vpack.c.b16 %v445, %v441
    %v514 = vpack.c.b16 %v446, %v442
    %v515 = vpack.c.b16 %v447, %v443
    %v516 = vpack.c.b16 %v448, %v444
    %v517 = vpack.c.b16 %v453, %v449
    %v518 = vpack.c.b16 %v454, %v450
    %v519 = vpack.c.b16 %v455, %v451
    %v520 = vpack.c.b16 %v456, %v452
    %585 = vmatprep.subr.bf16.mxu0 %v458
    %586 = vmatpush1.bf16.msra.mxu0 %v457
    %587 = vmatprep.subr.bf16.mxu0 %v462
    %588 = vmatpush1.bf16.msra.mxu0 %v461
    %589 = vmatprep.subr.bf16.mxu0 %v466
    %590 = vmatpush1.bf16.msra.mxu0 %v465
    %591 = vmatprep.subr.bf16.mxu0 %v470
    %592 = vmatpush1.bf16.msra.mxu0 %v469
    %593 = vmatprep.subr.bf16.mxu0 %v474
    %594 = vmatpush1.bf16.msra.mxu0 %v473
    %595 = vmatprep.subr.bf16.mxu0 %v478
    %596 = vmatpush1.bf16.msra.mxu0 %v477
    %597 = vmatprep.subr.bf16.mxu0 %v482
    %598 = vmatpush1.bf16.msra.mxu0 %v481
    %599 = vmatprep.subr.bf16.mxu0 %v486
    %600 = vmatpush1.bf16.msra.mxu0 %v485
    %601 = vmatprep.subr.bf16.mxu0 %v490
    %602 = vmatpush1.bf16.msra.mxu0 %v489
    %603 = vmatprep.subr.bf16.mxu0 %v494
    %604 = vmatpush1.bf16.msra.mxu0 %v493
    %605 = vmatprep.subr.bf16.mxu0 %v498
    %606 = vmatpush1.bf16.msra.mxu0 %v497
    %607 = vmatprep.subr.bf16.mxu0 %v502
    %608 = vmatpush1.bf16.msra.mxu0 %v501
    %609 = vmatprep.subr.bf16.mxu0 %v506
    %610 = vmatpush1.bf16.msra.mxu0 %v505
    %611 = vmatprep.subr.bf16.mxu0 %v510
    %612 = vmatpush1.bf16.msra.mxu0 %v509
    %613 = vmatprep.subr.bf16.mxu0 %v514
    %614 = vmatpush1.bf16.msra.mxu0 %v513
    %615 = vmatprep.subr.bf16.mxu0 %v518
    %616 = vmatpush1.bf16.msra.mxu0 %v517
    %617 = vmatprep.mubr.bf16.mxu0 %v200
    %618 = vmatmul.mubr.bf16.gmra.mrb[0].mxu0 %v199
    %v619 = vpop.f32.mrb[0].mxu0
    %v620 = vadd.f32 0.0, %v619
    %v621 = vpop.f32.mrb[0].mxu0
    %v622 = vadd.f32 0.0, %v621
    %v623 = vpop.f32.mrb[0].mxu0
    %v624 = vadd.f32 0.0, %v623
    %v625 = vpop.f32.mrb[0].mxu0
    %v626 = vadd.f32 0.0, %v625
    %627 = vdwg.mxu0
    %628 = vmatprep.subr.bf16.mxu0 %v460
    %629 = vmatpush1.bf16.msra.mxu0 %v459
    %630 = vmatprep.subr.bf16.mxu0 %v464
    %631 = vmatpush1.bf16.msra.mxu0 %v463
    %632 = vmatprep.subr.bf16.mxu0 %v468
    %633 = vmatpush1.bf16.msra.mxu0 %v467
    %634 = vmatprep.subr.bf16.mxu0 %v472
    %635 = vmatpush1.bf16.msra.mxu0 %v471
    %636 = vmatprep.subr.bf16.mxu0 %v476
    %637 = vmatpush1.bf16.msra.mxu0 %v475
    %638 = vmatprep.subr.bf16.mxu0 %v480
    %639 = vmatpush1.bf16.msra.mxu0 %v479
    %640 = vmatprep.subr.bf16.mxu0 %v484
    %641 = vmatpush1.bf16.msra.mxu0 %v483
    %642 = vmatprep.subr.bf16.mxu0 %v488
    %643 = vmatpush1.bf16.msra.mxu0 %v487
    %644 = vmatprep.subr.bf16.mxu0 %v492
    %645 = vmatpush1.bf16.msra.mxu0 %v491
    %646 = vmatprep.subr.bf16.mxu0 %v496
    %647 = vmatpush1.bf16.msra.mxu0 %v495
    %648 = vmatprep.subr.bf16.mxu0 %v500
    %649 = vmatpush1.bf16.msra.mxu0 %v499
    %650 = vmatprep.subr.bf16.mxu0 %v504
    %651 = vmatpush1.bf16.msra.mxu0 %v503
    %652 = vmatprep.subr.bf16.mxu0 %v508
    %653 = vmatpush1.bf16.msra.mxu0 %v507
    %654 = vmatprep.subr.bf16.mxu0 %v512
    %655 = vmatpush1.bf16.msra.mxu0 %v511
    %656 = vmatprep.subr.bf16.mxu0 %v516
    %657 = vmatpush1.bf16.msra.mxu0 %v515
    %658 = vmatprep.subr.bf16.mxu0 %v520
    %659 = vmatpush1.bf16.msra.mxu0 %v519
    %660 = vmatprep.mubr.bf16.mxu0 %v200
    %661 = vmatmul.mubr.bf16.gmra.mrb[0].mxu0 %v199
    %v662 = vpop.f32.mrb[0].mxu0
    %v663 = vadd.f32 0.0, %v662
    %v664 = vpop.f32.mrb[0].mxu0
    %v665 = vadd.f32 0.0, %v664
    %v666 = vpop.f32.mrb[0].mxu0
    %v667 = vadd.f32 0.0, %v666
    %v668 = vpop.f32.mrb[0].mxu0
    %v669 = vadd.f32 0.0, %v668
    %670 = vdwg.mxu0
    %s671 = smul.u32 0, 512
    %s672 = sshra.s32 %s671, 7
    %s673 = sand.u32 %s671, 127
    %s674 = smul.addr %s672, 8
    %s675 = scalar_lea.vmem [#allocation5], %s674
    %676 = vst [vmem:[%s675] sm:$0xff] %v620
    %677 = vst [vmem:[%s675 + $0x8] sm:$0xff] %v622
    %678 = vst [vmem:[%s675 + $0x10] sm:$0xff] %v663
    %679 = vst [vmem:[%s675 + $0x18] sm:$0xff] %v665
    %680 = vst [vmem:[%s675 + $0x20] sm:$0xff] %v624
    %681 = vst [vmem:[%s675 + $0x28] sm:$0xff] %v626
    %682 = vst [vmem:[%s675 + $0x30] sm:$0xff] %v667
    %683 = vst [vmem:[%s675 + $0x38] sm:$0xff] %v669
    %v684 = vld [vmem:[#allocation3] sm:$0xff]
    %v685 = vld [vmem:[#allocation3 + $0x8] sm:$0xff]
    %v686 = vmax.f32 %v620, %v663
    %v687 = vmax.f32 %v622, %v665
    %v688 = vmax.f32 %v686, %v687
    %689 = vmax.xlane.f32.xlu0 %v688
    %v690 = vpop.xlane.xlu0 %689
    %v691 = vmax.f32 %v624, %v667
    %v692 = vmax.f32 %v626, %v669
    %v693 = vmax.f32 %v691, %v692
    %694 = vmax.xlane.f32.xlu0 %v693
    %v695 = vpop.xlane.xlu0 %694
    %v696 = vmax.f32 %v684, %v690
    %v697 = vmax.f32 %v685, %v695
    %v698 = vld [vmem:[#allocation4] sm:$0xff]
    %v699 = vld [vmem:[#allocation4 + $0x8] sm:$0xff]
    %v700 = vsub.f32 %v684, %v696
    %v701 = vsub.f32 %v685, %v697
    %v702 = vmul.f32 %v700, 1.442695
    %v703 = vpow.pop %v702
    %v704 = vmul.f32 %v701, 1.442695
    %v705 = vpow.pop %v704
    %v706 = vmul.f32 %v698, %v703
    %v707 = vmul.f32 %v699, %v705
    %709 = vset.pattern.permute.xlu0 0
    %710 = vperm.xlu0 %709, %v696
    %v711 = vpop.permute.xlu0 %710
    %714 = vset.pattern.permute.xlu0 0
    %715 = vperm.xlu0 %714, %v697
    %v716 = vpop.permute.xlu0 %715
    %v718 = vsub.f32 %v620, %v711
    %v719 = vsub.f32 %v622, %v711
    %v720 = vsub.f32 %v663, %v711
    %v721 = vsub.f32 %v665, %v711
    %v722 = vsub.f32 %v624, %v716
    %v723 = vsub.f32 %v626, %v716
    %v724 = vsub.f32 %v667, %v716
    %v725 = vsub.f32 %v669, %v716
    %v726 = vmul.f32 %v718, 1.442695
    %v727 = vpow.pop %v726
    %v728 = vmul.f32 %v719, 1.442695
    %v729 = vpow.pop %v728
    %v730 = vmul.f32 %v720, 1.442695
    %v731 = vpow.pop %v730
    %v732 = vmul.f32 %v721, 1.442695
    %v733 = vpow.pop %v732
    %v734 = vmul.f32 %v722, 1.442695
    %v735 = vpow.pop %v734
    %v736 = vmul.f32 %v723, 1.442695
    %v737 = vpow.pop %v736
    %v738 = vmul.f32 %v724, 1.442695
    %v739 = vpow.pop %v738
    %v740 = vmul.f32 %v725, 1.442695
    %v741 = vpow.pop %v740
    %v742 = vadd.f32 %v727, %v729
    %v743 = vadd.f32 %v742, %v731
    %v744 = vadd.f32 %v743, %v733
    %745 = vadd.xlane.f32.xlu0 %v744
    %v746 = vpop.xlane.xlu0 %745
    %v747 = vadd.f32 %v735, %v737
    %v748 = vadd.f32 %v747, %v739
    %v749 = vadd.f32 %v748, %v741
    %750 = vadd.xlane.f32.xlu0 %v749
    %v751 = vpop.xlane.xlu0 %750
    %v752 = vadd.f32 %v706, %v746
    %v753 = vadd.f32 %v707, %v751
    %vm754 = vcmask 7168
    %755 = vst.msk [vmem:[#allocation4] sm:$0xff] %vm754, %v752
    %756 = vst.msk [vmem:[#allocation4 + $0x8] sm:$0xff] %vm754, %v753
    %757 = vst.msk [vmem:[#allocation3] sm:$0xff] %vm754, %v696
    %758 = vst.msk [vmem:[#allocation3 + $0x8] sm:$0xff] %vm754, %v697
    // Predicated region
    $region22: #{lstm_lm_forward.3} parent=1 // pred_check
      %p759 = pneg %p19
    $region23: #{lstm_lm_forward.3} parent=1 // pred_check_branch
      %761 = sbr.rel (%p759) target = $region25
    $region24: #{lstm_lm_forward.3} parent=1 // pred_region
      %v762 = vld [vmem:[#allocation3] sm:$0xff]
      %v763 = vld [vmem:[#allocation3 + $0x8] sm:$0xff]
      %v764 = vld [vmem:[#allocation4] sm:$0xff]
      %v765 = vld [vmem:[#allocation4 + $0x8] sm:$0xff]
      %v766 = vlog2.pop %v764
      %v767 = vmul.f32 %v766, 0.6931472
      %v768 = vlog2.pop %v765
      %v769 = vmul.f32 %v768, 0.6931472
      %v770 = vadd.f32 %v762, %v767
      %v771 = vadd.f32 %v763, %v769
      %v772 = vld [vmem:[#allocation5] sm:$0xff]
      %v773 = vld [vmem:[#allocation5 + $0x8] sm:$0xff]
      %v774 = vld [vmem:[#allocation5 + $0x10] sm:$0xff]
      %v775 = vld [vmem:[#allocation5 + $0x18] sm:$0xff]
      %v776 = vld [vmem:[#allocation5 + $0x20] sm:$0xff]
      %v777 = vld [vmem:[#allocation5 + $0x28] sm:$0xff]
      %v778 = vld [vmem:[#allocation5 + $0x30] sm:$0xff]
      %v779 = vld [vmem:[#allocation5 + $0x38] sm:$0xff]
      %781 = vset.pattern.permute.xlu0 0
      %782 = vperm.xlu0 %781, %v770
      %v783 = vpop.permute.xlu0 %782
      %786 = vset.pattern.permute.xlu0 0
      %787 = vperm.xlu0 %786, %v771
      %v788 = vpop.permute.xlu0 %787
      %v790 = vsub.f32 %v772, %v783
      %v791 = vsub.f32 %v773, %v783
      %v792 = vsub.f32 %v774, %v783
      %v793 = vsub.f32 %v775, %v783
      %v794 = vsub.f32 %v776, %v788
      %v795 = vsub.f32 %v777, %v788
      %v796 = vsub.f32 %v778, %v788
      %v797 = vsub.f32 %v779, %v788
      %798 = vst [vmem:[#allocation5] sm:$0xff] %v790
      %799 = vst [vmem:[#allocation5 + $0x8] sm:$0xff] %v791
      %800 = vst [vmem:[#allocation5 + $0x10] sm:$0xff] %v792
      %801 = vst [vmem:[#allocation5 + $0x18] sm:$0xff] %v793
      %802 = vst [vmem:[#allocation5 + $0x20] sm:$0xff] %v794
      %803 = vst [vmem:[#allocation5 + $0x28] sm:$0xff] %v795
      %804 = vst [vmem:[#allocation5 + $0x30] sm:$0xff] %v796
      %805 = vst [vmem:[#allocation5 + $0x38] sm:$0xff] %v797
    $region25: #{lstm_lm_forward.3} parent=1 // pred_fallthru
      _
    // Predicated region
    $region26: #{lstm_lm_forward.3} parent=1 // pred_check
      _
    $region27: #{lstm_lm_forward.3} parent=1 // pred_check_branch
      %807 = sbr.rel (0) target = $region29
    $region28: #{lstm_lm_forward.3} parent=1 // pred_region
      %s809 = ssub.s32 1024, 1024
      %810 = vsyncadd [#allocation6], %s809
      %s811 = sshll.u32 [#allocation5], 4
      %s812 = int_to_ptr.vmem [resolvable:$true] %s811
      %817 = dma.vmem_to_hbm [thread:$0]  %s812, 1024, %s4, [#allocation6], 512, 512, 32
    $region29: #{lstm_lm_forward.3} parent=1 // pred_fallthru
      _
    // Predicated region
    $region30: #{lstm_lm_forward.3} parent=1 // pred_check
      _
    $region31: #{lstm_lm_forward.3} parent=1 // pred_check_branch
      %819 = sbr.rel (0) target = $region33
    $region32: #{lstm_lm_forward.3} parent=1 // pred_region
      %820 = dma.done [#allocation6], 1024
    $region33: #{lstm_lm_forward.3} parent=1 // pred_fallthru
      _
    %821 = vsyncpa [#allocation6], 1

// kernel: lstm_lm_forward.2
$region0: #{lstm_lm_forward.2}
  #allocation0 [shape = 'u32[]', space=smem, size = 0x4, offset = 0x4, fixed_abs, tag = 'smem constant byte address 0x4 - core index']
  #allocation1 [shape = 'u32[144,128]{1,0:T(1,128)}', space=vmem, size = 0x12000, scoped, tag = 'internal scratch']
  #allocation2 [shape = 'f32[8,128]{1,0:T(8,128)}', space=vmem, size = 0x1000, scoped, tag = 'scratch operand']
  #allocation3 [shape = 'f32[8,128]{1,0:T(8,128)}', space=vmem, size = 0x1000, scoped, tag = 'scratch operand']
  %s0 = inlined_call_operand.vmem [shape: f32[8,8,512], index: 0, kind: input, shape index: {}]
  %s1 = inlined_call_operand.vmem [shape: f32[1,8,128], index: 1, kind: input, shape index: {}]
  %s2 = inlined_call_operand.vmem [shape: f32[1,8,128], index: 2, kind: input, shape index: {}]
  %s3 = inlined_call_operand.vmem [shape: bf16[128,512], index: 3, kind: input, shape index: {}]
  %s4 = inlined_call_operand.vmem [shape: bf16[8,8,128], index: 4, kind: output, shape index: {0}]
  %s5 = inlined_call_operand.vmem [shape: f32[1,8,128], index: 5, kind: output, shape index: {1}]
  %s6 = inlined_call_operand.vmem [shape: f32[1,8,128], index: 6, kind: output, shape index: {2}]
  %7 = xla_tuple %s4, %s5, %s6
  %s8 = sld [smem:[#allocation0]]
  $region50: #{lstm_lm_forward.2} parent=0
    _
  %s10 = ssub.s32 1, %s8
  %s11 = scalar_select 0, %s10, %s8
  // Predicated region
  $region2: #{lstm_lm_forward.2} parent=0 // pred_check
    _
  $region3: #{lstm_lm_forward.2} parent=0 // pred_check_branch
    %13 = sbr.rel (0) target = $region5
  $region4: #{lstm_lm_forward.2} parent=0 // pred_region
    _
  $region5: #{lstm_lm_forward.2} parent=0 // pred_fallthru
    _
  // Predicated region
  $region6: #{lstm_lm_forward.2} parent=0 // pred_check
    _
  $region7: #{lstm_lm_forward.2} parent=0 // pred_check_branch
    %15 = sbr.rel (0) target = $region9
  $region8: #{lstm_lm_forward.2} parent=0 // pred_region
    _
  $region9: #{lstm_lm_forward.2} parent=0 // pred_fallthru
    _
  // Predicated region
  $region10: #{lstm_lm_forward.2} parent=0 // pred_check
    _
  $region11: #{lstm_lm_forward.2} parent=0 // pred_check_branch
    %17 = sbr.rel (0) target = $region13
  $region12: #{lstm_lm_forward.2} parent=0 // pred_region
    _
  $region13: #{lstm_lm_forward.2} parent=0 // pred_fallthru
    _
  // Predicated region
  $region14: #{lstm_lm_forward.2} parent=0 // pred_check
    _
  $region15: #{lstm_lm_forward.2} parent=0 // pred_check_branch
    %19 = sbr.rel (0) target = $region17
  $region16: #{lstm_lm_forward.2} parent=0 // pred_region
    _
  $region17: #{lstm_lm_forward.2} parent=0 // pred_fallthru
    _
  %p21 = scmp.eq.s32.totalorder 0, 0
  // Predicated region
  $region18: #{lstm_lm_forward.2} parent=0 // pred_check
    %p22 = pneg %p21
  $region19: #{lstm_lm_forward.2} parent=0 // pred_check_branch
    %24 = sbr.rel (%p22) target = $region21
  $region20: #{lstm_lm_forward.2} parent=0 // pred_region
    %v25 = vld [vmem:[%s1] sm:$0xff]
    %26 = vst [vmem:[#allocation2] sm:$0xff] %v25
    %v27 = vld [vmem:[%s2] sm:$0xff]
    %28 = vst [vmem:[#allocation3] sm:$0xff] %v27
  $region21: #{lstm_lm_forward.2} parent=0 // pred_fallthru
    _
  %v29 = vld [vmem:[%s0] sm:$0xff]
  %v30 = vld [vmem:[%s0 + $0x8] sm:$0xff]
  %v31 = vld [vmem:[%s0 + $0x10] sm:$0xff]
  %v32 = vld [vmem:[%s0 + $0x18] sm:$0xff]
  %v33 = vld [vmem:[#allocation2] sm:$0xff]
  %v34 = vpack.c.bf16 %v33, %v33
  %v35 = vld [vmem:[%s3] sm:$0xff]
  %v36 = vld [vmem:[%s3 + $0x8] sm:$0xff]
  %v37 = vld [vmem:[%s3 + $0x10] sm:$0xff]
  %v38 = vld [vmem:[%s3 + $0x18] sm:$0xff]
  %v39 = vld [vmem:[%s3 + $0x20] sm:$0xff]
  %v40 = vld [vmem:[%s3 + $0x28] sm:$0xff]
  %v41 = vld [vmem:[%s3 + $0x30] sm:$0xff]
  %v42 = vld [vmem:[%s3 + $0x38] sm:$0xff]
  %v43 = vld [vmem:[%s3 + $0x40] sm:$0xff]
  %v44 = vld [vmem:[%s3 + $0x48] sm:$0xff]
  %v45 = vld [vmem:[%s3 + $0x50] sm:$0xff]
  %v46 = vld [vmem:[%s3 + $0x58] sm:$0xff]
  %v47 = vld [vmem:[%s3 + $0x60] sm:$0xff]
  %v48 = vld [vmem:[%s3 + $0x68] sm:$0xff]
  %v49 = vld [vmem:[%s3 + $0x70] sm:$0xff]
  %v50 = vld [vmem:[%s3 + $0x78] sm:$0xff]
  %v51 = vld [vmem:[%s3 + $0x80] sm:$0xff]
  %v52 = vld [vmem:[%s3 + $0x88] sm:$0xff]
  %v53 = vld [vmem:[%s3 + $0x90] sm:$0xff]
  %v54 = vld [vmem:[%s3 + $0x98] sm:$0xff]
  %v55 = vld [vmem:[%s3 + $0xa0] sm:$0xff]
  %v56 = vld [vmem:[%s3 + $0xa8] sm:$0xff]
  %v57 = vld [vmem:[%s3 + $0xb0] sm:$0xff]
  %v58 = vld [vmem:[%s3 + $0xb8] sm:$0xff]
  %v59 = vld [vmem:[%s3 + $0xc0] sm:$0xff]
  %v60 = vld [vmem:[%s3 + $0xc8] sm:$0xff]
  %v61 = vld [vmem:[%s3 + $0xd0] sm:$0xff]
  %v62 = vld [vmem:[%s3 + $0xd8] sm:$0xff]
  %v63 = vld [vmem:[%s3 + $0xe0] sm:$0xff]
  %v64 = vld [vmem:[%s3 + $0xe8] sm:$0xff]
  %v65 = vld [vmem:[%s3 + $0xf0] sm:$0xff]
  %v66 = vld [vmem:[%s3 + $0xf8] sm:$0xff]
  %v99 = vunpack.c.l.b16 %v35
  %v100 = vunpack.c.h.b16 %v35
  %v101 = vunpack.c.l.b16 %v36
  %v102 = vunpack.c.h.b16 %v36
  %v103 = vunpack.c.l.b16 %v37
  %v104 = vunpack.c.h.b16 %v37
  %v105 = vunpack.c.l.b16 %v38
  %v106 = vunpack.c.h.b16 %v38
  %v107 = vunpack.c.l.b16 %v39
  %v108 = vunpack.c.h.b16 %v39
  %v109 = vunpack.c.l.b16 %v40
  %v110 = vunpack.c.h.b16 %v40
  %v111 = vunpack.c.l.b16 %v41
  %v112 = vunpack.c.h.b16 %v41
  %v113 = vunpack.c.l.b16 %v42
  %v114 = vunpack.c.h.b16 %v42
  %v115 = vunpack.c.l.b16 %v43
  %v116 = vunpack.c.h.b16 %v43
  %v117 = vunpack.c.l.b16 %v44
  %v118 = vunpack.c.h.b16 %v44
  %v119 = vunpack.c.l.b16 %v45
  %v120 = vunpack.c.h.b16 %v45
  %v121 = vunpack.c.l.b16 %v46
  %v122 = vunpack.c.h.b16 %v46
  %v123 = vunpack.c.l.b16 %v47
  %v124 = vunpack.c.h.b16 %v47
  %v125 = vunpack.c.l.b16 %v48
  %v126 = vunpack.c.h.b16 %v48
  %v127 = vunpack.c.l.b16 %v49
  %v128 = vunpack.c.h.b16 %v49
  %v129 = vunpack.c.l.b16 %v50
  %v130 = vunpack.c.h.b16 %v50
  %v131 = vunpack.c.l.b16 %v51
  %v132 = vunpack.c.h.b16 %v51
  %v133 = vunpack.c.l.b16 %v52
  %v134 = vunpack.c.h.b16 %v52
  %v135 = vunpack.c.l.b16 %v53
  %v136 = vunpack.c.h.b16 %v53
  %v137 = vunpack.c.l.b16 %v54
  %v138 = vunpack.c.h.b16 %v54
  %v139 = vunpack.c.l.b16 %v55
  %v140 = vunpack.c.h.b16 %v55
  %v141 = vunpack.c.l.b16 %v56
  %v142 = vunpack.c.h.b16 %v56
  %v143 = vunpack.c.l.b16 %v57
  %v144 = vunpack.c.h.b16 %v57
  %v145 = vunpack.c.l.b16 %v58
  %v146 = vunpack.c.h.b16 %v58
  %v147 = vunpack.c.l.b16 %v59
  %v148 = vunpack.c.h.b16 %v59
  %v149 = vunpack.c.l.b16 %v60
  %v150 = vunpack.c.h.b16 %v60
  %v151 = vunpack.c.l.b16 %v61
  %v152 = vunpack.c.h.b16 %v61
  %v153 = vunpack.c.l.b16 %v62
  %v154 = vunpack.c.h.b16 %v62
  %v155 = vunpack.c.l.b16 %v63
  %v156 = vunpack.c.h.b16 %v63
  %v157 = vunpack.c.l.b16 %v64
  %v158 = vunpack.c.h.b16 %v64
  %v159 = vunpack.c.l.b16 %v65
  %v160 = vunpack.c.h.b16 %v65
  %v161 = vunpack.c.l.b16 %v66
  %v162 = vunpack.c.h.b16 %v66
  %v163 = vpack.c.b16 %v103, %v99
  %v164 = vpack.c.b16 %v104, %v100
  %v165 = vpack.c.b16 %v105, %v101
  %v166 = vpack.c.b16 %v106, %v102
  %v167 = vpack.c.b16 %v111, %v107
  %v168 = vpack.c.b16 %v112, %v108
  %v169 = vpack.c.b16 %v113, %v109
  %v170 = vpack.c.b16 %v114, %v110
  %v171 = vpack.c.b16 %v119, %v115
  %v172 = vpack.c.b16 %v120, %v116
  %v173 = vpack.c.b16 %v121, %v117
  %v174 = vpack.c.b16 %v122, %v118
  %v175 = vpack.c.b16 %v127, %v123
  %v176 = vpack.c.b16 %v128, %v124
  %v177 = vpack.c.b16 %v129, %v125
  %v178 = vpack.c.b16 %v130, %v126
  %v179 = vpack.c.b16 %v135, %v131
  %v180 = vpack.c.b16 %v136, %v132
  %v181 = vpack.c.b16 %v137, %v133
  %v182 = vpack.c.b16 %v138, %v134
  %v183 = vpack.c.b16 %v143, %v139
  %v184 = vpack.c.b16 %v144, %v140
  %v185 = vpack.c.b16 %v145, %v141
  %v186 = vpack.c.b16 %v146, %v142
  %v187 = vpack.c.b16 %v151, %v147
  %v188 = vpack.c.b16 %v152, %v148
  %v189 = vpack.c.b16 %v153, %v149
  %v190 = vpack.c.b16 %v154, %v150
  %v191 = vpack.c.b16 %v159, %v155
  %v192 = vpack.c.b16 %v160, %v156
  %v193 = vpack.c.b16 %v161, %v157
  %v194 = vpack.c.b16 %v162, %v158
  %227 = vmatprep.subr.bf16.mxu0 %v164
  %228 = vmatpush1.bf16.msra.mxu0 %v163
  %229 = vmatprep.subr.bf16.mxu0 %v168
  %230 = vmatpush1.bf16.msra.mxu0 %v167
  %231 = vmatprep.subr.bf16.mxu0 %v172
  %232 = vmatpush1.bf16.msra.mxu0 %v171
  %233 = vmatprep.subr.bf16.mxu0 %v176
  %234 = vmatpush1.bf16.msra.mxu0 %v175
  %235 = vmatprep.subr.bf16.mxu0 %v180
  %236 = vmatpush1.bf16.msra.mxu0 %v179
  %237 = vmatprep.subr.bf16.mxu0 %v184
  %238 = vmatpush1.bf16.msra.mxu0 %v183
  %239 = vmatprep.subr.bf16.mxu0 %v188
  %240 = vmatpush1.bf16.msra.mxu0 %v187
  %241 = vmatprep.subr.bf16.mxu0 %v192
  %242 = vmatpush1.bf16.msra.mxu0 %v191
  %243 = vmatprep.subr.bf16.mxu0 0
  %244 = vmatpush1.bf16.msra.mxu0 0
  %245 = vmatprep.subr.bf16.mxu0 0
  %246 = vmatpush1.bf16.msra.mxu0 0
  %247 = vmatprep.subr.bf16.mxu0 0
  %248 = vmatpush1.bf16.msra.mxu0 0
  %249 = vmatprep.subr.bf16.mxu0 0
  %250 = vmatpush1.bf16.msra.mxu0 0
  %251 = vmatprep.subr.bf16.mxu0 0
  %252 = vmatpush1.bf16.msra.mxu0 0
  %253 = vmatprep.subr.bf16.mxu0 0
  %254 = vmatpush1.bf16.msra.mxu0 0
  %255 = vmatprep.subr.bf16.mxu0 0
  %256 = vmatpush1.bf16.msra.mxu0 0
  %257 = vmatprep.subr.bf16.mxu0 0
  %258 = vmatpush1.bf16.msra.mxu0 0
  %259 = vmatprep.mubr.bf16.mxu0 0
  %260 = vmatmul.mubr.bf16.gmra.mrb[0].mxu0 %v34
  %v261 = vpop.f32.mrb[0].mxu0
  %v262 = vadd.f32 0.0, %v261
  %v263 = vpop.f32.mrb[0].mxu0
  %v264 = vadd.f32 0.0, %v263
  %v265 = vpop.f32.mrb[0].mxu0
  %v266 = vpop.f32.mrb[0].mxu0
  %267 = vdwg.mxu0
  %268 = vmatprep.subr.bf16.mxu0 %v166
  %269 = vmatpush1.bf16.msra.mxu0 %v165
  %270 = vmatprep.subr.bf16.mxu0 %v170
  %271 = vmatpush1.bf16.msra.mxu0 %v169
  %272 = vmatprep.subr.bf16.mxu0 %v174
  %273 = vmatpush1.bf16.msra.mxu0 %v173
  %274 = vmatprep.subr.bf16.mxu0 %v178
  %275 = vmatpush1.bf16.msra.mxu0 %v177
  %276 = vmatprep.subr.bf16.mxu0 %v182
  %277 = vmatpush1.bf16.msra.mxu0 %v181
  %278 = vmatprep.subr.bf16.mxu0 %v186
  %279 = vmatpush1.bf16.msra.mxu0 %v185
  %280 = vmatprep.subr.bf16.mxu0 %v190
  %281 = vmatpush1.bf16.msra.mxu0 %v189
  %282 = vmatprep.subr.bf16.mxu0 %v194
  %283 = vmatpush1.bf16.msra.mxu0 %v193
  %284 = vmatprep.subr.bf16.mxu0 0
  %285 = vmatpush1.bf16.msra.mxu0 0
  %286 = vmatprep.subr.bf16.mxu0 0
  %287 = vmatpush1.bf16.msra.mxu0 0
  %288 = vmatprep.subr.bf16.mxu0 0
  %289 = vmatpush1.bf16.msra.mxu0 0
  %290 = vmatprep.subr.bf16.mxu0 0
  %291 = vmatpush1.bf16.msra.mxu0 0
  %292 = vmatprep.subr.bf16.mxu0 0
  %293 = vmatpush1.bf16.msra.mxu0 0
  %294 = vmatprep.subr.bf16.mxu0 0
  %295 = vmatpush1.bf16.msra.mxu0 0
  %296 = vmatprep.subr.bf16.mxu0 0
  %297 = vmatpush1.bf16.msra.mxu0 0
  %298 = vmatprep.subr.bf16.mxu0 0
  %299 = vmatpush1.bf16.msra.mxu0 0
  %300 = vmatprep.mubr.bf16.mxu0 0
  %301 = vmatmul.mubr.bf16.gmra.mrb[0].mxu0 %v34
  %v302 = vpop.f32.mrb[0].mxu0
  %v303 = vadd.f32 0.0, %v302
  %v304 = vpop.f32.mrb[0].mxu0
  %v305 = vadd.f32 0.0, %v304
  %v306 = vpop.f32.mrb[0].mxu0
  %v307 = vpop.f32.mrb[0].mxu0
  %308 = vdwg.mxu0
  %v309 = vadd.f32 %v29, %v262
  %v310 = vadd.f32 %v30, %v264
  %v311 = vadd.f32 %v31, %v303
  %v312 = vadd.f32 %v32, %v305
  %v313 = vxor.u32 %v309, 2147483648
  %v314 = vmul.f32 %v313, 1.442695
  %v315 = vpow.pop %v314
  %v316 = vadd.f32 %v315, 1.0
  %v317 = vrcp.pop %v316
  %v318 = vmul.f32 1.0, %v317
  %v319 = vxor.u32 %v310, 2147483648
  %v320 = vmul.f32 %v319, 1.442695
  %v321 = vpow.pop %v320
  %v322 = vadd.f32 %v321, 1.0
  %v323 = vrcp.pop %v322
  %v324 = vmul.f32 1.0, %v323
  %v325 = vtanh.pop %v311
  %v326 = vxor.u32 %v312, 2147483648
  %v327 = vmul.f32 %v326, 1.442695
  %v328 = vpow.pop %v327
  %v329 = vadd.f32 %v328, 1.0
  %v330 = vrcp.pop %v329
  %v331 = vmul.f32 1.0, %v330
  %v332 = vld [vmem:[#allocation3] sm:$0xff]
  %v333 = vmul.f32 %v324, %v332
  %v334 = vmul.f32 %v318, %v325
  %v335 = vadd.f32 %v333, %v334
  %v336 = vtanh.pop %v335
  %v337 = vmul.f32 %v331, %v336
  %338 = vst [vmem:[#allocation3] sm:$0xff] %v335
  %339 = vst [vmem:[#allocation2] sm:$0xff] %v337
  %v340 = vpack.c.bf16 %v337, %v337
  %341 = vst [vmem:[%s4] sm:$0xf] %v340
  %s342 = scalar_lea.vmem %s0, 32
  %v343 = vld [vmem:[%s342] sm:$0xff]
  %v344 = vld [vmem:[%s342 + $0x8] sm:$0xff]
  %v345 = vld [vmem:[%s342 + $0x10] sm:$0xff]
  %v346 = vld [vmem:[%s342 + $0x18] sm:$0xff]
  %v347 = vld [vmem:[#allocation2] sm:$0xff]
  %v348 = vpack.c.bf16 %v347, %v347
  %v349 = vld [vmem:[%s3] sm:$0xff]
  %v350 = vld [vmem:[%s3 + $0x8] sm:$0xff]
  %v351 = vld [vmem:[%s3 + $0x10] sm:$0xff]
  %v352 = vld [vmem:[%s3 + $0x18] sm:$0xff]
  %v353 = vld [vmem:[%s3 + $0x20] sm:$0xff]
  %v354 = vld [vmem:[%s3 + $0x28] sm:$0xff]
  %v355 = vld [vmem:[%s3 + $0x30] sm:$0xff]
  %v356 = vld [vmem:[%s3 + $0x38] sm:$0xff]
  %v357 = vld [vmem:[%s3 + $0x40] sm:$0xff]
  %v358 = vld [vmem:[%s3 + $0x48] sm:$0xff]
  %v359 = vld [vmem:[%s3 + $0x50] sm:$0xff]
  %v360 = vld [vmem:[%s3 + $0x58] sm:$0xff]
  %v361 = vld [vmem:[%s3 + $0x60] sm:$0xff]
  %v362 = vld [vmem:[%s3 + $0x68] sm:$0xff]
  %v363 = vld [vmem:[%s3 + $0x70] sm:$0xff]
  %v364 = vld [vmem:[%s3 + $0x78] sm:$0xff]
  %v365 = vld [vmem:[%s3 + $0x80] sm:$0xff]
  %v366 = vld [vmem:[%s3 + $0x88] sm:$0xff]
  %v367 = vld [vmem:[%s3 + $0x90] sm:$0xff]
  %v368 = vld [vmem:[%s3 + $0x98] sm:$0xff]
  %v369 = vld [vmem:[%s3 + $0xa0] sm:$0xff]
  %v370 = vld [vmem:[%s3 + $0xa8] sm:$0xff]
  %v371 = vld [vmem:[%s3 + $0xb0] sm:$0xff]
  %v372 = vld [vmem:[%s3 + $0xb8] sm:$0xff]
  %v373 = vld [vmem:[%s3 + $0xc0] sm:$0xff]
  %v374 = vld [vmem:[%s3 + $0xc8] sm:$0xff]
  %v375 = vld [vmem:[%s3 + $0xd0] sm:$0xff]
  %v376 = vld [vmem:[%s3 + $0xd8] sm:$0xff]
  %v377 = vld [vmem:[%s3 + $0xe0] sm:$0xff]
  %v378 = vld [vmem:[%s3 + $0xe8] sm:$0xff]
  %v379 = vld [vmem:[%s3 + $0xf0] sm:$0xff]
  %v380 = vld [vmem:[%s3 + $0xf8] sm:$0xff]
  %v413 = vunpack.c.l.b16 %v349
  %v414 = vunpack.c.h.b16 %v349
  %v415 = vunpack.c.l.b16 %v350
  %v416 = vunpack.c.h.b16 %v350
  %v417 = vunpack.c.l.b16 %v351
  %v418 = vunpack.c.h.b16 %v351
  %v419 = vunpack.c.l.b16 %v352
  %v420 = vunpack.c.h.b16 %v352
  %v421 = vunpack.c.l.b16 %v353
  %v422 = vunpack.c.h.b16 %v353
  %v423 = vunpack.c.l.b16 %v354
  %v424 = vunpack.c.h.b16 %v354
  %v425 = vunpack.c.l.b16 %v355
  %v426 = vunpack.c.h.b16 %v355
  %v427 = vunpack.c.l.b16 %v356
  %v428 = vunpack.c.h.b16 %v356
  %v429 = vunpack.c.l.b16 %v357
  %v430 = vunpack.c.h.b16 %v357
  %v431 = vunpack.c.l.b16 %v358
  %v432 = vunpack.c.h.b16 %v358
  %v433 = vunpack.c.l.b16 %v359
  %v434 = vunpack.c.h.b16 %v359
  %v435 = vunpack.c.l.b16 %v360
  %v436 = vunpack.c.h.b16 %v360
  %v437 = vunpack.c.l.b16 %v361
  %v438 = vunpack.c.h.b16 %v361
  %v439 = vunpack.c.l.b16 %v362
  %v440 = vunpack.c.h.b16 %v362
  %v441 = vunpack.c.l.b16 %v363
  %v442 = vunpack.c.h.b16 %v363
  %v443 = vunpack.c.l.b16 %v364
  %v444 = vunpack.c.h.b16 %v364
  %v445 = vunpack.c.l.b16 %v365
  %v446 = vunpack.c.h.b16 %v365
  %v447 = vunpack.c.l.b16 %v366
  %v448 = vunpack.c.h.b16 %v366
  %v449 = vunpack.c.l.b16 %v367
  %v450 = vunpack.c.h.b16 %v367
  %v451 = vunpack.c.l.b16 %v368
  %v452 = vunpack.c.h.b16 %v368
  %v453 = vunpack.c.l.b16 %v369
  %v454 = vunpack.c.h.b16 %v369
  %v455 = vunpack.c.l.b16 %v370
  %v456 = vunpack.c.h.b16 %v370
  %v457 = vunpack.c.l.b16 %v371
  %v458 = vunpack.c.h.b16 %v371
  %v459 = vunpack.c.l.b16 %v372
  %v460 = vunpack.c.h.b16 %v372
  %v461 = vunpack.c.l.b16 %v373
  %v462 = vunpack.c.h.b16 %v373
  %v463 = vunpack.c.l.b16 %v374
  %v464 = vunpack.c.h.b16 %v374
  %v465 = vunpack.c.l.b16 %v375
  %v466 = vunpack.c.h.b16 %v375
  %v467 = vunpack.c.l.b16 %v376
  %v468 = vunpack.c.h.b16 %v376
  %v469 = vunpack.c.l.b16 %v377
  %v470 = vunpack.c.h.b16 %v377
  %v471 = vunpack.c.l.b16 %v378
  %v472 = vunpack.c.h.b16 %v378
  %v473 = vunpack.c.l.b16 %v379
  %v474 = vunpack.c.h.b16 %v379
  %v475 = vunpack.c.l.b16 %v380
  %v476 = vunpack.c.h.b16 %v380
  %v477 = vpack.c.b16 %v417, %v413
  %v478 = vpack.c.b16 %v418, %v414
  %v479 = vpack.c.b16 %v419, %v415
  %v480 = vpack.c.b16 %v420, %v416
  %v481 = vpack.c.b16 %v425, %v421
  %v482 = vpack.c.b16 %v426, %v422
  %v483 = vpack.c.b16 %v427, %v423
  %v484 = vpack.c.b16 %v428, %v424
  %v485 = vpack.c.b16 %v433, %v429
  %v486 = vpack.c.b16 %v434, %v430
  %v487 = vpack.c.b16 %v435, %v431
  %v488 = vpack.c.b16 %v436, %v432
  %v489 = vpack.c.b16 %v441, %v437
  %v490 = vpack.c.b16 %v442, %v438
  %v491 = vpack.c.b16 %v443, %v439
  %v492 = vpack.c.b16 %v444, %v440
  %v493 = vpack.c.b16 %v449, %v445
  %v494 = vpack.c.b16 %v450, %v446
  %v495 = vpack.c.b16 %v451, %v447
  %v496 = vpack.c.b16 %v452, %v448
  %v497 = vpack.c.b16 %v457, %v453
  %v498 = vpack.c.b16 %v458, %v454
  %v499 = vpack.c.b16 %v459, %v455
  %v500 = vpack.c.b16 %v460, %v456
  %v501 = vpack.c.b16 %v465, %v461
  %v502 = vpack.c.b16 %v466, %v462
  %v503 = vpack.c.b16 %v467, %v463
  %v504 = vpack.c.b16 %v468, %v464
  %v505 = vpack.c.b16 %v473, %v469
  %v506 = vpack.c.b16 %v474, %v470
  %v507 = vpack.c.b16 %v475, %v471
  %v508 = vpack.c.b16 %v476, %v472
  %541 = vmatprep.subr.bf16.mxu0 %v478
  %542 = vmatpush1.bf16.msra.mxu0 %v477
  %543 = vmatprep.subr.bf16.mxu0 %v482
  %544 = vmatpush1.bf16.msra.mxu0 %v481
  %545 = vmatprep.subr.bf16.mxu0 %v486
  %546 = vmatpush1.bf16.msra.mxu0 %v485
  %547 = vmatprep.subr.bf16.mxu0 %v490
  %548 = vmatpush1.bf16.msra.mxu0 %v489
  %549 = vmatprep.subr.bf16.mxu0 %v494
  %550 = vmatpush1.bf16.msra.mxu0 %v493
  %551 = vmatprep.subr.bf16.mxu0 %v498
  %552 = vmatpush1.bf16.msra.mxu0 %v497
  %553 = vmatprep.subr.bf16.mxu0 %v502
  %554 = vmatpush1.bf16.msra.mxu0 %v501
  %555 = vmatprep.subr.bf16.mxu0 %v506
  %556 = vmatpush1.bf16.msra.mxu0 %v505
  %557 = vmatprep.subr.bf16.mxu0 0
  %558 = vmatpush1.bf16.msra.mxu0 0
  %559 = vmatprep.subr.bf16.mxu0 0
  %560 = vmatpush1.bf16.msra.mxu0 0
  %561 = vmatprep.subr.bf16.mxu0 0
  %562 = vmatpush1.bf16.msra.mxu0 0
  %563 = vmatprep.subr.bf16.mxu0 0
  %564 = vmatpush1.bf16.msra.mxu0 0
  %565 = vmatprep.subr.bf16.mxu0 0
  %566 = vmatpush1.bf16.msra.mxu0 0
  %567 = vmatprep.subr.bf16.mxu0 0
  %568 = vmatpush1.bf16.msra.mxu0 0
  %569 = vmatprep.subr.bf16.mxu0 0
  %570 = vmatpush1.bf16.msra.mxu0 0
  %571 = vmatprep.subr.bf16.mxu0 0
  %572 = vmatpush1.bf16.msra.mxu0 0
  %573 = vmatprep.mubr.bf16.mxu0 0
  %574 = vmatmul.mubr.bf16.gmra.mrb[0].mxu0 %v348
  %v575 = vpop.f32.mrb[0].mxu0
  %v576 = vadd.f32 0.0, %v575
  %v577 = vpop.f32.mrb[0].mxu0
  %v578 = vadd.f32 0.0, %v577
  %v579 = vpop.f32.mrb[0].mxu0
  %v580 = vpop.f32.mrb[0].mxu0
  %581 = vdwg.mxu0
  %582 = vmatprep.subr.bf16.mxu0 %v480
  %583 = vmatpush1.bf16.msra.mxu0 %v479
  %584 = vmatprep.subr.bf16.mxu0 %v484
  %585 = vmatpush1.bf16.msra.mxu0 %v483
  %586 = vmatprep.subr.bf16.mxu0 %v488
  %587 = vmatpush1.bf16.msra.mxu0 %v487
  %588 = vmatprep.subr.bf16.mxu0 %v492
  %589 = vmatpush1.bf16.msra.mxu0 %v491
  %590 = vmatprep.subr.bf16.mxu0 %v496
  %591 = vmatpush1.bf16.msra.mxu0 %v495
  %592 = vmatprep.subr.bf16.mxu0 %v500
  %593 = vmatpush1.bf16.msra.mxu0 %v499
  %594 = vmatprep.subr.bf16.mxu0 %v504
  %595 = vmatpush1.bf16.msra.mxu0 %v503
  %596 = vmatprep.subr.bf16.mxu0 %v508
  %597 = vmatpush1.bf16.msra.mxu0 %v507
  %598 = vmatprep.subr.bf16.mxu0 0
  %599 = vmatpush1.bf16.msra.mxu0 0
  %600 = vmatprep.subr.bf16.mxu0 0
  %601 = vmatpush1.bf16.msra.mxu0 0
  %602 = vmatprep.subr.bf16.mxu0 0
  %603 = vmatpush1.bf16.msra.mxu0 0
  %604 = vmatprep.subr.bf16.mxu0 0
  %605 = vmatpush1.bf16.msra.mxu0 0
  %606 = vmatprep.subr.bf16.mxu0 0
  %607 = vmatpush1.bf16.msra.mxu0 0
  %608 = vmatprep.subr.bf16.mxu0 0
  %609 = vmatpush1.bf16.msra.mxu0 0
  %610 = vmatprep.subr.bf16.mxu0 0
  %611 = vmatpush1.bf16.msra.mxu0 0
  %612 = vmatprep.subr.bf16.mxu0 0
  %613 = vmatpush1.bf16.msra.mxu0 0
  %614 = vmatprep.mubr.bf16.mxu0 0
  %615 = vmatmul.mubr.bf16.gmra.mrb[0].mxu0 %v348
  %v616 = vpop.f32.mrb[0].mxu0
  %v617 = vadd.f32 0.0, %v616
  %v618 = vpop.f32.mrb[0].mxu0
  %v619 = vadd.f32 0.0, %v618
  %v620 = vpop.f32.mrb[0].mxu0
  %v621 = vpop.f32.mrb[0].mxu0
  %622 = vdwg.mxu0
  %v623 = vadd.f32 %v343, %v576
  %v624 = vadd.f32 %v344, %v578
  %v625 = vadd.f32 %v345, %v617
  %v626 = vadd.f32 %v346, %v619
  %v627 = vxor.u32 %v623, 2147483648
  %v628 = vmul.f32 %v627, 1.442695
  %v629 = vpow.pop %v628
  %v630 = vadd.f32 %v629, 1.0
  %v631 = vrcp.pop %v630
  %v632 = vmul.f32 1.0, %v631
  %v633 = vxor.u32 %v624, 2147483648
  %v634 = vmul.f32 %v633, 1.442695
  %v635 = vpow.pop %v634
  %v636 = vadd.f32 %v635, 1.0
  %v637 = vrcp.pop %v636
  %v638 = vmul.f32 1.0, %v637
  %v639 = vtanh.pop %v625
  %v640 = vxor.u32 %v626, 2147483648
  %v641 = vmul.f32 %v640, 1.442695
  %v642 = vpow.pop %v641
  %v643 = vadd.f32 %v642, 1.0
  %v644 = vrcp.pop %v643
  %v645 = vmul.f32 1.0, %v644
  %v646 = vld [vmem:[#allocation3] sm:$0xff]
  %v647 = vmul.f32 %v638, %v646
  %v648 = vmul.f32 %v632, %v639
  %v649 = vadd.f32 %v647, %v648
  %v650 = vtanh.pop %v649
  %v651 = vmul.f32 %v645, %v650
  %652 = vst [vmem:[#allocation3] sm:$0xff] %v649
  %653 = vst [vmem:[#allocation2] sm:$0xff] %v651
  %v654 = vpack.c.bf16 %v651, %v651
  %s655 = scalar_lea.vmem %s4, 4
  %656 = vst [vmem:[%s655] sm:$0xf] %v654
  %s657 = scalar_lea.vmem %s0, 64
  %v658 = vld [vmem:[%s657] sm:$0xff]
  %v659 = vld [vmem:[%s657 + $0x8] sm:$0xff]
  %v660 = vld [vmem:[%s657 + $0x10] sm:$0xff]
  %v661 = vld [vmem:[%s657 + $0x18] sm:$0xff]
  %v662 = vld [vmem:[#allocation2] sm:$0xff]
  %v663 = vpack.c.bf16 %v662, %v662
  %v664 = vld [vmem:[%s3] sm:$0xff]
  %v665 = vld [vmem:[%s3 + $0x8] sm:$0xff]
  %v666 = vld [vmem:[%s3 + $0x10] sm:$0xff]
  %v667 = vld [vmem:[%s3 + $0x18] sm:$0xff]
  %v668 = vld [vmem:[%s3 + $0x20] sm:$0xff]
  %v669 = vld [vmem:[%s3 + $0x28] sm:$0xff]
  %v670 = vld [vmem:[%s3 + $0x30] sm:$0xff]
  %v671 = vld [vmem:[%s3 + $0x38] sm:$0xff]
  %v672 = vld [vmem:[%s3 + $0x40] sm:$0xff]
  %v673 = vld [vmem:[%s3 + $0x48] sm:$0xff]
  %v674 = vld [vmem:[%s3 + $0x50] sm:$0xff]
  %v675 = vld [vmem:[%s3 + $0x58] sm:$0xff]
  %v676 = vld [vmem:[%s3 + $0x60] sm:$0xff]
  %v677 = vld [vmem:[%s3 + $0x68] sm:$0xff]
  %v678 = vld [vmem:[%s3 + $0x70] sm:$0xff]
  %v679 = vld [vmem:[%s3 + $0x78] sm:$0xff]
  %v680 = vld [vmem:[%s3 + $0x80] sm:$0xff]
  %v681 = vld [vmem:[%s3 + $0x88] sm:$0xff]
  %v682 = vld [vmem:[%s3 + $0x90] sm:$0xff]
  %v683 = vld [vmem:[%s3 + $0x98] sm:$0xff]
  %v684 = vld [vmem:[%s3 + $0xa0] sm:$0xff]
  %v685 = vld [vmem:[%s3 + $0xa8] sm:$0xff]
  %v686 = vld [vmem:[%s3 + $0xb0] sm:$0xff]
  %v687 = vld [vmem:[%s3 + $0xb8] sm:$0xff]
  %v688 = vld [vmem:[%s3 + $0xc0] sm:$0xff]
  %v689 = vld [vmem:[%s3 + $0xc8] sm:$0xff]
  %v690 = vld [vmem:[%s3 + $0xd0] sm:$0xff]
  %v691 = vld [vmem:[%s3 + $0xd8] sm:$0xff]
  %v692 = vld [vmem:[%s3 + $0xe0] sm:$0xff]
  %v693 = vld [vmem:[%s3 + $0xe8] sm:$0xff]
  %v694 = vld [vmem:[%s3 + $0xf0] sm:$0xff]
  %v695 = vld [vmem:[%s3 + $0xf8] sm:$0xff]
  %v728 = vunpack.c.l.b16 %v664
  %v729 = vunpack.c.h.b16 %v664
  %v730 = vunpack.c.l.b16 %v665
  %v731 = vunpack.c.h.b16 %v665
  %v732 = vunpack.c.l.b16 %v666
  %v733 = vunpack.c.h.b16 %v666
  %v734 = vunpack.c.l.b16 %v667
  %v735 = vunpack.c.h.b16 %v667
  %v736 = vunpack.c.l.b16 %v668
  %v737 = vunpack.c.h.b16 %v668
  %v738 = vunpack.c.l.b16 %v669
  %v739 = vunpack.c.h.b16 %v669
  %v740 = vunpack.c.l.b16 %v670
  %v741 = vunpack.c.h.b16 %v670
  %v742 = vunpack.c.l.b16 %v671
  %v743 = vunpack.c.h.b16 %v671
  %v744 = vunpack.c.l.b16 %v672
  %v745 = vunpack.c.h.b16 %v672
  %v746 = vunpack.c.l.b16 %v673
  %v747 = vunpack.c.h.b16 %v673
  %v748 = vunpack.c.l.b16 %v674
  %v749 = vunpack.c.h.b16 %v674
  %v750 = vunpack.c.l.b16 %v675
  %v751 = vunpack.c.h.b16 %v675
  %v752 = vunpack.c.l.b16 %v676
  %v753 = vunpack.c.h.b16 %v676
  %v754 = vunpack.c.l.b16 %v677
  %v755 = vunpack.c.h.b16 %v677
  %v756 = vunpack.c.l.b16 %v678
  %v757 = vunpack.c.h.b16 %v678
  %v758 = vunpack.c.l.b16 %v679
  %v759 = vunpack.c.h.b16 %v679
  %v760 = vunpack.c.l.b16 %v680
  %v761 = vunpack.c.h.b16 %v680
  %v762 = vunpack.c.l.b16 %v681
  %v763 = vunpack.c.h.b16 %v681
  %v764 = vunpack.c.l.b16 %v682
  %v765 = vunpack.c.h.b16 %v682
  %v766 = vunpack.c.l.b16 %v683
  %v767 = vunpack.c.h.b16 %v683
  %v768 = vunpack.c.l.b16 %v684
  %v769 = vunpack.c.h.b16 %v684
  %v770 = vunpack.c.l.b16 %v685
  %v771 = vunpack.c.h.b16 %v685
  %v772 = vunpack.c.l.b16 %v686
  %v773 = vunpack.c.h.b16 %v686
  %v774 = vunpack.c.l.b16 %v687
  %v775 = vunpack.c.h.b16 %v687
  %v776 = vunpack.c.l.b16 %v688
  %v777 = vunpack.c.h.b16 %v688
  %v778 = vunpack.c.l.b16 %v689
  %v779 = vunpack.c.h.b16 %v689
  %v780 = vunpack.c.l.b16 %v690
  %v781 = vunpack.c.h.b16 %v690
  %v782 = vunpack.c.l.b16 %v691
  %v783 = vunpack.c.h.b16 %v691
  %v784 = vunpack.c.l.b16 %v692
  %v785 = vunpack.c.h.b16 %v692
  %v786 = vunpack.c.l.b16 %v693
  %v787 = vunpack.c.h.b16 %v693
  %v788 = vunpack.c.l.b16 %v694
  %v789 = vunpack.c.h.b16 %v694
  %v790 = vunpack.c.l.b16 %v695
  %v791 = vunpack.c.h.b16 %v695
  %v792 = vpack.c.b16 %v732, %v728
  %v793 = vpack.c.b16 %v733, %v729
  %v794 = vpack.c.b16 %v734, %v730
  %v795 = vpack.c.b16 %v735, %v731
  %v796 = vpack.c.b16 %v740, %v736
  %v797 = vpack.c.b16 %v741, %v737
  %v798 = vpack.c.b16 %v742, %v738
  %v799 = vpack.c.b16 %v743, %v739
  %v800 = vpack.c.b16 %v748, %v744
  %v801 = vpack.c.b16 %v749, %v745
  %v802 = vpack.c.b16 %v750, %v746
  %v803 = vpack.c.b16 %v751, %v747
  %v804 = vpack.c.b16 %v756, %v752
  %v805 = vpack.c.b16 %v757, %v753
  %v806 = vpack.c.b16 %v758, %v754
  %v807 = vpack.c.b16 %v759, %v755
  %v808 = vpack.c.b16 %v764, %v760
  %v809 = vpack.c.b16 %v765, %v761
  %v810 = vpack.c.b16 %v766, %v762
  %v811 = vpack.c.b16 %v767, %v763
  %v812 = vpack.c.b16 %v772, %v768
  %v813 = vpack.c.b16 %v773, %v769
  %v814 = vpack.c.b16 %v774, %v770
  %v815 = vpack.c.b16 %v775, %v771
  %v816 = vpack.c.b16 %v780, %v776
  %v817 = vpack.c.b16 %v781, %v777
  %v818 = vpack.c.b16 %v782, %v778
  %v819 = vpack.c.b16 %v783, %v779
  %v820 = vpack.c.b16 %v788, %v784
  %v821 = vpack.c.b16 %v789, %v785
  %v822 = vpack.c.b16 %v790, %v786
  %v823 = vpack.c.b16 %v791, %v787
  %856 = vmatprep.subr.bf16.mxu0 %v793
  %857 = vmatpush1.bf16.msra.mxu0 %v792
  %858 = vmatprep.subr.bf16.mxu0 %v797
  %859 = vmatpush1.bf16.msra.mxu0 %v796
  %860 = vmatprep.subr.bf16.mxu0 %v801
  %861 = vmatpush1.bf16.msra.mxu0 %v800
  %862 = vmatprep.subr.bf16.mxu0 %v805
  %863 = vmatpush1.bf16.msra.mxu0 %v804
  %864 = vmatprep.subr.bf16.mxu0 %v809
  %865 = vmatpush1.bf16.msra.mxu0 %v808
  %866 = vmatprep.subr.bf16.mxu0 %v813
  %867 = vmatpush1.bf16.msra.mxu0 %v812
  %868 = vmatprep.subr.bf16.mxu0 %v817
  %869 = vmatpush1.bf16.msra.mxu0 %v816
  %870 = vmatprep.subr.bf16.mxu0 %v821
  %871 = vmatpush1.bf16.msra.mxu0 %v820
  %872 = vmatprep.subr.bf16.mxu0 0
  %873 = vmatpush1.bf16.msra.mxu0 0
  %874 = vmatprep.subr.bf16.mxu0 0
  %875 = vmatpush1.bf16.msra.mxu0 0
  %876 = vmatprep.subr.bf16.mxu0 0
  %877 = vmatpush1.bf16.msra.mxu0 0
  %878 = vmatprep.subr.bf16.mxu0 0
  %879 = vmatpush1.bf16.msra.mxu0 0
  %880 = vmatprep.subr.bf16.mxu0 0
  %881 = vmatpush1.bf16.msra.mxu0 0
  %882 = vmatprep.subr.bf16.mxu0 0
  %883 = vmatpush1.bf16.msra.mxu0 0
  %884 = vmatprep.subr.bf16.mxu0 0
  %885 = vmatpush1.bf16.msra.mxu0 0
  %886 = vmatprep.subr.bf16.mxu0 0
  %887 = vmatpush1.bf16.msra.mxu0 0
  %888 = vmatprep.mubr.bf16.mxu0 0
  %889 = vmatmul.mubr.bf16.gmra.mrb[0].mxu0 %v663
  %v890 = vpop.f32.mrb[0].mxu0
  %v891 = vadd.f32 0.0, %v890
  %v892 = vpop.f32.mrb[0].mxu0
  %v893 = vadd.f32 0.0, %v892
  %v894 = vpop.f32.mrb[0].mxu0
  %v895 = vpop.f32.mrb[0].mxu0
  %896 = vdwg.mxu0
  %897 = vmatprep.subr.bf16.mxu0 %v795
  %898 = vmatpush1.bf16.msra.mxu0 %v794
  %899 = vmatprep.subr.bf16.mxu0 %v799
  %900 = vmatpush1.bf16.msra.mxu0 %v798
  %901 = vmatprep.subr.bf16.mxu0 %v803
  %902 = vmatpush1.bf16.msra.mxu0 %v802
  %903 = vmatprep.subr.bf16.mxu0 %v807
  %904 = vmatpush1.bf16.msra.mxu0 %v806
  %905 = vmatprep.subr.bf16.mxu0 %v811
  %906 = vmatpush1.bf16.msra.mxu0 %v810
  %907 = vmatprep.subr.bf16.mxu0 %v815
  %908 = vmatpush1.bf16.msra.mxu0 %v814
  %909 = vmatprep.subr.bf16.mxu0 %v819
  %910 = vmatpush1.bf16.msra.mxu0 %v818
  %911 = vmatprep.subr.bf16.mxu0 %v823
  %912 = vmatpush1.bf16.msra.mxu0 %v822
  %913 = vmatprep.subr.bf16.mxu0 0
  %914 = vmatpush1.bf16.msra.mxu0 0
  %915 = vmatprep.subr.bf16.mxu0 0
  %916 = vmatpush1.bf16.msra.mxu0 0
  %917 = vmatprep.subr.bf16.mxu0 0
  %918 = vmatpush1.bf16.msra.mxu0 0
  %919 = vmatprep.subr.bf16.mxu0 0
  %920 = vmatpush1.bf16.msra.mxu0 0
  %921 = vmatprep.subr.bf16.mxu0 0
  %922 = vmatpush1.bf16.msra.mxu0 0
  %923 = vmatprep.subr.bf16.mxu0 0
  %924 = vmatpush1.bf16.msra.mxu0 0
  %925 = vmatprep.subr.bf16.mxu0 0
  %926 = vmatpush1.bf16.msra.mxu0 0
  %927 = vmatprep.subr.bf16.mxu0 0
  %928 = vmatpush1.bf16.msra.mxu0 0
  %929 = vmatprep.mubr.bf16.mxu0 0
  %930 = vmatmul.mubr.bf16.gmra.mrb[0].mxu0 %v663
  %v931 = vpop.f32.mrb[0].mxu0
  %v932 = vadd.f32 0.0, %v931
  %v933 = vpop.f32.mrb[0].mxu0
  %v934 = vadd.f32 0.0, %v933
  %v935 = vpop.f32.mrb[0].mxu0
  %v936 = vpop.f32.mrb[0].mxu0
  %937 = vdwg.mxu0
  %v938 = vadd.f32 %v658, %v891
  %v939 = vadd.f32 %v659, %v893
  %v940 = vadd.f32 %v660, %v932
  %v941 = vadd.f32 %v661, %v934
  %v942 = vxor.u32 %v938, 2147483648
  %v943 = vmul.f32 %v942, 1.442695
  %v944 = vpow.pop %v943
  %v945 = vadd.f32 %v944, 1.0
  %v946 = vrcp.pop %v945
  %v947 = vmul.f32 1.0, %v946
  %v948 = vxor.u32 %v939, 2147483648
  %v949 = vmul.f32 %v948, 1.442695
  %v950 = vpow.pop %v949
  %v951 = vadd.f32 %v950, 1.0
  %v952 = vrcp.pop %v951
  %v953 = vmul.f32 1.0, %v952
  %v954 = vtanh.pop %v940
  %v955 = vxor.u32 %v941, 2147483648
  %v956 = vmul.f32 %v955, 1.442695
  %v957 = vpow.pop %v956
  %v958 = vadd.f32 %v957, 1.0
  %v959 = vrcp.pop %v958
  %v960 = vmul.f32 1.0, %v959
  %v961 = vld [vmem:[#allocation3] sm:$0xff]
  %v962 = vmul.f32 %v953, %v961
  %v963 = vmul.f32 %v947, %v954
  %v964 = vadd.f32 %v962, %v963
  %v965 = vtanh.pop %v964
  %v966 = vmul.f32 %v960, %v965
  %967 = vst [vmem:[#allocation3] sm:$0xff] %v964
  %968 = vst [vmem:[#allocation2] sm:$0xff] %v966
  %v969 = vpack.c.bf16 %v966, %v966
  %s970 = scalar_lea.vmem %s4, 8
  %971 = vst [vmem:[%s970] sm:$0xf] %v969
  %s972 = scalar_lea.vmem %s0, 96
  %v973 = vld [vmem:[%s972] sm:$0xff]
  %v974 = vld [vmem:[%s972 + $0x8] sm:$0xff]
  %v975 = vld [vmem:[%s972 + $0x10] sm:$0xff]
  %v976 = vld [vmem:[%s972 + $0x18] sm:$0xff]
  %v977 = vld [vmem:[#allocation2] sm:$0xff]
  %v978 = vpack.c.bf16 %v977, %v977
  %v979 = vld [vmem:[%s3] sm:$0xff]
  %v980 = vld [vmem:[%s3 + $0x8] sm:$0xff]
  %v981 = vld [vmem:[%s3 + $0x10] sm:$0xff]
  %v982 = vld [vmem:[%s3 + $0x18] sm:$0xff]
  %v983 = vld [vmem:[%s3 + $0x20] sm:$0xff]
  %v984 = vld [vmem:[%s3 + $0x28] sm:$0xff]
  %v985 = vld [vmem:[%s3 + $0x30] sm:$0xff]
  %v986 = vld [vmem:[%s3 + $0x38] sm:$0xff]
  %v987 = vld [vmem:[%s3 + $0x40] sm:$0xff]
  %v988 = vld [vmem:[%s3 + $0x48] sm:$0xff]
  %v989 = vld [vmem:[%s3 + $0x50] sm:$0xff]
  %v990 = vld [vmem:[%s3 + $0x58] sm:$0xff]
  %v991 = vld [vmem:[%s3 + $0x60] sm:$0xff]
  %v992 = vld [vmem:[%s3 + $0x68] sm:$0xff]
  %v993 = vld [vmem:[%s3 + $0x70] sm:$0xff]
  %v994 = vld [vmem:[%s3 + $0x78] sm:$0xff]
  %v995 = vld [vmem:[%s3 + $0x80] sm:$0xff]
  %v996 = vld [vmem:[%s3 + $0x88] sm:$0xff]
  %v997 = vld [vmem:[%s3 + $0x90] sm:$0xff]
  %v998 = vld [vmem:[%s3 + $0x98] sm:$0xff]
  %v999 = vld [vmem:[%s3 + $0xa0] sm:$0xff]
  %v1000 = vld [vmem:[%s3 + $0xa8] sm:$0xff]
  %v1001 = vld [vmem:[%s3 + $0xb0] sm:$0xff]
  %v1002 = vld [vmem:[%s3 + $0xb8] sm:$0xff]
  %v1003 = vld [vmem:[%s3 + $0xc0] sm:$0xff]
  %v1004 = vld [vmem:[%s3 + $0xc8] sm:$0xff]
  %v1005 = vld [vmem:[%s3 + $0xd0] sm:$0xff]
  %v1006 = vld [vmem:[%s3 + $0xd8] sm:$0xff]
  %v1007 = vld [vmem:[%s3 + $0xe0] sm:$0xff]
  %v1008 = vld [vmem:[%s3 + $0xe8] sm:$0xff]
  %v1009 = vld [vmem:[%s3 + $0xf0] sm:$0xff]
  %v1010 = vld [vmem:[%s3 + $0xf8] sm:$0xff]
  %v1043 = vunpack.c.l.b16 %v979
  %v1044 = vunpack.c.h.b16 %v979
  %v1045 = vunpack.c.l.b16 %v980
  %v1046 = vunpack.c.h.b16 %v980
  %v1047 = vunpack.c.l.b16 %v981
  %v1048 = vunpack.c.h.b16 %v981
  %v1049 = vunpack.c.l.b16 %v982
  %v1050 = vunpack.c.h.b16 %v982
  %v1051 = vunpack.c.l.b16 %v983
  %v1052 = vunpack.c.h.b16 %v983
  %v1053 = vunpack.c.l.b16 %v984
  %v1054 = vunpack.c.h.b16 %v984
  %v1055 = vunpack.c.l.b16 %v985
  %v1056 = vunpack.c.h.b16 %v985
  %v1057 = vunpack.c.l.b16 %v986
  %v1058 = vunpack.c.h.b16 %v986
  %v1059 = vunpack.c.l.b16 %v987
  %v1060 = vunpack.c.h.b16 %v987
  %v1061 = vunpack.c.l.b16 %v988
  %v1062 = vunpack.c.h.b16 %v988
  %v1063 = vunpack.c.l.b16 %v989
  %v1064 = vunpack.c.h.b16 %v989
  %v1065 = vunpack.c.l.b16 %v990
  %v1066 = vunpack.c.h.b16 %v990
  %v1067 = vunpack.c.l.b16 %v991
  %v1068 = vunpack.c.h.b16 %v991
  %v1069 = vunpack.c.l.b16 %v992
  %v1070 = vunpack.c.h.b16 %v992
  %v1071 = vunpack.c.l.b16 %v993
  %v1072 = vunpack.c.h.b16 %v993
  %v1073 = vunpack.c.l.b16 %v994
  %v1074 = vunpack.c.h.b16 %v994
  %v1075 = vunpack.c.l.b16 %v995
  %v1076 = vunpack.c.h.b16 %v995
  %v1077 = vunpack.c.l.b16 %v996
  %v1078 = vunpack.c.h.b16 %v996
  %v1079 = vunpack.c.l.b16 %v997
  %v1080 = vunpack.c.h.b16 %v997
  %v1081 = vunpack.c.l.b16 %v998
  %v1082 = vunpack.c.h.b16 %v998
  %v1083 = vunpack.c.l.b16 %v999
  %v1084 = vunpack.c.h.b16 %v999
  %v1085 = vunpack.c.l.b16 %v1000
  %v1086 = vunpack.c.h.b16 %v1000
  %v1087 = vunpack.c.l.b16 %v1001
  %v1088 = vunpack.c.h.b16 %v1001
  %v1089 = vunpack.c.l.b16 %v1002
  %v1090 = vunpack.c.h.b16 %v1002
  %v1091 = vunpack.c.l.b16 %v1003
  %v1092 = vunpack.c.h.b16 %v1003
  %v1093 = vunpack.c.l.b16 %v1004
  %v1094 = vunpack.c.h.b16 %v1004
  %v1095 = vunpack.c.l.b16 %v1005
  %v1096 = vunpack.c.h.b16 %v1005
  %v1097 = vunpack.c.l.b16 %v1006
  %v1098 = vunpack.c.h.b16 %v1006
  %v1099 = vunpack.c.l.b16 %v1007
  %v1100 = vunpack.c.h.b16 %v1007
  %v1101 = vunpack.c.l.b16 %v1008
  %v1102 = vunpack.c.h.b16 %v1008
  %v1103 = vunpack.c.l.b16 %v1009
  %v1104 = vunpack.c.h.b16 %v1009
  %v1105 = vunpack.c.l.b16 %v1010
  %v1106 = vunpack.c.h.b16 %v1010
  %v1107 = vpack.c.b16 %v1047, %v1043
  %v1108 = vpack.c.b16 %v1048, %v1044
  %v1109 = vpack.c.b16 %v1049, %v1045
  %v1110 = vpack.c.b16 %v1050, %v1046
  %v1111 = vpack.c.b16 %v1055, %v1051
  %v1112 = vpack.c.b16 %v1056, %v1052
  %v1113 = vpack.c.b16 %v1057, %v1053
  %v1114 = vpack.c.b16 %v1058, %v1054
  %v1115 = vpack.c.b16 %v1063, %v1059
  %v1116 = vpack.c.b16 %v1064, %v1060
  %v1117 = vpack.c.b16 %v1065, %v1061
  %v1118 = vpack.c.b16 %v1066, %v1062
  %v1119 = vpack.c.b16 %v1071, %v1067
  %v1120 = vpack.c.b16 %v1072, %v1068
  %v1121 = vpack.c.b16 %v1073, %v1069
  %v1122 = vpack.c.b16 %v1074, %v1070
  %v1123 = vpack.c.b16 %v1079, %v1075
  %v1124 = vpack.c.b16 %v1080, %v1076
  %v1125 = vpack.c.b16 %v1081, %v1077
  %v1126 = vpack.c.b16 %v1082, %v1078
  %v1127 = vpack.c.b16 %v1087, %v1083
  %v1128 = vpack.c.b16 %v1088, %v1084
  %v1129 = vpack.c.b16 %v1089, %v1085
  %v1130 = vpack.c.b16 %v1090, %v1086
  %v1131 = vpack.c.b16 %v1095, %v1091
  %v1132 = vpack.c.b16 %v1096, %v1092
  %v1133 = vpack.c.b16 %v1097, %v1093
  %v1134 = vpack.c.b16 %v1098, %v1094
  %v1135 = vpack.c.b16 %v1103, %v1099
  %v1136 = vpack.c.b16 %v1104, %v1100
  %v1137 = vpack.c.b16 %v1105, %v1101
  %v1138 = vpack.c.b16 %v1106, %v1102
  %1171 = vmatprep.subr.bf16.mxu0 %v1108
  %1172 = vmatpush1.bf16.msra.mxu0 %v1107
  %1173 = vmatprep.subr.bf16.mxu0 %v1112
  %1174 = vmatpush1.bf16.msra.mxu0 %v1111
  %1175 = vmatprep.subr.bf16.mxu0 %v1116
  %1176 = vmatpush1.bf16.msra.mxu0 %v1115
  %1177 = vmatprep.subr.bf16.mxu0 %v1120
  %1178 = vmatpush1.bf16.msra.mxu0 %v1119
  %1179 = vmatprep.subr.bf16.mxu0 %v1124
  %1180 = vmatpush1.bf16.msra.mxu0 %v1123
  %1181 = vmatprep.subr.bf16.mxu0 %v1128
  %1182 = vmatpush1.bf16.msra.mxu0 %v1127
  %1183 = vmatprep.subr.bf16.mxu0 %v1132
  %1184 = vmatpush1.bf16.msra.mxu0 %v1131
  %1185 = vmatprep.subr.bf16.mxu0 %v1136
  %1186 = vmatpush1.bf16.msra.mxu0 %v1135
  %1187 = vmatprep.subr.bf16.mxu0 0
  %1188 = vmatpush1.bf16.msra.mxu0 0
  %1189 = vmatprep.subr.bf16.mxu0 0
  %1190 = vmatpush1.bf16.msra.mxu0 0
  %1191 = vmatprep.subr.bf16.mxu0 0
  %1192 = vmatpush1.bf16.msra.mxu0 0
  %1193 = vmatprep.subr.bf16.mxu0 0
  %1194 = vmatpush1.bf16.msra.mxu0 0
  %1195 = vmatprep.subr.bf16.mxu0 0
  %1196 = vmatpush1.bf16.msra.mxu0 0
  %1197 = vmatprep.subr.bf16.mxu0 0
  %1198 = vmatpush1.bf16.msra.mxu0 0
  %1199 = vmatprep.subr.bf16.mxu0 0
  %1200 = vmatpush1.bf16.msra.mxu0 0
  %1201 = vmatprep.subr.bf16.mxu0 0
  %1202 = vmatpush1.bf16.msra.mxu0 0
  %1203 = vmatprep.mubr.bf16.mxu0 0
  %1204 = vmatmul.mubr.bf16.gmra.mrb[0].mxu0 %v978
  %v1205 = vpop.f32.mrb[0].mxu0
  %v1206 = vadd.f32 0.0, %v1205
  %v1207 = vpop.f32.mrb[0].mxu0
  %v1208 = vadd.f32 0.0, %v1207
  %v1209 = vpop.f32.mrb[0].mxu0
  %v1210 = vpop.f32.mrb[0].mxu0
  %1211 = vdwg.mxu0
  %1212 = vmatprep.subr.bf16.mxu0 %v1110
  %1213 = vmatpush1.bf16.msra.mxu0 %v1109
  %1214 = vmatprep.subr.bf16.mxu0 %v1114
  %1215 = vmatpush1.bf16.msra.mxu0 %v1113
  %1216 = vmatprep.subr.bf16.mxu0 %v1118
  %1217 = vmatpush1.bf16.msra.mxu0 %v1117
  %1218 = vmatprep.subr.bf16.mxu0 %v1122
  %1219 = vmatpush1.bf16.msra.mxu0 %v1121
  %1220 = vmatprep.subr.bf16.mxu0 %v1126
  %1221 = vmatpush1.bf16.msra.mxu0 %v1125
  %1222 = vmatprep.subr.bf16.mxu0 %v1130
  %1223 = vmatpush1.bf16.msra.mxu0 %v1129
  %1224 = vmatprep.subr.bf16.mxu0 %v1134
  %1225 = vmatpush1.bf16.msra.mxu0 %v1133
  %1226 = vmatprep.subr.bf16.mxu0 %v1138
  %1227 = vmatpush1.bf16.msra.mxu0 %v1137
  %1228 = vmatprep.subr.bf16.mxu0 0
  %1229 = vmatpush1.bf16.msra.mxu0 0
  %1230 = vmatprep.subr.bf16.mxu0 0
  %1231 = vmatpush1.bf16.msra.mxu0 0
  %1232 = vmatprep.subr.bf16.mxu0 0
  %1233 = vmatpush1.bf16.msra.mxu0 0
  %1234 = vmatprep.subr.bf16.mxu0 0
  %1235 = vmatpush1.bf16.msra.mxu0 0
  %1236 = vmatprep.subr.bf16.mxu0 0
  %1237 = vmatpush1.bf16.msra.mxu0 0
  %1238 = vmatprep.subr.bf16.mxu0 0
  %1239 = vmatpush1.bf16.msra.mxu0 0
  %1240 = vmatprep.subr.bf16.mxu0 0
  %1241 = vmatpush1.bf16.msra.mxu0 0
  %1242 = vmatprep.subr.bf16.mxu0 0
  %1243 = vmatpush1.bf16.msra.mxu0 0
  %1244 = vmatprep.mubr.bf16.mxu0 0
  %1245 = vmatmul.mubr.bf16.gmra.mrb[0].mxu0 %v978
  %v1246 = vpop.f32.mrb[0].mxu0
  %v1247 = vadd.f32 0.0, %v1246
  %v1248 = vpop.f32.mrb[0].mxu0
  %v1249 = vadd.f32 0.0, %v1248
  %v1250 = vpop.f32.mrb[0].mxu0
  %v1251 = vpop.f32.mrb[0].mxu0
  %1252 = vdwg.mxu0
  %v1253 = vadd.f32 %v973, %v1206
  %v1254 = vadd.f32 %v974, %v1208
  %v1255 = vadd.f32 %v975, %v1247
  %v1256 = vadd.f32 %v976, %v1249
  %v1257 = vxor.u32 %v1253, 2147483648
  %v1258 = vmul.f32 %v1257, 1.442695
  %v1259 = vpow.pop %v1258
  %v1260 = vadd.f32 %v1259, 1.0
  %v1261 = vrcp.pop %v1260
  %v1262 = vmul.f32 1.0, %v1261
  %v1263 = vxor.u32 %v1254, 2147483648
  %v1264 = vmul.f32 %v1263, 1.442695
  %v1265 = vpow.pop %v1264
  %v1266 = vadd.f32 %v1265, 1.0
  %v1267 = vrcp.pop %v1266
  %v1268 = vmul.f32 1.0, %v1267
  %v1269 = vtanh.pop %v1255
  %v1270 = vxor.u32 %v1256, 2147483648
  %v1271 = vmul.f32 %v1270, 1.442695
  %v1272 = vpow.pop %v1271
  %v1273 = vadd.f32 %v1272, 1.0
  %v1274 = vrcp.pop %v1273
  %v1275 = vmul.f32 1.0, %v1274
  %v1276 = vld [vmem:[#allocation3] sm:$0xff]
  %v1277 = vmul.f32 %v1268, %v1276
  %v1278 = vmul.f32 %v1262, %v1269
  %v1279 = vadd.f32 %v1277, %v1278
  %v1280 = vtanh.pop %v1279
  %v1281 = vmul.f32 %v1275, %v1280
  %1282 = vst [vmem:[#allocation3] sm:$0xff] %v1279
  %1283 = vst [vmem:[#allocation2] sm:$0xff] %v1281
  %v1284 = vpack.c.bf16 %v1281, %v1281
  %s1285 = scalar_lea.vmem %s4, 12
  %1286 = vst [vmem:[%s1285] sm:$0xf] %v1284
  %s1287 = scalar_lea.vmem %s0, 128
  %v1288 = vld [vmem:[%s1287] sm:$0xff]
  %v1289 = vld [vmem:[%s1287 + $0x8] sm:$0xff]
  %v1290 = vld [vmem:[%s1287 + $0x10] sm:$0xff]
  %v1291 = vld [vmem:[%s1287 + $0x18] sm:$0xff]
  %v1292 = vld [vmem:[#allocation2] sm:$0xff]
  %v1293 = vpack.c.bf16 %v1292, %v1292
  %v1294 = vld [vmem:[%s3] sm:$0xff]
  %v1295 = vld [vmem:[%s3 + $0x8] sm:$0xff]
  %v1296 = vld [vmem:[%s3 + $0x10] sm:$0xff]
  %v1297 = vld [vmem:[%s3 + $0x18] sm:$0xff]
  %v1298 = vld [vmem:[%s3 + $0x20] sm:$0xff]
  %v1299 = vld [vmem:[%s3 + $0x28] sm:$0xff]
  %v1300 = vld [vmem:[%s3 + $0x30] sm:$0xff]
  %v1301 = vld [vmem:[%s3 + $0x38] sm:$0xff]
  %v1302 = vld [vmem:[%s3 + $0x40] sm:$0xff]
  %v1303 = vld [vmem:[%s3 + $0x48] sm:$0xff]
  %v1304 = vld [vmem:[%s3 + $0x50] sm:$0xff]
  %v1305 = vld [vmem:[%s3 + $0x58] sm:$0xff]
  %v1306 = vld [vmem:[%s3 + $0x60] sm:$0xff]
  %v1307 = vld [vmem:[%s3 + $0x68] sm:$0xff]
  %v1308 = vld [vmem:[%s3 + $0x70] sm:$0xff]
  %v1309 = vld [vmem:[%s3 + $0x78] sm:$0xff]
  %v1310 = vld [vmem:[%s3 + $0x80] sm:$0xff]
  %v1311 = vld [vmem:[%s3 + $0x88] sm:$0xff]
  %v1312 = vld [vmem:[%s3 + $0x90] sm:$0xff]
  %v1313 = vld [vmem:[%s3 + $0x98] sm:$0xff]
  %v1314 = vld [vmem:[%s3 + $0xa0] sm:$0xff]
  %v1315 = vld [vmem:[%s3 + $0xa8] sm:$0xff]
  %v1316 = vld [vmem:[%s3 + $0xb0] sm:$0xff]
  %v1317 = vld [vmem:[%s3 + $0xb8] sm:$0xff]
  %v1318 = vld [vmem:[%s3 + $0xc0] sm:$0xff]
  %v1319 = vld [vmem:[%s3 + $0xc8] sm:$0xff]
  %v1320 = vld [vmem:[%s3 + $0xd0] sm:$0xff]
  %v1321 = vld [vmem:[%s3 + $0xd8] sm:$0xff]
  %v1322 = vld [vmem:[%s3 + $0xe0] sm:$0xff]
  %v1323 = vld [vmem:[%s3 + $0xe8] sm:$0xff]
  %v1324 = vld [vmem:[%s3 + $0xf0] sm:$0xff]
  %v1325 = vld [vmem:[%s3 + $0xf8] sm:$0xff]
  %v1358 = vunpack.c.l.b16 %v1294
  %v1359 = vunpack.c.h.b16 %v1294
  %v1360 = vunpack.c.l.b16 %v1295
  %v1361 = vunpack.c.h.b16 %v1295
  %v1362 = vunpack.c.l.b16 %v1296
  %v1363 = vunpack.c.h.b16 %v1296
  %v1364 = vunpack.c.l.b16 %v1297
  %v1365 = vunpack.c.h.b16 %v1297
  %v1366 = vunpack.c.l.b16 %v1298
  %v1367 = vunpack.c.h.b16 %v1298
  %v1368 = vunpack.c.l.b16 %v1299
  %v1369 = vunpack.c.h.b16 %v1299
  %v1370 = vunpack.c.l.b16 %v1300
  %v1371 = vunpack.c.h.b16 %v1300
  %v1372 = vunpack.c.l.b16 %v1301
  %v1373 = vunpack.c.h.b16 %v1301
  %v1374 = vunpack.c.l.b16 %v1302
  %v1375 = vunpack.c.h.b16 %v1302
  %v1376 = vunpack.c.l.b16 %v1303
  %v1377 = vunpack.c.h.b16 %v1303
  %v1378 = vunpack.c.l.b16 %v1304
  %v1379 = vunpack.c.h.b16 %v1304
  %v1380 = vunpack.c.l.b16 %v1305
  %v1381 = vunpack.c.h.b16 %v1305
  %v1382 = vunpack.c.l.b16 %v1306
  %v1383 = vunpack.c.h.b16 %v1306
  %v1384 = vunpack.c.l.b16 %v1307
  %v1385 = vunpack.c.h.b16 %v1307
  %v1386 = vunpack.c.l.b16 %v1308
  %v1387 = vunpack.c.h.b16 %v1308
  %v1388 = vunpack.c.l.b16 %v1309
  %v1389 = vunpack.c.h.b16 %v1309
  %v1390 = vunpack.c.l.b16 %v1310
  %v1391 = vunpack.c.h.b16 %v1310
  %v1392 = vunpack.c.l.b16 %v1311
  %v1393 = vunpack.c.h.b16 %v1311
  %v1394 = vunpack.c.l.b16 %v1312
  %v1395 = vunpack.c.h.b16 %v1312
  %v1396 = vunpack.c.l.b16 %v1313
  %v1397 = vunpack.c.h.b16 %v1313
  %v1398 = vunpack.c.l.b16 %v1314
  %v1399 = vunpack.c.h.b16 %v1314
  %v1400 = vunpack.c.l.b16 %v1315
  %v1401 = vunpack.c.h.b16 %v1315
  %v1402 = vunpack.c.l.b16 %v1316
  %v1403 = vunpack.c.h.b16 %v1316
  %v1404 = vunpack.c.l.b16 %v1317
  %v1405 = vunpack.c.h.b16 %v1317
  %v1406 = vunpack.c.l.b16 %v1318
  %v1407 = vunpack.c.h.b16 %v1318
  %v1408 = vunpack.c.l.b16 %v1319
  %v1409 = vunpack.c.h.b16 %v1319
  %v1410 = vunpack.c.l.b16 %v1320
  %v1411 = vunpack.c.h.b16 %v1320
  %v1412 = vunpack.c.l.b16 %v1321
  %v1413 = vunpack.c.h.b16 %v1321
  %v1414 = vunpack.c.l.b16 %v1322
  %v1415 = vunpack.c.h.b16 %v1322
  %v1416 = vunpack.c.l.b16 %v1323
  %v1417 = vunpack.c.h.b16 %v1323
  %v1418 = vunpack.c.l.b16 %v1324
  %v1419 = vunpack.c.h.b16 %v1324
  %v1420 = vunpack.c.l.b16 %v1325
  %v1421 = vunpack.c.h.b16 %v1325
  %v1422 = vpack.c.b16 %v1362, %v1358
  %v1423 = vpack.c.b16 %v1363, %v1359
  %v1424 = vpack.c.b16 %v1364, %v1360
  %v1425 = vpack.c.b16 %v1365, %v1361
  %v1426 = vpack.c.b16 %v1370, %v1366
  %v1427 = vpack.c.b16 %v1371, %v1367
  %v1428 = vpack.c.b16 %v1372, %v1368
  %v1429 = vpack.c.b16 %v1373, %v1369
  %v1430 = vpack.c.b16 %v1378, %v1374
  %v1431 = vpack.c.b16 %v1379, %v1375
  %v1432 = vpack.c.b16 %v1380, %v1376
  %v1433 = vpack.c.b16 %v1381, %v1377
  %v1434 = vpack.c.b16 %v1386, %v1382
  %v1435 = vpack.c.b16 %v1387, %v1383
  %v1436 = vpack.c.b16 %v1388, %v1384
  %v1437 = vpack.c.b16 %v1389, %v1385
  %v1438 = vpack.c.b16 %v1394, %v1390
  %v1439 = vpack.c.b16 %v1395, %v1391
  %v1440 = vpack.c.b16 %v1396, %v1392
  %v1441 = vpack.c.b16 %v1397, %v1393
  %v1442 = vpack.c.b16 %v1402, %v1398
  %v1443 = vpack.c.b16 %v1403, %v1399
  %v1444 = vpack.c.b16 %v1404, %v1400
  %v1445 = vpack.c.b16 %v1405, %v1401
  %v1446 = vpack.c.b16 %v1410, %v1406
  %v1447 = vpack.c.b16 %v1411, %v1407
  %v1448 = vpack.c.b16 %v1412, %v1408
  %v1449 = vpack.c.b16 %v1413, %v1409
  %v1450 = vpack.c.b16 %v1418, %v1414
  %v1451 = vpack.c.b16 %v1419, %v1415
  %v1452 = vpack.c.b16 %v1420, %v1416
  %v1453 = vpack.c.b16 %v1421, %v1417
  %1486 = vmatprep.subr.bf16.mxu0 %v1423
  %1487 = vmatpush1.bf16.msra.mxu0 %v1422
  %1488 = vmatprep.subr.bf16.mxu0 %v1427
  %1489 = vmatpush1.bf16.msra.mxu0 %v1426
  %1490 = vmatprep.subr.bf16.mxu0 %v1431
  %1491 = vmatpush1.bf16.msra.mxu0 %v1430
  %1492 = vmatprep.subr.bf16.mxu0 %v1435
  %1493 = vmatpush1.bf16.msra.mxu0 %v1434
  %1494 = vmatprep.subr.bf16.mxu0 %v1439
  %1495 = vmatpush1.bf16.msra.mxu0 %v1438
  %1496 = vmatprep.subr.bf16.mxu0 %v1443
  %1497 = vmatpush1.bf16.msra.mxu0 %v1442
  %1498 = vmatprep.subr.bf16.mxu0 %v1447
  %1499 = vmatpush1.bf16.msra.mxu0 %v1446
  %1500 = vmatprep.subr.bf16.mxu0 %v1451
  %1501 = vmatpush1.bf16.msra.mxu0 %v1450
  %1502 = vmatprep.subr.bf16.mxu0 0
  %1503 = vmatpush1.bf16.msra.mxu0 0
  %1504 = vmatprep.subr.bf16.mxu0 0
  %1505 = vmatpush1.bf16.msra.mxu0 0
  %1506 = vmatprep.subr.bf16.mxu0 0
  %1507 = vmatpush1.bf16.msra.mxu0 0
  %1508 = vmatprep.subr.bf16.mxu0 0
  %1509 = vmatpush1.bf16.msra.mxu0 0
  %1510 = vmatprep.subr.bf16.mxu0 0
  %1511 = vmatpush1.bf16.msra.mxu0 0
  %1512 = vmatprep.subr.bf16.mxu0 0
  %1513 = vmatpush1.bf16.msra.mxu0 0
  %1514 = vmatprep.subr.bf16.mxu0 0
  %1515 = vmatpush1.bf16.msra.mxu0 0
  %1516 = vmatprep.subr.bf16.mxu0 0
  %1517 = vmatpush1.bf16.msra.mxu0 0
  %1518 = vmatprep.mubr.bf16.mxu0 0
  %1519 = vmatmul.mubr.bf16.gmra.mrb[0].mxu0 %v1293
  %v1520 = vpop.f32.mrb[0].mxu0
  %v1521 = vadd.f32 0.0, %v1520
  %v1522 = vpop.f32.mrb[0].mxu0
  %v1523 = vadd.f32 0.0, %v1522
  %v1524 = vpop.f32.mrb[0].mxu0
  %v1525 = vpop.f32.mrb[0].mxu0
  %1526 = vdwg.mxu0
  %1527 = vmatprep.subr.bf16.mxu0 %v1425
  %1528 = vmatpush1.bf16.msra.mxu0 %v1424
  %1529 = vmatprep.subr.bf16.mxu0 %v1429
  %1530 = vmatpush1.bf16.msra.mxu0 %v1428
  %1531 = vmatprep.subr.bf16.mxu0 %v1433
  %1532 = vmatpush1.bf16.msra.mxu0 %v1432
  %1533 = vmatprep.subr.bf16.mxu0 %v1437
  %1534 = vmatpush1.bf16.msra.mxu0 %v1436
  %1535 = vmatprep.subr.bf16.mxu0 %v1441
  %1536 = vmatpush1.bf16.msra.mxu0 %v1440
  %1537 = vmatprep.subr.bf16.mxu0 %v1445
  %1538 = vmatpush1.bf16.msra.mxu0 %v1444
  %1539 = vmatprep.subr.bf16.mxu0 %v1449
  %1540 = vmatpush1.bf16.msra.mxu0 %v1448
  %1541 = vmatprep.subr.bf16.mxu0 %v1453
  %1542 = vmatpush1.bf16.msra.mxu0 %v1452
  %1543 = vmatprep.subr.bf16.mxu0 0
  %1544 = vmatpush1.bf16.msra.mxu0 0
  %1545 = vmatprep.subr.bf16.mxu0 0
  %1546 = vmatpush1.bf16.msra.mxu0 0
  %1547 = vmatprep.subr.bf16.mxu0 0
  %1548 = vmatpush1.bf16.msra.mxu0 0
  %1549 = vmatprep.subr.bf16.mxu0 0
  %1550 = vmatpush1.bf16.msra.mxu0 0
  %1551 = vmatprep.subr.bf16.mxu0 0
  %1552 = vmatpush1.bf16.msra.mxu0 0
  %1553 = vmatprep.subr.bf16.mxu0 0
  %1554 = vmatpush1.bf16.msra.mxu0 0
  %1555 = vmatprep.subr.bf16.mxu0 0
  %1556 = vmatpush1.bf16.msra.mxu0 0
  %1557 = vmatprep.subr.bf16.mxu0 0
  %1558 = vmatpush1.bf16.msra.mxu0 0
  %1559 = vmatprep.mubr.bf16.mxu0 0
  %1560 = vmatmul.mubr.bf16.gmra.mrb[0].mxu0 %v1293
  %v1561 = vpop.f32.mrb[0].mxu0
  %v1562 = vadd.f32 0.0, %v1561
  %v1563 = vpop.f32.mrb[0].mxu0
  %v1564 = vadd.f32 0.0, %v1563
  %v1565 = vpop.f32.mrb[0].mxu0
  %v1566 = vpop.f32.mrb[0].mxu0
  %1567 = vdwg.mxu0
  %v1568 = vadd.f32 %v1288, %v1521
  %v1569 = vadd.f32 %v1289, %v1523
  %v1570 = vadd.f32 %v1290, %v1562
  %v1571 = vadd.f32 %v1291, %v1564
  %v1572 = vxor.u32 %v1568, 2147483648
  %v1573 = vmul.f32 %v1572, 1.442695
  %v1574 = vpow.pop %v1573
  %v1575 = vadd.f32 %v1574, 1.0
  %v1576 = vrcp.pop %v1575
  %v1577 = vmul.f32 1.0, %v1576
  %v1578 = vxor.u32 %v1569, 2147483648
  %v1579 = vmul.f32 %v1578, 1.442695
  %v1580 = vpow.pop %v1579
  %v1581 = vadd.f32 %v1580, 1.0
  %v1582 = vrcp.pop %v1581
  %v1583 = vmul.f32 1.0, %v1582
  %v1584 = vtanh.pop %v1570
  %v1585 = vxor.u32 %v1571, 2147483648
  %v1586 = vmul.f32 %v1585, 1.442695
  %v1587 = vpow.pop %v1586
  %v1588 = vadd.f32 %v1587, 1.0
  %v1589 = vrcp.pop %v1588
  %v1590 = vmul.f32 1.0, %v1589
  %v1591 = vld [vmem:[#allocation3] sm:$0xff]
  %v1592 = vmul.f32 %v1583, %v1591
  %v1593 = vmul.f32 %v1577, %v1584
  %v1594 = vadd.f32 %v1592, %v1593
  %v1595 = vtanh.pop %v1594
  %v1596 = vmul.f32 %v1590, %v1595
  %1597 = vst [vmem:[#allocation3] sm:$0xff] %v1594
  %1598 = vst [vmem:[#allocation2] sm:$0xff] %v1596
  %v1599 = vpack.c.bf16 %v1596, %v1596
  %s1600 = scalar_lea.vmem %s4, 16
  %1601 = vst [vmem:[%s1600] sm:$0xf] %v1599
  %s1602 = scalar_lea.vmem %s0, 160
  %v1603 = vld [vmem:[%s1602] sm:$0xff]
  %v1604 = vld [vmem:[%s1602 + $0x8] sm:$0xff]
  %v1605 = vld [vmem:[%s1602 + $0x10] sm:$0xff]
  %v1606 = vld [vmem:[%s1602 + $0x18] sm:$0xff]
  %v1607 = vld [vmem:[#allocation2] sm:$0xff]
  %v1608 = vpack.c.bf16 %v1607, %v1607
  %v1609 = vld [vmem:[%s3] sm:$0xff]
  %v1610 = vld [vmem:[%s3 + $0x8] sm:$0xff]
  %v1611 = vld [vmem:[%s3 + $0x10] sm:$0xff]
  %v1612 = vld [vmem:[%s3 + $0x18] sm:$0xff]
  %v1613 = vld [vmem:[%s3 + $0x20] sm:$0xff]
  %v1614 = vld [vmem:[%s3 + $0x28] sm:$0xff]
  %v1615 = vld [vmem:[%s3 + $0x30] sm:$0xff]
  %v1616 = vld [vmem:[%s3 + $0x38] sm:$0xff]
  %v1617 = vld [vmem:[%s3 + $0x40] sm:$0xff]
  %v1618 = vld [vmem:[%s3 + $0x48] sm:$0xff]
  %v1619 = vld [vmem:[%s3 + $0x50] sm:$0xff]
  %v1620 = vld [vmem:[%s3 + $0x58] sm:$0xff]
  %v1621 = vld [vmem:[%s3 + $0x60] sm:$0xff]
  %v1622 = vld [vmem:[%s3 + $0x68] sm:$0xff]
  %v1623 = vld [vmem:[%s3 + $0x70] sm:$0xff]
  %v1624 = vld [vmem:[%s3 + $0x78] sm:$0xff]
  %v1625 = vld [vmem:[%s3 + $0x80] sm:$0xff]
  %v1626 = vld [vmem:[%s3 + $0x88] sm:$0xff]
  %v1627 = vld [vmem:[%s3 + $0x90] sm:$0xff]
  %v1628 = vld [vmem:[%s3 + $0x98] sm:$0xff]
  %v1629 = vld [vmem:[%s3 + $0xa0] sm:$0xff]
  %v1630 = vld [vmem:[%s3 + $0xa8] sm:$0xff]
  %v1631 = vld [vmem:[%s3 + $0xb0] sm:$0xff]
  %v1632 = vld [vmem:[%s3 + $0xb8] sm:$0xff]
  %v1633 = vld [vmem:[%s3 + $0xc0] sm:$0xff]
  %v1634 = vld [vmem:[%s3 + $0xc8] sm:$0xff]
  %v1635 = vld [vmem:[%s3 + $0xd0] sm:$0xff]
  %v1636 = vld [vmem:[%s3 + $0xd8] sm:$0xff]
  %v1637 = vld [vmem:[%s3 + $0xe0] sm:$0xff]
  %v1638 = vld [vmem:[%s3 + $0xe8] sm:$0xff]
  %v1639 = vld [vmem:[%s3 + $0xf0] sm:$0xff]
  %v1640 = vld [vmem:[%s3 + $0xf8] sm:$0xff]
  %v1673 = vunpack.c.l.b16 %v1609
  %v1674 = vunpack.c.h.b16 %v1609
  %v1675 = vunpack.c.l.b16 %v1610
  %v1676 = vunpack.c.h.b16 %v1610
  %v1677 = vunpack.c.l.b16 %v1611
  %v1678 = vunpack.c.h.b16 %v1611
  %v1679 = vunpack.c.l.b16 %v1612
  %v1680 = vunpack.c.h.b16 %v1612
  %v1681 = vunpack.c.l.b16 %v1613
  %v1682 = vunpack.c.h.b16 %v1613
  %v1683 = vunpack.c.l.b16 %v1614
  %v1684 = vunpack.c.h.b16 %v1614
  %v1685 = vunpack.c.l.b16 %v1615
  %v1686 = vunpack.c.h.b16 %v1615
  %v1687 = vunpack.c.l.b16 %v1616
  %v1688 = vunpack.c.h.b16 %v1616
  %v1689 = vunpack.c.l.b16 %v1617
  %v1690 = vunpack.c.h.b16 %v1617
  %v1691 = vunpack.c.l.b16 %v1618
  %v1692 = vunpack.c.h.b16 %v1618
  %v1693 = vunpack.c.l.b16 %v1619
  %v1694 = vunpack.c.h.b16 %v1619
  %v1695 = vunpack.c.l.b16 %v1620
  %v1696 = vunpack.c.h.b16 %v1620
  %v1697 = vunpack.c.l.b16 %v1621
  %v1698 = vunpack.c.h.b16 %v1621
  %v1699 = vunpack.c.l.b16 %v1622
  %v1700 = vunpack.c.h.b16 %v1622
  %v1701 = vunpack.c.l.b16 %v1623
  %v1702 = vunpack.c.h.b16 %v1623
  %v1703 = vunpack.c.l.b16 %v1624
  %v1704 = vunpack.c.h.b16 %v1624
  %v1705 = vunpack.c.l.b16 %v1625
  %v1706 = vunpack.c.h.b16 %v1625
  %v1707 = vunpack.c.l.b16 %v1626
  %v1708 = vunpack.c.h.b16 %v1626
  %v1709 = vunpack.c.l.b16 %v1627
  %v1710 = vunpack.c.h.b16 %v1627
  %v1711 = vunpack.c.l.b16 %v1628
  %v1712 = vunpack.c.h.b16 %v1628
  %v1713 = vunpack.c.l.b16 %v1629
  %v1714 = vunpack.c.h.b16 %v1629
  %v1715 = vunpack.c.l.b16 %v1630
  %v1716 = vunpack.c.h.b16 %v1630
  %v1717 = vunpack.c.l.b16 %v1631
  %v1718 = vunpack.c.h.b16 %v1631
  %v1719 = vunpack.c.l.b16 %v1632
  %v1720 = vunpack.c.h.b16 %v1632
  %v1721 = vunpack.c.l.b16 %v1633
  %v1722 = vunpack.c.h.b16 %v1633
  %v1723 = vunpack.c.l.b16 %v1634
  %v1724 = vunpack.c.h.b16 %v1634
  %v1725 = vunpack.c.l.b16 %v1635
  %v1726 = vunpack.c.h.b16 %v1635
  %v1727 = vunpack.c.l.b16 %v1636
  %v1728 = vunpack.c.h.b16 %v1636
  %v1729 = vunpack.c.l.b16 %v1637
  %v1730 = vunpack.c.h.b16 %v1637
  %v1731 = vunpack.c.l.b16 %v1638
  %v1732 = vunpack.c.h.b16 %v1638
  %v1733 = vunpack.c.l.b16 %v1639
  %v1734 = vunpack.c.h.b16 %v1639
  %v1735 = vunpack.c.l.b16 %v1640
  %v1736 = vunpack.c.h.b16 %v1640
  %v1737 = vpack.c.b16 %v1677, %v1673
  %v1738 = vpack.c.b16 %v1678, %v1674
  %v1739 = vpack.c.b16 %v1679, %v1675
  %v1740 = vpack.c.b16 %v1680, %v1676
  %v1741 = vpack.c.b16 %v1685, %v1681
  %v1742 = vpack.c.b16 %v1686, %v1682
  %v1743 = vpack.c.b16 %v1687, %v1683
  %v1744 = vpack.c.b16 %v1688, %v1684
  %v1745 = vpack.c.b16 %v1693, %v1689
  %v1746 = vpack.c.b16 %v1694, %v1690
  %v1747 = vpack.c.b16 %v1695, %v1691
  %v1748 = vpack.c.b16 %v1696, %v1692
  %v1749 = vpack.c.b16 %v1701, %v1697
  %v1750 = vpack.c.b16 %v1702, %v1698
  %v1751 = vpack.c.b16 %v1703, %v1699
  %v1752 = vpack.c.b16 %v1704, %v1700
  %v1753 = vpack.c.b16 %v1709, %v1705
  %v1754 = vpack.c.b16 %v1710, %v1706
  %v1755 = vpack.c.b16 %v1711, %v1707
  %v1756 = vpack.c.b16 %v1712, %v1708
  %v1757 = vpack.c.b16 %v1717, %v1713
  %v1758 = vpack.c.b16 %v1718, %v1714
  %v1759 = vpack.c.b16 %v1719, %v1715
  %v1760 = vpack.c.b16 %v1720, %v1716
  %v1761 = vpack.c.b16 %v1725, %v1721
  %v1762 = vpack.c.b16 %v1726, %v1722
  %v1763 = vpack.c.b16 %v1727, %v1723
  %v1764 = vpack.c.b16 %v1728, %v1724
  %v1765 = vpack.c.b16 %v1733, %v1729
  %v1766 = vpack.c.b16 %v1734, %v1730
  %v1767 = vpack.c.b16 %v1735, %v1731
  %v1768 = vpack.c.b16 %v1736, %v1732
  %1801 = vmatprep.subr.bf16.mxu0 %v1738
  %1802 = vmatpush1.bf16.msra.mxu0 %v1737
  %1803 = vmatprep.subr.bf16.mxu0 %v1742
  %1804 = vmatpush1.bf16.msra.mxu0 %v1741
  %1805 = vmatprep.subr.bf16.mxu0 %v1746
  %1806 = vmatpush1.bf16.msra.mxu0 %v1745
  %1807 = vmatprep.subr.bf16.mxu0 %v1750
  %1808 = vmatpush1.bf16.msra.mxu0 %v1749
  %1809 = vmatprep.subr.bf16.mxu0 %v1754
  %1810 = vmatpush1.bf16.msra.mxu0 %v1753
  %1811 = vmatprep.subr.bf16.mxu0 %v1758
  %1812 = vmatpush1.bf16.msra.mxu0 %v1757
  %1813 = vmatprep.subr.bf16.mxu0 %v1762
  %1814 = vmatpush1.bf16.msra.mxu0 %v1761
  %1815 = vmatprep.subr.bf16.mxu0 %v1766
  %1816 = vmatpush1.bf16.msra.mxu0 %v1765
  %1817 = vmatprep.subr.bf16.mxu0 0
  %1818 = vmatpush1.bf16.msra.mxu0 0
  %1819 = vmatprep.subr.bf16.mxu0 0
  %1820 = vmatpush1.bf16.msra.mxu0 0
  %1821 = vmatprep.subr.bf16.mxu0 0
  %1822 = vmatpush1.bf16.msra.mxu0 0
  %1823 = vmatprep.subr.bf16.mxu0 0
  %1824 = vmatpush1.bf16.msra.mxu0 0
  %1825 = vmatprep.subr.bf16.mxu0 0
  %1826 = vmatpush1.bf16.msra.mxu0 0
  %1827 = vmatprep.subr.bf16.mxu0 0
  %1828 = vmatpush1.bf16.msra.mxu0 0
  %1829 = vmatprep.subr.bf16.mxu0 0
  %1830 = vmatpush1.bf16.msra.mxu0 0
  %1831 = vmatprep.subr.bf16.mxu0 0
  %1832 = vmatpush1.bf16.msra.mxu0 0
  %1833 = vmatprep.mubr.bf16.mxu0 0
  %1834 = vmatmul.mubr.bf16.gmra.mrb[0].mxu0 %v1608
  %v1835 = vpop.f32.mrb[0].mxu0
  %v1836 = vadd.f32 0.0, %v1835
  %v1837 = vpop.f32.mrb[0].mxu0
  %v1838 = vadd.f32 0.0, %v1837
  %v1839 = vpop.f32.mrb[0].mxu0
  %v1840 = vpop.f32.mrb[0].mxu0
  %1841 = vdwg.mxu0
  %1842 = vmatprep.subr.bf16.mxu0 %v1740
  %1843 = vmatpush1.bf16.msra.mxu0 %v1739
  %1844 = vmatprep.subr.bf16.mxu0 %v1744
  %1845 = vmatpush1.bf16.msra.mxu0 %v1743
  %1846 = vmatprep.subr.bf16.mxu0 %v1748
  %1847 = vmatpush1.bf16.msra.mxu0 %v1747
  %1848 = vmatprep.subr.bf16.mxu0 %v1752
  %1849 = vmatpush1.bf16.msra.mxu0 %v1751
  %1850 = vmatprep.subr.bf16.mxu0 %v1756
  %1851 = vmatpush1.bf16.msra.mxu0 %v1755
  %1852 = vmatprep.subr.bf16.mxu0 %v1760
  %1853 = vmatpush1.bf16.msra.mxu0 %v1759
  %1854 = vmatprep.subr.bf16.mxu0 %v1764
  %1855 = vmatpush1.bf16.msra.mxu0 %v1763
  %1856 = vmatprep.subr.bf16.mxu0 %v1768
  %1857 = vmatpush1.bf16.msra.mxu0 %v1767
  %1858 = vmatprep.subr.bf16.mxu0 0
  %1859 = vmatpush1.bf16.msra.mxu0 0
  %1860 = vmatprep.subr.bf16.mxu0 0
  %1861 = vmatpush1.bf16.msra.mxu0 0
  %1862 = vmatprep.subr.bf16.mxu0 0
  %1863 = vmatpush1.bf16.msra.mxu0 0
  %1864 = vmatprep.subr.bf16.mxu0 0
  %1865 = vmatpush1.bf16.msra.mxu0 0
  %1866 = vmatprep.subr.bf16.mxu0 0
  %1867 = vmatpush1.bf16.msra.mxu0 0
  %1868 = vmatprep.subr.bf16.mxu0 0
  %1869 = vmatpush1.bf16.msra.mxu0 0
  %1870 = vmatprep.subr.bf16.mxu0 0
  %1871 = vmatpush1.bf16.msra.mxu0 0
  %1872 = vmatprep.subr.bf16.mxu0 0
  %1873 = vmatpush1.bf16.msra.mxu0 0
  %1874 = vmatprep.mubr.bf16.mxu0 0
  %1875 = vmatmul.mubr.bf16.gmra.mrb[0].mxu0 %v1608
  %v1876 = vpop.f32.mrb[0].mxu0
  %v1877 = vadd.f32 0.0, %v1876
  %v1878 = vpop.f32.mrb[0].mxu0
  %v1879 = vadd.f32 0.0, %v1878
  %v1880 = vpop.f32.mrb[0].mxu0
  %v1881 = vpop.f32.mrb[0].mxu0
  %1882 = vdwg.mxu0
  %v1883 = vadd.f32 %v1603, %v1836
  %v1884 = vadd.f32 %v1604, %v1838
  %v1885 = vadd.f32 %v1605, %v1877
  %v1886 = vadd.f32 %v1606, %v1879
  %v1887 = vxor.u32 %v1883, 2147483648
  %v1888 = vmul.f32 %v1887, 1.442695
  %v1889 = vpow.pop %v1888
  %v1890 = vadd.f32 %v1889, 1.0
  %v1891 = vrcp.pop %v1890
  %v1892 = vmul.f32 1.0, %v1891
  %v1893 = vxor.u32 %v1884, 2147483648
  %v1894 = vmul.f32 %v1893, 1.442695
  %v1895 = vpow.pop %v1894
  %v1896 = vadd.f32 %v1895, 1.0
  %v1897 = vrcp.pop %v1896
  %v1898 = vmul.f32 1.0, %v1897
  %v1899 = vtanh.pop %v1885
  %v1900 = vxor.u32 %v1886, 2147483648
  %v1901 = vmul.f32 %v1900, 1.442695
  %v1902 = vpow.pop %v1901
  %v1903 = vadd.f32 %v1902, 1.0
  %v1904 = vrcp.pop %v1903
  %v1905 = vmul.f32 1.0, %v1904
  %v1906 = vld [vmem:[#allocation3] sm:$0xff]
  %v1907 = vmul.f32 %v1898, %v1906
  %v1908 = vmul.f32 %v1892, %v1899
  %v1909 = vadd.f32 %v1907, %v1908
  %v1910 = vtanh.pop %v1909
  %v1911 = vmul.f32 %v1905, %v1910
  %1912 = vst [vmem:[#allocation3] sm:$0xff] %v1909
  %1913 = vst [vmem:[#allocation2] sm:$0xff] %v1911
  %v1914 = vpack.c.bf16 %v1911, %v1911
  %s1915 = scalar_lea.vmem %s4, 20
  %1916 = vst [vmem:[%s1915] sm:$0xf] %v1914
  %s1917 = scalar_lea.vmem %s0, 192
  %v1918 = vld [vmem:[%s1917] sm:$0xff]
  %v1919 = vld [vmem:[%s1917 + $0x8] sm:$0xff]
  %v1920 = vld [vmem:[%s1917 + $0x10] sm:$0xff]
  %v1921 = vld [vmem:[%s1917 + $0x18] sm:$0xff]
  %v1922 = vld [vmem:[#allocation2] sm:$0xff]
  %v1923 = vpack.c.bf16 %v1922, %v1922
  %v1924 = vld [vmem:[%s3] sm:$0xff]
  %v1925 = vld [vmem:[%s3 + $0x8] sm:$0xff]
  %v1926 = vld [vmem:[%s3 + $0x10] sm:$0xff]
  %v1927 = vld [vmem:[%s3 + $0x18] sm:$0xff]
  %v1928 = vld [vmem:[%s3 + $0x20] sm:$0xff]
  %v1929 = vld [vmem:[%s3 + $0x28] sm:$0xff]
  %v1930 = vld [vmem:[%s3 + $0x30] sm:$0xff]
  %v1931 = vld [vmem:[%s3 + $0x38] sm:$0xff]
  %v1932 = vld [vmem:[%s3 + $0x40] sm:$0xff]
  %v1933 = vld [vmem:[%s3 + $0x48] sm:$0xff]
  %v1934 = vld [vmem:[%s3 + $0x50] sm:$0xff]
  %v1935 = vld [vmem:[%s3 + $0x58] sm:$0xff]
  %v1936 = vld [vmem:[%s3 + $0x60] sm:$0xff]
  %v1937 = vld [vmem:[%s3 + $0x68] sm:$0xff]
  %v1938 = vld [vmem:[%s3 + $0x70] sm:$0xff]
  %v1939 = vld [vmem:[%s3 + $0x78] sm:$0xff]
  %v1940 = vld [vmem:[%s3 + $0x80] sm:$0xff]
  %v1941 = vld [vmem:[%s3 + $0x88] sm:$0xff]
  %v1942 = vld [vmem:[%s3 + $0x90] sm:$0xff]
  %v1943 = vld [vmem:[%s3 + $0x98] sm:$0xff]
  %v1944 = vld [vmem:[%s3 + $0xa0] sm:$0xff]
  %v1945 = vld [vmem:[%s3 + $0xa8] sm:$0xff]
  %v1946 = vld [vmem:[%s3 + $0xb0] sm:$0xff]
  %v1947 = vld [vmem:[%s3 + $0xb8] sm:$0xff]
  %v1948 = vld [vmem:[%s3 + $0xc0] sm:$0xff]
  %v1949 = vld [vmem:[%s3 + $0xc8] sm:$0xff]
  %v1950 = vld [vmem:[%s3 + $0xd0] sm:$0xff]
  %v1951 = vld [vmem:[%s3 + $0xd8] sm:$0xff]
  %v1952 = vld [vmem:[%s3 + $0xe0] sm:$0xff]
  %v1953 = vld [vmem:[%s3 + $0xe8] sm:$0xff]
  %v1954 = vld [vmem:[%s3 + $0xf0] sm:$0xff]
  %v1955 = vld [vmem:[%s3 + $0xf8] sm:$0xff]
  %v1988 = vunpack.c.l.b16 %v1924
  %v1989 = vunpack.c.h.b16 %v1924
  %v1990 = vunpack.c.l.b16 %v1925
  %v1991 = vunpack.c.h.b16 %v1925
  %v1992 = vunpack.c.l.b16 %v1926
  %v1993 = vunpack.c.h.b16 %v1926
  %v1994 = vunpack.c.l.b16 %v1927
  %v1995 = vunpack.c.h.b16 %v1927
  %v1996 = vunpack.c.l.b16 %v1928
  %v1997 = vunpack.c.h.b16 %v1928
  %v1998 = vunpack.c.l.b16 %v1929
  %v1999 = vunpack.c.h.b16 %v1929
  %v2000 = vunpack.c.l.b16 %v1930
  %v2001 = vunpack.c.h.b16 %v1930
  %v2002 = vunpack.c.l.b16 %v1931
  %v2003 = vunpack.c.h.b16 %v1931
  %v2004 = vunpack.c.l.b16 %v1932
  %v2005 = vunpack.c.h.b16 %v1932
  %v2006 = vunpack.c.l.b16 %v1933
  %v2007 = vunpack.c.h.b16 %v1933
  %v2008 = vunpack.c.l.b16 %v1934
  %v2009 = vunpack.c.h.b16 %v1934
  %v2010 = vunpack.c.l.b16 %v1935
  %v2011 = vunpack.c.h.b16 %v1935
  %v2012 = vunpack.c.l.b16 %v1936
  %v2013 = vunpack.c.h.b16 %v1936
  %v2014 = vunpack.c.l.b16 %v1937
  %v2015 = vunpack.c.h.b16 %v1937
  %v2016 = vunpack.c.l.b16 %v1938
  %v2017 = vunpack.c.h.b16 %v1938
  %v2018 = vunpack.c.l.b16 %v1939
  %v2019 = vunpack.c.h.b16 %v1939
  %v2020 = vunpack.c.l.b16 %v1940
  %v2021 = vunpack.c.h.b16 %v1940
  %v2022 = vunpack.c.l.b16 %v1941
  %v2023 = vunpack.c.h.b16 %v1941
  %v2024 = vunpack.c.l.b16 %v1942
  %v2025 = vunpack.c.h.b16 %v1942
  %v2026 = vunpack.c.l.b16 %v1943
  %v2027 = vunpack.c.h.b16 %v1943
  %v2028 = vunpack.c.l.b16 %v1944
  %v2029 = vunpack.c.h.b16 %v1944
  %v2030 = vunpack.c.l.b16 %v1945
  %v2031 = vunpack.c.h.b16 %v1945
  %v2032 = vunpack.c.l.b16 %v1946
  %v2033 = vunpack.c.h.b16 %v1946
  %v2034 = vunpack.c.l.b16 %v1947
  %v2035 = vunpack.c.h.b16 %v1947
  %v2036 = vunpack.c.l.b16 %v1948
  %v2037 = vunpack.c.h.b16 %v1948
  %v2038 = vunpack.c.l.b16 %v1949
  %v2039 = vunpack.c.h.b16 %v1949
  %v2040 = vunpack.c.l.b16 %v1950
  %v2041 = vunpack.c.h.b16 %v1950
  %v2042 = vunpack.c.l.b16 %v1951
  %v2043 = vunpack.c.h.b16 %v1951
  %v2044 = vunpack.c.l.b16 %v1952
  %v2045 = vunpack.c.h.b16 %v1952
  %v2046 = vunpack.c.l.b16 %v1953
  %v2047 = vunpack.c.h.b16 %v1953
  %v2048 = vunpack.c.l.b16 %v1954
  %v2049 = vunpack.c.h.b16 %v1954
  %v2050 = vunpack.c.l.b16 %v1955
  %v2051 = vunpack.c.h.b16 %v1955
  %v2052 = vpack.c.b16 %v1992, %v1988
  %v2053 = vpack.c.b16 %v1993, %v1989
  %v2054 = vpack.c.b16 %v1994, %v1990
  %v2055 = vpack.c.b16 %v1995, %v1991
  %v2056 = vpack.c.b16 %v2000, %v1996
  %v2057 = vpack.c.b16 %v2001, %v1997
  %v2058 = vpack.c.b16 %v2002, %v1998
  %v2059 = vpack.c.b16 %v2003, %v1999
  %v2060 = vpack.c.b16 %v2008, %v2004
  %v2061 = vpack.c.b16 %v2009, %v2005
  %v2062 = vpack.c.b16 %v2010, %v2006
  %v2063 = vpack.c.b16 %v2011, %v2007
  %v2064 = vpack.c.b16 %v2016, %v2012
  %v2065 = vpack.c.b16 %v2017, %v2013
  %v2066 = vpack.c.b16 %v2018, %v2014
  %v2067 = vpack.c.b16 %v2019, %v2015
  %v2068 = vpack.c.b16 %v2024, %v2020
  %v2069 = vpack.c.b16 %v2025, %v2021
  %v2070 = vpack.c.b16 %v2026, %v2022
  %v2071 = vpack.c.b16 %v2027, %v2023
  %v2072 = vpack.c.b16 %v2032, %v2028
  %v2073 = vpack.c.b16 %v2033, %v2029
  %v2074 = vpack.c.b16 %v2034, %v2030
  %v2075 = vpack.c.b16 %v2035, %v2031
  %v2076 = vpack.c.b16 %v2040, %v2036
  %v2077 = vpack.c.b16 %v2041, %v2037
  %v2078 = vpack.c.b16 %v2042, %v2038
  %v2079 = vpack.c.b16 %v2043, %v2039
  %v2080 = vpack.c.b16 %v2048, %v2044
  %v2081 = vpack.c.b16 %v2049, %v2045
  %v2082 = vpack.c.b16 %v2050, %v2046
  %v2083 = vpack.c.b16 %v2051, %v2047
  %2116 = vmatprep.subr.bf16.mxu0 %v2053
  %2117 = vmatpush1.bf16.msra.mxu0 %v2052
  %2118 = vmatprep.subr.bf16.mxu0 %v2057
  %2119 = vmatpush1.bf16.msra.mxu0 %v2056
  %2120 = vmatprep.subr.bf16.mxu0 %v2061
  %2121 = vmatpush1.bf16.msra.mxu0 %v2060
  %2122 = vmatprep.subr.bf16.mxu0 %v2065
  %2123 = vmatpush1.bf16.msra.mxu0 %v2064
  %2124 = vmatprep.subr.bf16.mxu0 %v2069
  %2125 = vmatpush1.bf16.msra.mxu0 %v2068
  %2126 = vmatprep.subr.bf16.mxu0 %v2073
  %2127 = vmatpush1.bf16.msra.mxu0 %v2072
  %2128 = vmatprep.subr.bf16.mxu0 %v2077
  %2129 = vmatpush1.bf16.msra.mxu0 %v2076
  %2130 = vmatprep.subr.bf16.mxu0 %v2081
  %2131 = vmatpush1.bf16.msra.mxu0 %v2080
  %2132 = vmatprep.subr.bf16.mxu0 0
  %2133 = vmatpush1.bf16.msra.mxu0 0
  %2134 = vmatprep.subr.bf16.mxu0 0
  %2135 = vmatpush1.bf16.msra.mxu0 0
  %2136 = vmatprep.subr.bf16.mxu0 0
  %2137 = vmatpush1.bf16.msra.mxu0 0
  %2138 = vmatprep.subr.bf16.mxu0 0
  %2139 = vmatpush1.bf16.msra.mxu0 0
  %2140 = vmatprep.subr.bf16.mxu0 0
  %2141 = vmatpush1.bf16.msra.mxu0 0
  %2142 = vmatprep.subr.bf16.mxu0 0
  %2143 = vmatpush1.bf16.msra.mxu0 0
  %2144 = vmatprep.subr.bf16.mxu0 0
  %2145 = vmatpush1.bf16.msra.mxu0 0
  %2146 = vmatprep.subr.bf16.mxu0 0
  %2147 = vmatpush1.bf16.msra.mxu0 0
  %2148 = vmatprep.mubr.bf16.mxu0 0
  %2149 = vmatmul.mubr.bf16.gmra.mrb[0].mxu0 %v1923
  %v2150 = vpop.f32.mrb[0].mxu0
  %v2151 = vadd.f32 0.0, %v2150
  %v2152 = vpop.f32.mrb[0].mxu0
  %v2153 = vadd.f32 0.0, %v2152
  %v2154 = vpop.f32.mrb[0].mxu0
  %v2155 = vpop.f32.mrb[0].mxu0
  %2156 = vdwg.mxu0
  %2157 = vmatprep.subr.bf16.mxu0 %v2055
  %2158 = vmatpush1.bf16.msra.mxu0 %v2054
  %2159 = vmatprep.subr.bf16.mxu0 %v2059
  %2160 = vmatpush1.bf16.msra.mxu0 %v2058
  %2161 = vmatprep.subr.bf16.mxu0 %v2063
  %2162 = vmatpush1.bf16.msra.mxu0 %v2062
  %2163 = vmatprep.subr.bf16.mxu0 %v2067
  %2164 = vmatpush1.bf16.msra.mxu0 %v2066
  %2165 = vmatprep.subr.bf16.mxu0 %v2071
  %2166 = vmatpush1.bf16.msra.mxu0 %v2070
  %2167 = vmatprep.subr.bf16.mxu0 %v2075
  %2168 = vmatpush1.bf16.msra.mxu0 %v2074
  %2169 = vmatprep.subr.bf16.mxu0 %v2079
  %2170 = vmatpush1.bf16.msra.mxu0 %v2078
  %2171 = vmatprep.subr.bf16.mxu0 %v2083
  %2172 = vmatpush1.bf16.msra.mxu0 %v2082
  %2173 = vmatprep.subr.bf16.mxu0 0
  %2174 = vmatpush1.bf16.msra.mxu0 0
  %2175 = vmatprep.subr.bf16.mxu0 0
  %2176 = vmatpush1.bf16.msra.mxu0 0
  %2177 = vmatprep.subr.bf16.mxu0 0
  %2178 = vmatpush1.bf16.msra.mxu0 0
  %2179 = vmatprep.subr.bf16.mxu0 0
  %2180 = vmatpush1.bf16.msra.mxu0 0
  %2181 = vmatprep.subr.bf16.mxu0 0
  %2182 = vmatpush1.bf16.msra.mxu0 0
  %2183 = vmatprep.subr.bf16.mxu0 0
  %2184 = vmatpush1.bf16.msra.mxu0 0
  %2185 = vmatprep.subr.bf16.mxu0 0
  %2186 = vmatpush1.bf16.msra.mxu0 0
  %2187 = vmatprep.subr.bf16.mxu0 0
  %2188 = vmatpush1.bf16.msra.mxu0 0
  %2189 = vmatprep.mubr.bf16.mxu0 0
  %2190 = vmatmul.mubr.bf16.gmra.mrb[0].mxu0 %v1923
  %v2191 = vpop.f32.mrb[0].mxu0
  %v2192 = vadd.f32 0.0, %v2191
  %v2193 = vpop.f32.mrb[0].mxu0
  %v2194 = vadd.f32 0.0, %v2193
  %v2195 = vpop.f32.mrb[0].mxu0
  %v2196 = vpop.f32.mrb[0].mxu0
  %2197 = vdwg.mxu0
  %v2198 = vadd.f32 %v1918, %v2151
  %v2199 = vadd.f32 %v1919, %v2153
  %v2200 = vadd.f32 %v1920, %v2192
  %v2201 = vadd.f32 %v1921, %v2194
  %v2202 = vxor.u32 %v2198, 2147483648
  %v2203 = vmul.f32 %v2202, 1.442695
  %v2204 = vpow.pop %v2203
  %v2205 = vadd.f32 %v2204, 1.0
  %v2206 = vrcp.pop %v2205
  %v2207 = vmul.f32 1.0, %v2206
  %v2208 = vxor.u32 %v2199, 2147483648
  %v2209 = vmul.f32 %v2208, 1.442695
  %v2210 = vpow.pop %v2209
  %v2211 = vadd.f32 %v2210, 1.0
  %v2212 = vrcp.pop %v2211
  %v2213 = vmul.f32 1.0, %v2212
  %v2214 = vtanh.pop %v2200
  %v2215 = vxor.u32 %v2201, 2147483648
  %v2216 = vmul.f32 %v2215, 1.442695
  %v2217 = vpow.pop %v2216
  %v2218 = vadd.f32 %v2217, 1.0
  %v2219 = vrcp.pop %v2218
  %v2220 = vmul.f32 1.0, %v2219
  %v2221 = vld [vmem:[#allocation3] sm:$0xff]
  %v2222 = vmul.f32 %v2213, %v2221
  %v2223 = vmul.f32 %v2207, %v2214
  %v2224 = vadd.f32 %v2222, %v2223
  %v2225 = vtanh.pop %v2224
  %v2226 = vmul.f32 %v2220, %v2225
  %2227 = vst [vmem:[#allocation3] sm:$0xff] %v2224
  %2228 = vst [vmem:[#allocation2] sm:$0xff] %v2226
  %v2229 = vpack.c.bf16 %v2226, %v2226
  %s2230 = scalar_lea.vmem %s4, 24
  %2231 = vst [vmem:[%s2230] sm:$0xf] %v2229
  %s2232 = scalar_lea.vmem %s0, 224
  %v2233 = vld [vmem:[%s2232] sm:$0xff]
  %v2234 = vld [vmem:[%s2232 + $0x8] sm:$0xff]
  %v2235 = vld [vmem:[%s2232 + $0x10] sm:$0xff]
  %v2236 = vld [vmem:[%s2232 + $0x18] sm:$0xff]
  %v2237 = vld [vmem:[#allocation2] sm:$0xff]
  %v2238 = vpack.c.bf16 %v2237, %v2237
  %v2239 = vld [vmem:[%s3] sm:$0xff]
  %v2240 = vld [vmem:[%s3 + $0x8] sm:$0xff]
  %v2241 = vld [vmem:[%s3 + $0x10] sm:$0xff]
  %v2242 = vld [vmem:[%s3 + $0x18] sm:$0xff]
  %v2243 = vld [vmem:[%s3 + $0x20] sm:$0xff]
  %v2244 = vld [vmem:[%s3 + $0x28] sm:$0xff]
  %v2245 = vld [vmem:[%s3 + $0x30] sm:$0xff]
  %v2246 = vld [vmem:[%s3 + $0x38] sm:$0xff]
  %v2247 = vld [vmem:[%s3 + $0x40] sm:$0xff]
  %v2248 = vld [vmem:[%s3 + $0x48] sm:$0xff]
  %v2249 = vld [vmem:[%s3 + $0x50] sm:$0xff]
  %v2250 = vld [vmem:[%s3 + $0x58] sm:$0xff]
  %v2251 = vld [vmem:[%s3 + $0x60] sm:$0xff]
  %v2252 = vld [vmem:[%s3 + $0x68] sm:$0xff]
  %v2253 = vld [vmem:[%s3 + $0x70] sm:$0xff]
  %v2254 = vld [vmem:[%s3 + $0x78] sm:$0xff]
  %v2255 = vld [vmem:[%s3 + $0x80] sm:$0xff]
  %v2256 = vld [vmem:[%s3 + $0x88] sm:$0xff]
  %v2257 = vld [vmem:[%s3 + $0x90] sm:$0xff]
  %v2258 = vld [vmem:[%s3 + $0x98] sm:$0xff]
  %v2259 = vld [vmem:[%s3 + $0xa0] sm:$0xff]
  %v2260 = vld [vmem:[%s3 + $0xa8] sm:$0xff]
  %v2261 = vld [vmem:[%s3 + $0xb0] sm:$0xff]
  %v2262 = vld [vmem:[%s3 + $0xb8] sm:$0xff]
  %v2263 = vld [vmem:[%s3 + $0xc0] sm:$0xff]
  %v2264 = vld [vmem:[%s3 + $0xc8] sm:$0xff]
  %v2265 = vld [vmem:[%s3 + $0xd0] sm:$0xff]
  %v2266 = vld [vmem:[%s3 + $0xd8] sm:$0xff]
  %v2267 = vld [vmem:[%s3 + $0xe0] sm:$0xff]
  %v2268 = vld [vmem:[%s3 + $0xe8] sm:$0xff]
  %v2269 = vld [vmem:[%s3 + $0xf0] sm:$0xff]
  %v2270 = vld [vmem:[%s3 + $0xf8] sm:$0xff]
  %v2303 = vunpack.c.l.b16 %v2239
  %v2304 = vunpack.c.h.b16 %v2239
  %v2305 = vunpack.c.l.b16 %v2240
  %v2306 = vunpack.c.h.b16 %v2240
  %v2307 = vunpack.c.l.b16 %v2241
  %v2308 = vunpack.c.h.b16 %v2241
  %v2309 = vunpack.c.l.b16 %v2242
  %v2310 = vunpack.c.h.b16 %v2242
  %v2311 = vunpack.c.l.b16 %v2243
  %v2312 = vunpack.c.h.b16 %v2243
  %v2313 = vunpack.c.l.b16 %v2244
  %v2314 = vunpack.c.h.b16 %v2244
  %v2315 = vunpack.c.l.b16 %v2245
  %v2316 = vunpack.c.h.b16 %v2245
  %v2317 = vunpack.c.l.b16 %v2246
  %v2318 = vunpack.c.h.b16 %v2246
  %v2319 = vunpack.c.l.b16 %v2247
  %v2320 = vunpack.c.h.b16 %v2247
  %v2321 = vunpack.c.l.b16 %v2248
  %v2322 = vunpack.c.h.b16 %v2248
  %v2323 = vunpack.c.l.b16 %v2249
  %v2324 = vunpack.c.h.b16 %v2249
  %v2325 = vunpack.c.l.b16 %v2250
  %v2326 = vunpack.c.h.b16 %v2250
  %v2327 = vunpack.c.l.b16 %v2251
  %v2328 = vunpack.c.h.b16 %v2251
  %v2329 = vunpack.c.l.b16 %v2252
  %v2330 = vunpack.c.h.b16 %v2252
  %v2331 = vunpack.c.l.b16 %v2253
  %v2332 = vunpack.c.h.b16 %v2253
  %v2333 = vunpack.c.l.b16 %v2254
  %v2334 = vunpack.c.h.b16 %v2254
  %v2335 = vunpack.c.l.b16 %v2255
  %v2336 = vunpack.c.h.b16 %v2255
  %v2337 = vunpack.c.l.b16 %v2256
  %v2338 = vunpack.c.h.b16 %v2256
  %v2339 = vunpack.c.l.b16 %v2257
  %v2340 = vunpack.c.h.b16 %v2257
  %v2341 = vunpack.c.l.b16 %v2258
  %v2342 = vunpack.c.h.b16 %v2258
  %v2343 = vunpack.c.l.b16 %v2259
  %v2344 = vunpack.c.h.b16 %v2259
  %v2345 = vunpack.c.l.b16 %v2260
  %v2346 = vunpack.c.h.b16 %v2260
  %v2347 = vunpack.c.l.b16 %v2261
  %v2348 = vunpack.c.h.b16 %v2261
  %v2349 = vunpack.c.l.b16 %v2262
  %v2350 = vunpack.c.h.b16 %v2262
  %v2351 = vunpack.c.l.b16 %v2263
  %v2352 = vunpack.c.h.b16 %v2263
  %v2353 = vunpack.c.l.b16 %v2264
  %v2354 = vunpack.c.h.b16 %v2264
  %v2355 = vunpack.c.l.b16 %v2265
  %v2356 = vunpack.c.h.b16 %v2265
  %v2357 = vunpack.c.l.b16 %v2266
  %v2358 = vunpack.c.h.b16 %v2266
  %v2359 = vunpack.c.l.b16 %v2267
  %v2360 = vunpack.c.h.b16 %v2267
  %v2361 = vunpack.c.l.b16 %v2268
  %v2362 = vunpack.c.h.b16 %v2268
  %v2363 = vunpack.c.l.b16 %v2269
  %v2364 = vunpack.c.h.b16 %v2269
  %v2365 = vunpack.c.l.b16 %v2270
  %v2366 = vunpack.c.h.b16 %v2270
  %v2367 = vpack.c.b16 %v2307, %v2303
  %v2368 = vpack.c.b16 %v2308, %v2304
  %v2369 = vpack.c.b16 %v2309, %v2305
  %v2370 = vpack.c.b16 %v2310, %v2306
  %v2371 = vpack.c.b16 %v2315, %v2311
  %v2372 = vpack.c.b16 %v2316, %v2312
  %v2373 = vpack.c.b16 %v2317, %v2313
  %v2374 = vpack.c.b16 %v2318, %v2314
  %v2375 = vpack.c.b16 %v2323, %v2319
  %v2376 = vpack.c.b16 %v2324, %v2320
  %v2377 = vpack.c.b16 %v2325, %v2321
  %v2378 = vpack.c.b16 %v2326, %v2322
  %v2379 = vpack.c.b16 %v2331, %v2327
  %v2380 = vpack.c.b16 %v2332, %v2328
  %v2381 = vpack.c.b16 %v2333, %v2329
  %v2382 = vpack.c.b16 %v2334, %v2330
  %v2383 = vpack.c.b16 %v2339, %v2335
  %v2384 = vpack.c.b16 %v2340, %v2336
  %v2385 = vpack.c.b16 %v2341, %v2337
  %v2386 = vpack.c.b16 %v2342, %v2338
  %v2387 = vpack.c.b16 %v2347, %v2343
  %v2388 = vpack.c.b16 %v2348, %v2344
  %v2389 = vpack.c.b16 %v2349, %v2345
  %v2390 = vpack.c.b16 %v2350, %v2346
  %v2391 = vpack.c.b16 %v2355, %v2351
  %v2392 = vpack.c.b16 %v2356, %v2352
  %v2393 = vpack.c.b16 %v2357, %v2353
  %v2394 = vpack.c.b16 %v2358, %v2354
  %v2395 = vpack.c.b16 %v2363, %v2359
  %v2396 = vpack.c.b16 %v2364, %v2360
  %v2397 = vpack.c.b16 %v2365, %v2361
  %v2398 = vpack.c.b16 %v2366, %v2362
  %2431 = vmatprep.subr.bf16.mxu0 %v2368
  %2432 = vmatpush1.bf16.msra.mxu0 %v2367
  %2433 = vmatprep.subr.bf16.mxu0 %v2372
  %2434 = vmatpush1.bf16.msra.mxu0 %v2371
  %2435 = vmatprep.subr.bf16.mxu0 %v2376
  %2436 = vmatpush1.bf16.msra.mxu0 %v2375
  %2437 = vmatprep.subr.bf16.mxu0 %v2380
  %2438 = vmatpush1.bf16.msra.mxu0 %v2379
  %2439 = vmatprep.subr.bf16.mxu0 %v2384
  %2440 = vmatpush1.bf16.msra.mxu0 %v2383
  %2441 = vmatprep.subr.bf16.mxu0 %v2388
  %2442 = vmatpush1.bf16.msra.mxu0 %v2387
  %2443 = vmatprep.subr.bf16.mxu0 %v2392
  %2444 = vmatpush1.bf16.msra.mxu0 %v2391
  %2445 = vmatprep.subr.bf16.mxu0 %v2396
  %2446 = vmatpush1.bf16.msra.mxu0 %v2395
  %2447 = vmatprep.subr.bf16.mxu0 0
  %2448 = vmatpush1.bf16.msra.mxu0 0
  %2449 = vmatprep.subr.bf16.mxu0 0
  %2450 = vmatpush1.bf16.msra.mxu0 0
  %2451 = vmatprep.subr.bf16.mxu0 0
  %2452 = vmatpush1.bf16.msra.mxu0 0
  %2453 = vmatprep.subr.bf16.mxu0 0
  %2454 = vmatpush1.bf16.msra.mxu0 0
  %2455 = vmatprep.subr.bf16.mxu0 0
  %2456 = vmatpush1.bf16.msra.mxu0 0
  %2457 = vmatprep.subr.bf16.mxu0 0
  %2458 = vmatpush1.bf16.msra.mxu0 0
  %2459 = vmatprep.subr.bf16.mxu0 0
  %2460 = vmatpush1.bf16.msra.mxu0 0
  %2461 = vmatprep.subr.bf16.mxu0 0
  %2462 = vmatpush1.bf16.msra.mxu0 0
  %2463 = vmatprep.mubr.bf16.mxu0 0
  %2464 = vmatmul.mubr.bf16.gmra.mrb[0].mxu0 %v2238
  %v2465 = vpop.f32.mrb[0].mxu0
  %v2466 = vadd.f32 0.0, %v2465
  %v2467 = vpop.f32.mrb[0].mxu0
  %v2468 = vadd.f32 0.0, %v2467
  %v2469 = vpop.f32.mrb[0].mxu0
  %v2470 = vpop.f32.mrb[0].mxu0
  %2471 = vdwg.mxu0
  %2472 = vmatprep.subr.bf16.mxu0 %v2370
  %2473 = vmatpush1.bf16.msra.mxu0 %v2369
  %2474 = vmatprep.subr.bf16.mxu0 %v2374
  %2475 = vmatpush1.bf16.msra.mxu0 %v2373
  %2476 = vmatprep.subr.bf16.mxu0 %v2378
  %2477 = vmatpush1.bf16.msra.mxu0 %v2377
  %2478 = vmatprep.subr.bf16.mxu0 %v2382
  %2479 = vmatpush1.bf16.msra.mxu0 %v2381
  %2480 = vmatprep.subr.bf16.mxu0 %v2386
  %2481 = vmatpush1.bf16.msra.mxu0 %v2385
  %2482 = vmatprep.subr.bf16.mxu0 %v2390
  %2483 = vmatpush1.bf16.msra.mxu0 %v2389
  %2484 = vmatprep.subr.bf16.mxu0 %v2394
  %2485 = vmatpush1.bf16.msra.mxu0 %v2393
  %2486 = vmatprep.subr.bf16.mxu0 %v2398
  %2487 = vmatpush1.bf16.msra.mxu0 %v2397
  %2488 = vmatprep.subr.bf16.mxu0 0
  %2489 = vmatpush1.bf16.msra.mxu0 0
  %2490 = vmatprep.subr.bf16.mxu0 0
  %2491 = vmatpush1.bf16.msra.mxu0 0
  %2492 = vmatprep.subr.bf16.mxu0 0
  %2493 = vmatpush1.bf16.msra.mxu0 0
  %2494 = vmatprep.subr.bf16.mxu0 0
  %2495 = vmatpush1.bf16.msra.mxu0 0
  %2496 = vmatprep.subr.bf16.mxu0 0
  %2497 = vmatpush1.bf16.msra.mxu0 0
  %2498 = vmatprep.subr.bf16.mxu0 0
  %2499 = vmatpush1.bf16.msra.mxu0 0
  %2500 = vmatprep.subr.bf16.mxu0 0
  %2501 = vmatpush1.bf16.msra.mxu0 0
  %2502 = vmatprep.subr.bf16.mxu0 0
  %2503 = vmatpush1.bf16.msra.mxu0 0
  %2504 = vmatprep.mubr.bf16.mxu0 0
  %2505 = vmatmul.mubr.bf16.gmra.mrb[0].mxu0 %v2238
  %v2506 = vpop.f32.mrb[0].mxu0
  %v2507 = vadd.f32 0.0, %v2506
  %v2508 = vpop.f32.mrb[0].mxu0
  %v2509 = vadd.f32 0.0, %v2508
  %v2510 = vpop.f32.mrb[0].mxu0
  %v2511 = vpop.f32.mrb[0].mxu0
  %2512 = vdwg.mxu0
  %v2513 = vadd.f32 %v2233, %v2466
  %v2514 = vadd.f32 %v2234, %v2468
  %v2515 = vadd.f32 %v2235, %v2507
  %v2516 = vadd.f32 %v2236, %v2509
  %v2517 = vxor.u32 %v2513, 2147483648
  %v2518 = vmul.f32 %v2517, 1.442695
  %v2519 = vpow.pop %v2518
  %v2520 = vadd.f32 %v2519, 1.0
  %v2521 = vrcp.pop %v2520
  %v2522 = vmul.f32 1.0, %v2521
  %v2523 = vxor.u32 %v2514, 2147483648
  %v2524 = vmul.f32 %v2523, 1.442695
  %v2525 = vpow.pop %v2524
  %v2526 = vadd.f32 %v2525, 1.0
  %v2527 = vrcp.pop %v2526
  %v2528 = vmul.f32 1.0, %v2527
  %v2529 = vtanh.pop %v2515
  %v2530 = vxor.u32 %v2516, 2147483648
  %v2531 = vmul.f32 %v2530, 1.442695
  %v2532 = vpow.pop %v2531
  %v2533 = vadd.f32 %v2532, 1.0
  %v2534 = vrcp.pop %v2533
  %v2535 = vmul.f32 1.0, %v2534
  %v2536 = vld [vmem:[#allocation3] sm:$0xff]
  %v2537 = vmul.f32 %v2528, %v2536
  %v2538 = vmul.f32 %v2522, %v2529
  %v2539 = vadd.f32 %v2537, %v2538
  %v2540 = vtanh.pop %v2539
  %v2541 = vmul.f32 %v2535, %v2540
  %2542 = vst [vmem:[#allocation3] sm:$0xff] %v2539
  %2543 = vst [vmem:[#allocation2] sm:$0xff] %v2541
  %v2544 = vpack.c.bf16 %v2541, %v2541
  %s2545 = scalar_lea.vmem %s4, 28
  %2546 = vst [vmem:[%s2545] sm:$0xf] %v2544
  // Predicated region
  $region22: #{lstm_lm_forward.2} parent=0 // pred_check
    %p2547 = pneg %p21
  $region23: #{lstm_lm_forward.2} parent=0 // pred_check_branch
    %2549 = sbr.rel (%p2547) target = $region25
  $region24: #{lstm_lm_forward.2} parent=0 // pred_region
    %v2550 = vld [vmem:[#allocation2] sm:$0xff]
    %2551 = vst [vmem:[%s5] sm:$0xff] %v2550
    %v2552 = vld [vmem:[#allocation3] sm:$0xff]
    %2553 = vst [vmem:[%s6] sm:$0xff] %v2552
  $region25: #{lstm_lm_forward.2} parent=0 // pred_fallthru
    _
  // Predicated region
  $region26: #{lstm_lm_forward.2} parent=0 // pred_check
    _
  $region27: #{lstm_lm_forward.2} parent=0 // pred_check_branch
    %2555 = sbr.rel (0) target = $region29
  $region28: #{lstm_lm_forward.2} parent=0 // pred_region
    _
  $region29: #{lstm_lm_forward.2} parent=0 // pred_fallthru
    _
  // Predicated region
  $region30: #{lstm_lm_forward.2} parent=0 // pred_check
    _
  $region31: #{lstm_lm_forward.2} parent=0 // pred_check_branch
    %2557 = sbr.rel (0) target = $region33
  $region32: #{lstm_lm_forward.2} parent=0 // pred_region
    _
  $region33: #{lstm_lm_forward.2} parent=0 // pred_fallthru
    _
  // Predicated region
  $region34: #{lstm_lm_forward.2} parent=0 // pred_check
    _
  $region35: #{lstm_lm_forward.2} parent=0 // pred_check_branch
    %2559 = sbr.rel (0) target = $region37
  $region36: #{lstm_lm_forward.2} parent=0 // pred_region
    _
  $region37: #{lstm_lm_forward.2} parent=0 // pred_fallthru
    _
  // Predicated region
  $region38: #{lstm_lm_forward.2} parent=0 // pred_check
    _
  $region39: #{lstm_lm_forward.2} parent=0 // pred_check_branch
    %2561 = sbr.rel (0) target = $region41
  $region40: #{lstm_lm_forward.2} parent=0 // pred_region
    _
  $region41: #{lstm_lm_forward.2} parent=0 // pred_fallthru
    _
  // Predicated region
  $region42: #{lstm_lm_forward.2} parent=0 // pred_check
    _
  $region43: #{lstm_lm_forward.2} parent=0 // pred_check_branch
    %2563 = sbr.rel (0) target = $region45
  $region44: #{lstm_lm_forward.2} parent=0 // pred_region
    _
  $region45: #{lstm_lm_forward.2} parent=0 // pred_fallthru
    _
  // Predicated region
  $region46: #{lstm_lm_forward.2} parent=0 // pred_check
    _
  $region47: #{lstm_lm_forward.2} parent=0 // pred_check_branch
    %2565 = sbr.rel (0) target = $region49
  $region48: #{lstm_lm_forward.2} parent=0 // pred_region
    _
  $region49: #{lstm_lm_forward.2} parent=0 // pred_fallthru
    _

</llo_original>
